<compile_context>
chip_gen: v6e
topology: v6e:2x2x1
jax: 0.10.0
libtpu: 0.0.40
codegen_flags: <defaults>
</compile_context>

<pallas_src>
import functools

import jax
import jax.numpy as jnp
from jax.experimental import pallas as pl
from jax.experimental.pallas import tpu as pltpu


def _round_up(x, m):
    return (x + m - 1) // m * m


# --------------------------------------------------------------------------------------
# Kernel 1: tiled im2col matmul (the 3x3x3 conv) + per-M-tile partial BatchNorm stats
#   grid = (M_pad // tm  [parallel],  K_pad // tk  [arbitrary / reduction, last])
# --------------------------------------------------------------------------------------
def _conv_stats_kernel(p_ref, w_ref, o_ref, stats_ref, acc_ref):
    k = pl.program_id(1)

    @pl.when(k == 0)
    def _init():
        acc_ref[...] = jnp.zeros_like(acc_ref)

    # (tm, tk) @ (tk, C_pad): bf16 operands, f32 accumulation in VMEM scratch (not the output).
    acc_ref[...] += jnp.dot(p_ref[...], w_ref[...],
                            preferred_element_type=jnp.float32)

    @pl.when(k == pl.num_programs(1) - 1)
    def _finalize():
        acc = acc_ref[...]
        o_ref[...] = acc                                    # conv output, lane-dense f32 store
        s = jnp.sum(acc, axis=0, keepdims=True)             # per-channel partial sum
        ss = jnp.sum(acc * acc, axis=0, keepdims=True)      # per-channel partial sum of squares
        row = jax.lax.broadcasted_iota(jnp.int32, stats_ref.shape, 0)
        stats_ref[...] = jnp.where(row == 0, s, jnp.where(row == 1, ss, 0.0))


# --------------------------------------------------------------------------------------
# Kernel 2: lane-dense elementwise BatchNorm(affine-folded) + ReLU second pass
# --------------------------------------------------------------------------------------
def _bn_relu_kernel(x_ref, scale_ref, shift_ref, o_ref):
    o_ref[...] = jnp.maximum(x_ref[...] * scale_ref[...] + shift_ref[...], 0.0)


def conv3d_bn_relu(x_ndhwc, w_taps, gamma, beta, *, eps=1e-5, tm=512, tk=128,
                   compute_dtype=jnp.bfloat16):
    """x_ndhwc: (B, D, H, W, Cin) f32; w_taps: (27, Cin, Cout) for a 3x3x3 / pad-1 conv."""
    B, D, H, W, Cin = x_ndhwc.shape
    T, Cin_w, Cout = w_taps.shape
    assert T == 27 and Cin_w == Cin
    M = B * D * H * W

    K = T * Cin
    K_pad = _round_up(K, tk)                 # 128-aligned contraction (clean MXU passes on v5e)
    C_pad = _round_up(Cout, 128)             # lane-dense output / unmasked stores
    tm = min(tm, _round_up(M, 8))
    M_pad = _round_up(M, tm)
    num_m = M_pad // tm

    # --- im2col glue (built once, channels-last, same bytes as the old 27-tap stack) ---------
    # TODO(synk): for large problems, switch to per-M-tile halo slabs loaded in-kernel
    # (memory_space=pl.ANY + manual DMA) instead of materializing the (M, 27*Cin) patches.
    xp = jnp.pad(x_ndhwc, ((0, 0), (1, 1), (1, 1), (1, 1), (0, 0)))
    patches = jnp.stack(
        [xp[:, kd:kd + D, kh:kh + H, kw:kw + W, :].reshape(M, Cin)
         for kd in range(3) for kh in range(3) for kw in range(3)],
        axis=1).reshape(M, K)                                   # (M, 27*Cin), tap-major cols
    patches = jnp.pad(patches.astype(compute_dtype),
                      ((0, M_pad - M), (0, K_pad - K)))          # zero rows/cols: no-op math
    w_flat = jnp.pad(w_taps.reshape(K, Cout).astype(compute_dtype),
                     ((0, K_pad - K), (0, C_pad - Cout)))

    conv_out, stats = pl.pallas_call(
        _conv_stats_kernel,
        out_shape=(jax.ShapeDtypeStruct((M_pad, C_pad), jnp.float32),
                   jax.ShapeDtypeStruct((num_m * 8, C_pad), jnp.float32)),
        grid_spec=pltpu.PrefetchScalarGridSpec(
            num_scalar_prefetch=0,
            grid=(num_m, K_pad // tk),
            in_specs=[
                pl.BlockSpec((tm, tk), lambda m, k: (m, k)),        # im2col tile (bf16 stream)
                pl.BlockSpec((tk, C_pad), lambda m, k: (k, 0)),     # weight K-slab (bf16)
            ],
            out_specs=[
                pl.BlockSpec((tm, C_pad), lambda m, k: (m, 0)),     # conv output tile
                pl.BlockSpec((8, C_pad), lambda m, k: (m, 0)),      # per-tile partial stats
            ],
            scratch_shapes=[pltpu.VMEM((tm, C_pad), jnp.float32)],  # f32 accumulator
        ),
        compiler_params=pltpu.CompilerParams(
            dimension_semantics=("parallel", "arbitrary"),          # M tiles shard across TCs
            vmem_limit_bytes=32 * 1024 * 1024,                      # safe on v5e/v6e/v7x (64MiB)
        ),
    )(patches, w_flat)

    # --- fold BN batch statistics (biased var, PyTorch train mode) into scale/shift ----------
    s = jnp.sum(stats[0::8], axis=0)[:Cout]
    ss = jnp.sum(stats[1::8], axis=0)[:Cout]
    mean = s / M
    var = ss / M - mean * mean
    scale = gamma * jax.lax.rsqrt(var + eps)
    shift = beta - mean * scale
    scale_p = jnp.pad(scale, (0, C_pad - Cout)).reshape(1, C_pad)
    shift_p = jnp.pad(shift, (0, C_pad - Cout)).reshape(1, C_pad)

    y = pl.pallas_call(
        _bn_relu_kernel,
        out_shape=jax.ShapeDtypeStruct((M_pad, C_pad), jnp.float32),
        grid_spec=pltpu.PrefetchScalarGridSpec(
            num_scalar_prefetch=0,
            grid=(num_m,),
            in_specs=[
                pl.BlockSpec((tm, C_pad), lambda m: (m, 0)),
                pl.BlockSpec((1, C_pad), lambda m: (0, 0)),
                pl.BlockSpec((1, C_pad), lambda m: (0, 0)),
            ],
            out_specs=pl.BlockSpec((tm, C_pad), lambda m: (m, 0)),
        ),
        compiler_params=pltpu.CompilerParams(
            dimension_semantics=("parallel",),
            vmem_limit_bytes=32 * 1024 * 1024,
        ),
    )(conv_out, scale_p, shift_p)

    return y[:M, :Cout].reshape(B, D, H, W, Cout)


# --------------------------------------------------------------------------------------
# Trilinear upsample (align_corners=True), pad, concat — plain-JAX glue, channels-last
# --------------------------------------------------------------------------------------
def _interp_axis(x, axis, out_size):
    in_size = x.shape[axis]
    o = jnp.arange(out_size, dtype=jnp.float32)
    if out_size > 1:
        coord = o * (in_size - 1) / (out_size - 1)              # align_corners=True mapping
    else:
        coord = jnp.zeros_like(o)
    lo = jnp.clip(jnp.floor(coord).astype(jnp.int32), 0, in_size - 1)
    hi = jnp.clip(lo + 1, 0, in_size - 1)
    frac = coord - lo.astype(jnp.float32)
    shp = [1] * x.ndim
    shp[axis] = out_size
    frac = frac.reshape(shp)
    return jnp.take(x, lo, axis=axis) * (1.0 - frac) + jnp.take(x, hi, axis=axis) * frac


# TODO(synk): the trilinear upsample is a data-dependent 3-axis gather+lerp; it stays in plain
# JAX (no clean Pallas gather path).  The conv/BN/ReLU hot path runs in the Pallas kernels above.
def _preprocess(x1_ncdhw, x2_ncdhw, scale_factor):
    """NCDHW inputs -> upsample x1 -> pad -> concat -> single channels-last NDHWC tensor."""
    # Fold the NCDHW->NDHWC transpose to the very front so all glue stays channels-last.
    x1 = jnp.transpose(x1_ncdhw, (0, 2, 3, 4, 1))
    x2 = jnp.transpose(x2_ncdhw, (0, 2, 3, 4, 1))
    x1 = _interp_axis(x1, 1, x1.shape[1] * scale_factor[0])
    x1 = _interp_axis(x1, 2, x1.shape[2] * scale_factor[1])
    x1 = _interp_axis(x1, 3, x1.shape[3] * scale_factor[2])
    diffY = x2.shape[1] - x1.shape[1]
    diffX = x2.shape[2] - x1.shape[2]
    diffZ = x2.shape[3] - x1.shape[3]
    x1 = jnp.pad(x1, ((0, 0),
                      (diffY // 2, diffY - diffY // 2),
                      (diffX // 2, diffX - diffX // 2),
                      (diffZ // 2, diffZ - diffZ // 2),
                      (0, 0)))
    return jnp.concatenate([x2, x1], axis=-1)                   # channel concat on lane axis


# --------------------------------------------------------------------------------------
# Up module (bilinear=True path): Upsample -> pad -> concat -> DoubleConv3d
# --------------------------------------------------------------------------------------
def init_up_params(key, in_channels, out_channels):
    mid = in_channels // 2
    k1, k2 = jax.random.split(key)
    # conv weights stored as (27 taps, Cin, Cout) == transposed PyTorch (Cout, Cin, 3, 3, 3)
    w1 = jax.random.normal(k1, (27, in_channels, mid), jnp.float32) / jnp.sqrt(27.0 * in_channels)
    w2 = jax.random.normal(k2, (27, mid, out_channels), jnp.float32) / jnp.sqrt(27.0 * mid)
    # BatchNorm affine params at PyTorch defaults; train-mode batch statistics are used.
    # TODO(synk): running_mean/running_var buffers are not tracked (forward output only).
    return dict(w1=w1, g1=jnp.ones((mid,), jnp.float32), b1=jnp.zeros((mid,), jnp.float32),
                w2=w2, g2=jnp.ones((out_channels,), jnp.float32),
                b2=jnp.zeros((out_channels,), jnp.float32))


def up_forward(params, x1, x2, scale_factor=(2, 2, 2)):
    x = _preprocess(x1, x2, scale_factor)                       # (B, D, H, W, in_channels)
    y = conv3d_bn_relu(x, params["w1"], params["g1"], params["b1"])
    y = conv3d_bn_relu(y, params["w2"], params["g2"], params["b2"])
    return jnp.transpose(y, (0, 4, 1, 2, 3))                    # NDHWC -> NCDHW


# --------------------------------------------------------------------------------------
# Pure-JAX f32 reference (same math) for a correctness check
# --------------------------------------------------------------------------------------
def _ref_conv_bn_relu(x_ndhwc, w_taps, gamma, beta, eps=1e-5):
    B, D, H, W, Cin = x_ndhwc.shape
    xp = jnp.pad(x_ndhwc, ((0, 0), (1, 1), (1, 1), (1, 1), (0, 0)))
    acc = jnp.zeros((B, D, H, W, w_taps.shape[-1]), jnp.float32)
    t = 0
    for kd in range(3):
        for kh in range(3):
            for kw in range(3):
                acc += jnp.einsum("bdhwc,co->bdhwo",
                                  xp[:, kd:kd + D, kh:kh + H, kw:kw + W, :], w_taps[t])
                t += 1
    mean = acc.mean(axis=(0, 1, 2, 3), keepdims=True)
    var = jnp.mean(jnp.square(acc - mean), axis=(0, 1, 2, 3), keepdims=True)
    y = (acc - mean) * jax.lax.rsqrt(var + eps) * gamma + beta
    return jnp.maximum(y, 0.0)


def ref_forward(params, x1, x2, scale_factor=(2, 2, 2)):
    x = _preprocess(x1, x2, scale_factor)
    y = _ref_conv_bn_relu(x, params["w1"], params["g1"], params["b1"])
    y = _ref_conv_bn_relu(y, params["w2"], params["g2"], params["b2"])
    return jnp.transpose(y, (0, 4, 1, 2, 3))


if __name__ == "__main__":
    key = jax.random.PRNGKey(0)
    kx1, kx2, kp = jax.random.split(key, 3)

    in_channels, out_channels, B = 8, 4, 2
    # typical UNet skip: x1 (deep, small spatial) and x2 (skip, 2x spatial), C/2 channels each
    x1 = jax.random.normal(kx1, (B, in_channels // 2, 4, 4, 4), jnp.float32)
    x2 = jax.random.normal(kx2, (B, in_channels // 2, 8, 8, 8), jnp.float32)

    params = init_up_params(kp, in_channels, out_channels)

    fwd = jax.jit(functools.partial(up_forward, scale_factor=(2, 2, 2)))
    y = jax.block_until_ready(fwd(params, x1, x2))
    assert y.shape == (B, out_channels, 8, 8, 8), y.shape

    # reference check (pure f32 JAX, same params); kernel streams bf16 -> loose tolerance
    ref = ref_forward(params, x1, x2)
    err = float(jnp.max(jnp.abs(y - ref)))
    assert jnp.allclose(y, ref, rtol=5e-2, atol=5e-2), err

    print("KERNEL_OK")
</pallas_src>

<mosaic_0001>
module attributes {stable_mosaic.version = 11 : i64} {
  func.func @_conv_stats_kernel(%arg0: i32, %arg1: i32, %arg2: memref<512x128xbf16, #tpu.memory_space<vmem>>, %arg3: memref<128x128xbf16, #tpu.memory_space<vmem>>, %arg4: memref<512x128xf32, #tpu.memory_space<vmem>>, %arg5: memref<8x128xf32, #tpu.memory_space<vmem>>, %arg6: memref<512x128xf32, #tpu.memory_space<vmem>>) attributes {dimension_semantics = [#tpu.dimension_semantics<parallel>, #tpu.dimension_semantics<arbitrary>], iteration_bounds = array<i64: 2, 2>, scalar_prefetch = 0 : i64, scratch_operands = 1 : i64, tpu.core_type = #tpu.core_type<tc>, window_params = [{transform_indices = @transform_0, window_bounds = array<i64: 512, 128>}, {transform_indices = @transform_1, window_bounds = array<i64: 128, 128>}, {transform_indices = @transform_2, window_bounds = array<i64: 512, 128>}, {transform_indices = @transform_3, window_bounds = array<i64: 8, 128>}]} {
    %c0_i32 = arith.constant 0 : i32
    %0 = arith.cmpi eq, %arg1, %c0_i32 : i32
    %1 = arith.extui %0 : i1 to i32
    %c0_i32_0 = arith.constant 0 : i32
    %2 = arith.cmpi ne, %1, %c0_i32_0 : i32
    scf.if %2 {
      %cst_9 = arith.constant 0.000000e+00 : f32
      %12 = vector.broadcast %cst_9 : f32 to vector<512x128xf32>
      %c0_10 = arith.constant 0 : index
      %c0_11 = arith.constant 0 : index
      %13 = vector.load %arg6[%c0_10, %c0_11] : memref<512x128xf32, #tpu.memory_space<vmem>>, vector<512x128xf32>
      tpu.vector_store %arg6[%c0_10, %c0_11], %12 {strides = array<i32>} : memref<512x128xf32, #tpu.memory_space<vmem>>, vector<512x128xf32>,
    } else {
    }
    %c0 = arith.constant 0 : index
    %c0_1 = arith.constant 0 : index
    %3 = vector.load %arg6[%c0, %c0_1] : memref<512x128xf32, #tpu.memory_space<vmem>>, vector<512x128xf32>
    %c0_2 = arith.constant 0 : index
    %c0_3 = arith.constant 0 : index
    %4 = vector.load %arg2[%c0_2, %c0_3] : memref<512x128xbf16, #tpu.memory_space<vmem>>, vector<512x128xbf16>
    %c0_4 = arith.constant 0 : index
    %c0_5 = arith.constant 0 : index
    %5 = vector.load %arg3[%c0_4, %c0_5] : memref<128x128xbf16, #tpu.memory_space<vmem>>, vector<128x128xbf16>
    %cst = arith.constant dense<0.000000e+00> : vector<512x128xf32>
    %6 = tpu.matmul %4, %5, %cst {dimension_numbers = #tpu.dot_dimension_numbers<[1], [0], [0], [1], [0, 0, 1, 1], [], []>} : vector<512x128xbf16>, vector<128x128xbf16>, vector<512x128xf32> -> vector<512x128xf32>
    %7 = arith.addf %3, %6 : vector<512x128xf32>
    %c0_6 = arith.constant 0 : index
    %c0_7 = arith.constant 0 : index
    %8 = vector.load %arg6[%c0_6, %c0_7] : memref<512x128xf32, #tpu.memory_space<vmem>>, vector<512x128xf32>
    tpu.vector_store %arg6[%c0_6, %c0_7], %7 {strides = array<i32>} : memref<512x128xf32, #tpu.memory_space<vmem>>, vector<512x128xf32>,
    %c1_i32 = arith.constant 1 : i32
    %9 = arith.cmpi eq, %arg1, %c1_i32 : i32
    %10 = arith.extui %9 : i1 to i32
    %c0_i32_8 = arith.constant 0 : i32
    %11 = arith.cmpi ne, %10, %c0_i32_8 : i32
    scf.if %11 {
      %c0_9 = arith.constant 0 : index
      %c0_10 = arith.constant 0 : index
      %12 = vector.load %arg6[%c0_9, %c0_10] : memref<512x128xf32, #tpu.memory_space<vmem>>, vector<512x128xf32>
      %c0_11 = arith.constant 0 : index
      %c0_12 = arith.constant 0 : index
      %13 = vector.load %arg4[%c0_11, %c0_12] : memref<512x128xf32, #tpu.memory_space<vmem>>, vector<512x128xf32>
      tpu.vector_store %arg4[%c0_11, %c0_12], %12 {strides = array<i32>} : memref<512x128xf32, #tpu.memory_space<vmem>>, vector<512x128xf32>,
      %cst_13 = arith.constant dense<0.000000e+00> : vector<128xf32>
      %14 = vector.multi_reduction <add>, %12, %cst_13 [0] : vector<512x128xf32> to vector<128xf32>
      %15 = vector.shape_cast %14 : vector<128xf32> to vector<1x128xf32>
      %16 = arith.mulf %12, %12 : vector<512x128xf32>
      %cst_14 = arith.constant dense<0.000000e+00> : vector<128xf32>
      %17 = vector.multi_reduction <add>, %16, %cst_14 [0] : vector<512x128xf32> to vector<128xf32>
      %18 = vector.shape_cast %17 : vector<128xf32> to vector<1x128xf32>
      %19 = tpu.iota {dimensions = array<i32: 0>} : vector<8x128xi32>
      %c0_i32_15 = arith.constant 0 : i32
      %20 = vector.broadcast %c0_i32_15 : i32 to vector<8x128xi32>
      %21 = arith.cmpi eq, %19, %20 : vector<8x128xi32>
      %c1_i32_16 = arith.constant 1 : i32
      %22 = vector.broadcast %c1_i32_16 : i32 to vector<8x128xi32>
      %23 = arith.cmpi eq, %19, %22 : vector<8x128xi32>
      %cst_17 = arith.constant 0.000000e+00 : f32
      %24 = vector.shape_cast %18 : vector<1x128xf32> to vector<1x128xf32>
      %25 = vector.broadcast %24 : vector<1x128xf32> to vector<8x128xf32>
      %26 = vector.broadcast %cst_17 : f32 to vector<8x128xf32>
      %27 = arith.select %23, %25, %26 : vector<8x128xi1>, vector<8x128xf32>
      %28 = vector.shape_cast %15 : vector<1x128xf32> to vector<1x128xf32>
      %29 = vector.broadcast %28 : vector<1x128xf32> to vector<8x128xf32>
      %30 = arith.select %21, %29, %27 : vector<8x128xi1>, vector<8x128xf32>
      %c0_18 = arith.constant 0 : index
      %c0_19 = arith.constant 0 : index
      %31 = vector.load %arg5[%c0_18, %c0_19] : memref<8x128xf32, #tpu.memory_space<vmem>>, vector<8x128xf32>
      tpu.vector_store %arg5[%c0_18, %c0_19], %30 {strides = array<i32>} : memref<8x128xf32, #tpu.memory_space<vmem>>, vector<8x128xf32>,
    } else {
    }
    return
  }
  func.func @transform_0(%arg0: i32, %arg1: i32) -> (i32, i32) {
    %c0_i32 = arith.constant 0 : i32
    return %arg0, %arg1 : i32, i32
  }
  func.func @transform_1(%arg0: i32, %arg1: i32) -> (i32, i32) {
    %c0_i32 = arith.constant 0 : i32
    %c0_i32_0 = arith.constant 0 : i32
    return %arg1, %c0_i32 : i32, i32
  }
  func.func @transform_2(%arg0: i32, %arg1: i32) -> (i32, i32) {
    %c0_i32 = arith.constant 0 : i32
    %c0_i32_0 = arith.constant 0 : i32
    return %arg0, %c0_i32 : i32, i32
  }
  func.func @transform_3(%arg0: i32, %arg1: i32) -> (i32, i32) {
    %c0_i32 = arith.constant 0 : i32
    %c0_i32_0 = arith.constant 0 : i32
    return %arg0, %c0_i32 : i32, i32
  }
}

module attributes {stable_mosaic.version = 11 : i64} {
  func.func @_bn_relu_kernel(%arg0: i32, %arg1: memref<512x128xf32, #tpu.memory_space<vmem>>, %arg2: memref<1x128xf32, #tpu.memory_space<vmem>>, %arg3: memref<1x128xf32, #tpu.memory_space<vmem>>, %arg4: memref<512x128xf32, #tpu.memory_space<vmem>>) attributes {dimension_semantics = [#tpu.dimension_semantics<parallel>], iteration_bounds = array<i64: 2>, scalar_prefetch = 0 : i64, scratch_operands = 0 : i64, tpu.core_type = #tpu.core_type<tc>, window_params = [{transform_indices = @transform_0, window_bounds = array<i64: 512, 128>}, {pipeline_mode = #tpu.pipeline_mode<synchronous>, transform_indices = @transform_1, window_bounds = array<i64: 1, 128>}, {pipeline_mode = #tpu.pipeline_mode<synchronous>, transform_indices = @transform_2, window_bounds = array<i64: 1, 128>}, {transform_indices = @transform_3, window_bounds = array<i64: 512, 128>}]} {
    %c0 = arith.constant 0 : index
    %c0_0 = arith.constant 0 : index
    %0 = vector.load %arg1[%c0, %c0_0] : memref<512x128xf32, #tpu.memory_space<vmem>>, vector<512x128xf32>
    %c0_1 = arith.constant 0 : index
    %c0_2 = arith.constant 0 : index
    %1 = vector.load %arg2[%c0_1, %c0_2] : memref<1x128xf32, #tpu.memory_space<vmem>>, vector<1x128xf32>
    %2 = vector.broadcast %1 : vector<1x128xf32> to vector<512x128xf32>
    %3 = arith.mulf %0, %2 : vector<512x128xf32>
    %c0_3 = arith.constant 0 : index
    %c0_4 = arith.constant 0 : index
    %4 = vector.load %arg3[%c0_3, %c0_4] : memref<1x128xf32, #tpu.memory_space<vmem>>, vector<1x128xf32>
    %5 = vector.broadcast %4 : vector<1x128xf32> to vector<512x128xf32>
    %6 = arith.addf %3, %5 : vector<512x128xf32>
    %cst = arith.constant 0.000000e+00 : f32
    %7 = vector.broadcast %cst : f32 to vector<512x128xf32>
    %8 = arith.maximumf %6, %7 : vector<512x128xf32>
    %c0_5 = arith.constant 0 : index
    %c0_6 = arith.constant 0 : index
    %9 = vector.load %arg4[%c0_5, %c0_6] : memref<512x128xf32, #tpu.memory_space<vmem>>, vector<512x128xf32>
    tpu.vector_store %arg4[%c0_5, %c0_6], %8 {strides = array<i32>} : memref<512x128xf32, #tpu.memory_space<vmem>>, vector<512x128xf32>,
    return
  }
  func.func @transform_0(%arg0: i32) -> (i32, i32) {
    %c0_i32 = arith.constant 0 : i32
    %c0_i32_0 = arith.constant 0 : i32
    return %arg0, %c0_i32 : i32, i32
  }
  func.func @transform_1(%arg0: i32) -> (i32, i32) {
    %c0_i32 = arith.constant 0 : i32
    %c0_i32_0 = arith.constant 0 : i32
    %c0_i32_1 = arith.constant 0 : i32
    return %c0_i32, %c0_i32_0 : i32, i32
  }
  func.func @transform_2(%arg0: i32) -> (i32, i32) {
    %c0_i32 = arith.constant 0 : i32
    %c0_i32_0 = arith.constant 0 : i32
    %c0_i32_1 = arith.constant 0 : i32
    return %c0_i32, %c0_i32_0 : i32, i32
  }
  func.func @transform_3(%arg0: i32) -> (i32, i32) {
    %c0_i32 = arith.constant 0 : i32
    %c0_i32_0 = arith.constant 0 : i32
    return %arg0, %c0_i32 : i32, i32
  }
}

module attributes {stable_mosaic.version = 11 : i64} {
  func.func @_conv_stats_kernel(%arg0: i32, %arg1: i32, %arg2: memref<512x128xbf16, #tpu.memory_space<vmem>>, %arg3: memref<128x128xbf16, #tpu.memory_space<vmem>>, %arg4: memref<512x128xf32, #tpu.memory_space<vmem>>, %arg5: memref<8x128xf32, #tpu.memory_space<vmem>>, %arg6: memref<512x128xf32, #tpu.memory_space<vmem>>) attributes {dimension_semantics = [#tpu.dimension_semantics<parallel>, #tpu.dimension_semantics<arbitrary>], iteration_bounds = array<i64: 2, 1>, scalar_prefetch = 0 : i64, scratch_operands = 1 : i64, tpu.core_type = #tpu.core_type<tc>, window_params = [{transform_indices = @transform_0, window_bounds = array<i64: 512, 128>}, {transform_indices = @transform_1, window_bounds = array<i64: 128, 128>}, {transform_indices = @transform_2, window_bounds = array<i64: 512, 128>}, {transform_indices = @transform_3, window_bounds = array<i64: 8, 128>}]} {
    %c0_i32 = arith.constant 0 : i32
    %0 = arith.cmpi eq, %arg1, %c0_i32 : i32
    %1 = arith.extui %0 : i1 to i32
    %c0_i32_0 = arith.constant 0 : i32
    %2 = arith.cmpi ne, %1, %c0_i32_0 : i32
    scf.if %2 {
      %cst_10 = arith.constant 0.000000e+00 : f32
      %12 = vector.broadcast %cst_10 : f32 to vector<512x128xf32>
      %c0_11 = arith.constant 0 : index
      %c0_12 = arith.constant 0 : index
      %13 = vector.load %arg6[%c0_11, %c0_12] : memref<512x128xf32, #tpu.memory_space<vmem>>, vector<512x128xf32>
      tpu.vector_store %arg6[%c0_11, %c0_12], %12 {strides = array<i32>} : memref<512x128xf32, #tpu.memory_space<vmem>>, vector<512x128xf32>,
    } else {
    }
    %c0 = arith.constant 0 : index
    %c0_1 = arith.constant 0 : index
    %3 = vector.load %arg6[%c0, %c0_1] : memref<512x128xf32, #tpu.memory_space<vmem>>, vector<512x128xf32>
    %c0_2 = arith.constant 0 : index
    %c0_3 = arith.constant 0 : index
    %4 = vector.load %arg2[%c0_2, %c0_3] : memref<512x128xbf16, #tpu.memory_space<vmem>>, vector<512x128xbf16>
    %c0_4 = arith.constant 0 : index
    %c0_5 = arith.constant 0 : index
    %5 = vector.load %arg3[%c0_4, %c0_5] : memref<128x128xbf16, #tpu.memory_space<vmem>>, vector<128x128xbf16>
    %cst = arith.constant dense<0.000000e+00> : vector<512x128xf32>
    %6 = tpu.matmul %4, %5, %cst {dimension_numbers = #tpu.dot_dimension_numbers<[1], [0], [0], [1], [0, 0, 1, 1], [], []>} : vector<512x128xbf16>, vector<128x128xbf16>, vector<512x128xf32> -> vector<512x128xf32>
    %7 = arith.addf %3, %6 : vector<512x128xf32>
    %c0_6 = arith.constant 0 : index
    %c0_7 = arith.constant 0 : index
    %8 = vector.load %arg6[%c0_6, %c0_7] : memref<512x128xf32, #tpu.memory_space<vmem>>, vector<512x128xf32>
    tpu.vector_store %arg6[%c0_6, %c0_7], %7 {strides = array<i32>} : memref<512x128xf32, #tpu.memory_space<vmem>>, vector<512x128xf32>,
    %c0_i32_8 = arith.constant 0 : i32
    %9 = arith.cmpi eq, %arg1, %c0_i32_8 : i32
    %10 = arith.extui %9 : i1 to i32
    %c0_i32_9 = arith.constant 0 : i32
    %11 = arith.cmpi ne, %10, %c0_i32_9 : i32
    scf.if %11 {
      %c0_10 = arith.constant 0 : index
      %c0_11 = arith.constant 0 : index
      %12 = vector.load %arg6[%c0_10, %c0_11] : memref<512x128xf32, #tpu.memory_space<vmem>>, vector<512x128xf32>
      %c0_12 = arith.constant 0 : index
      %c0_13 = arith.constant 0 : index
      %13 = vector.load %arg4[%c0_12, %c0_13] : memref<512x128xf32, #tpu.memory_space<vmem>>, vector<512x128xf32>
      tpu.vector_store %arg4[%c0_12, %c0_13], %12 {strides = array<i32>} : memref<512x128xf32, #tpu.memory_space<vmem>>, vector<512x128xf32>,
      %cst_14 = arith.constant dense<0.000000e+00> : vector<128xf32>
      %14 = vector.multi_reduction <add>, %12, %cst_14 [0] : vector<512x128xf32> to vector<128xf32>
      %15 = vector.shape_cast %14 : vector<128xf32> to vector<1x128xf32>
      %16 = arith.mulf %12, %12 : vector<512x128xf32>
      %cst_15 = arith.constant dense<0.000000e+00> : vector<128xf32>
      %17 = vector.multi_reduction <add>, %16, %cst_15 [0] : vector<512x128xf32> to vector<128xf32>
      %18 = vector.shape_cast %17 : vector<128xf32> to vector<1x128xf32>
      %19 = tpu.iota {dimensions = array<i32: 0>} : vector<8x128xi32>
      %c0_i32_16 = arith.constant 0 : i32
      %20 = vector.broadcast %c0_i32_16 : i32 to vector<8x128xi32>
      %21 = arith.cmpi eq, %19, %20 : vector<8x128xi32>
      %c1_i32 = arith.constant 1 : i32
      %22 = vector.broadcast %c1_i32 : i32 to vector<8x128xi32>
      %23 = arith.cmpi eq, %19, %22 : vector<8x128xi32>
      %cst_17 = arith.constant 0.000000e+00 : f32
      %24 = vector.shape_cast %18 : vector<1x128xf32> to vector<1x128xf32>
      %25 = vector.broadcast %24 : vector<1x128xf32> to vector<8x128xf32>
      %26 = vector.broadcast %cst_17 : f32 to vector<8x128xf32>
      %27 = arith.select %23, %25, %26 : vector<8x128xi1>, vector<8x128xf32>
      %28 = vector.shape_cast %15 : vector<1x128xf32> to vector<1x128xf32>
      %29 = vector.broadcast %28 : vector<1x128xf32> to vector<8x128xf32>
      %30 = arith.select %21, %29, %27 : vector<8x128xi1>, vector<8x128xf32>
      %c0_18 = arith.constant 0 : index
      %c0_19 = arith.constant 0 : index
      %31 = vector.load %arg5[%c0_18, %c0_19] : memref<8x128xf32, #tpu.memory_space<vmem>>, vector<8x128xf32>
      tpu.vector_store %arg5[%c0_18, %c0_19], %30 {strides = array<i32>} : memref<8x128xf32, #tpu.memory_space<vmem>>, vector<8x128xf32>,
    } else {
    }
    return
  }
  func.func @transform_0(%arg0: i32, %arg1: i32) -> (i32, i32) {
    %c0_i32 = arith.constant 0 : i32
    return %arg0, %arg1 : i32, i32
  }
  func.func @transform_1(%arg0: i32, %arg1: i32) -> (i32, i32) {
    %c0_i32 = arith.constant 0 : i32
    %c0_i32_0 = arith.constant 0 : i32
    return %arg1, %c0_i32 : i32, i32
  }
  func.func @transform_2(%arg0: i32, %arg1: i32) -> (i32, i32) {
    %c0_i32 = arith.constant 0 : i32
    %c0_i32_0 = arith.constant 0 : i32
    return %arg0, %c0_i32 : i32, i32
  }
  func.func @transform_3(%arg0: i32, %arg1: i32) -> (i32, i32) {
    %c0_i32 = arith.constant 0 : i32
    %c0_i32_0 = arith.constant 0 : i32
    return %arg0, %c0_i32 : i32, i32
  }
}

</mosaic_0001>

<llo_original>
// kernel: up_forward.5
$region0: #{up_forward.5}
  #allocation0 [shape = 'u32[]', space=smem, size = 0x4, offset = 0x4, fixed_abs, tag = 'smem constant byte address 0x4 - core index']
  #allocation1 [shape = 'u32[144,128]{1,0:T(1,128)}', space=vmem, size = 0x12000, scoped, tag = 'internal scratch']
  %s0 = inlined_call_operand.vmem [shape: f32[1024,128], index: 0, kind: input, shape index: {}]
  %s1 = inlined_call_operand.vmem [shape: f32[1,128], index: 1, kind: input, shape index: {}]
  %s2 = inlined_call_operand.vmem [shape: f32[1,128], index: 2, kind: input, shape index: {}]
  %s3 = inlined_call_operand.vmem [shape: f32[1024,128], index: 3, kind: output, shape index: {}]
  %s4 = sld [smem:[#allocation0]]
  $region45: #{up_forward.5} parent=0
    _
  %s6 = ssub.s32 1, %s4
  %s7 = scalar_select 0, %s6, %s4
  loop: start=0, step=1, limit=4
  $region2: #{up_forward.5} parent=0 // loop_pre_header
    _
  $region3: #{up_forward.5} parent=0 // loop_header
    %s9 = sphi 0, %s13
    %p10 = scmp.ge.s32.totalorder %s9, 4
    %s19 = sphi 0, %s21
    %s22 = sphi 0, %s19
    %s23 = sphi 0, %s22
    %s39 = sphi 0, %s23
    %s43 = sphi 0, %s43
    %s45 = sphi 0, %s43
    %s46 = sphi 0, %s45
    %s60 = sphi 0, %s46
    %s64 = sphi 0, %s64
    %s66 = sphi 0, %s64
    %s67 = sphi 0, %s66
    %s81 = sphi 0, %s67
    %s87 = sphi 0, %s89
    %s90 = sphi 0, %s87
    %s91 = sphi 0, %s90
    %s107 = sphi 0, %s91
  $region4: #{up_forward.5} parent=0 // loop_header_branch
    %12 = sbr.rel (%p10) target = $region8
  $region5: #{up_forward.5} parent=0 // loop_body
    %s14 = ssub.s32 %s9, 1
    %s15 = ssub.s32 %s9, 2
    %s16 = sadd.s32 %s9, 1
    %s17 = ssub.s32 %s9, %s16
    %p18 = scmp.eq.s32.totalorder %s17, 0
    %s20 = sadd.s32 %s19, 1
    %s21 = scalar_select %p18, %s19, %s20
    %p24 = pneg %p18
    %p25 = scmp.eq.s32.totalorder %s9, 1
    %p26 = por %p24, %p25
    %p27 = scmp.ne.s32.totalorder %s19, %s22
    %p28 = scmp.eq.s32.totalorder %s9, 0
    %p29 = por %p27, %p28
    %p30 = scmp.ne.s32.totalorder %s19, %s22
    %p31 = scmp.eq.s32.totalorder %s14, 1
    %p32 = por %p30, %p31
    %p33 = scmp.ne.s32.totalorder %s22, %s23
    %p34 = scmp.eq.s32.totalorder %s14, 0
    %p35 = por %p33, %p34
    %p36 = scmp.ne.s32.totalorder %s22, %s23
    %p37 = scmp.eq.s32.totalorder %s15, 1
    %p38 = por %p36, %p37
    %p40 = scmp.ne.s32.totalorder %s23, %s39
    %p41 = scmp.eq.s32.totalorder %s15, 0
    %p42 = por %p40, %p41
    %s44 = sadd.s32 %s43, 1
    %p47 = scmp.eq.s32.totalorder %s9, 1
    %p48 = scmp.ne.s32.totalorder %s43, %s45
    %p49 = scmp.eq.s32.totalorder %s9, 0
    %p50 = por %p48, %p49
    %p51 = scmp.ne.s32.totalorder %s43, %s45
    %p52 = scmp.eq.s32.totalorder %s14, 1
    %p53 = por %p51, %p52
    %p54 = scmp.ne.s32.totalorder %s45, %s46
    %p55 = scmp.eq.s32.totalorder %s14, 0
    %p56 = por %p54, %p55
    %p57 = scmp.ne.s32.totalorder %s45, %s46
    %p58 = scmp.eq.s32.totalorder %s15, 1
    %p59 = por %p57, %p58
    %p61 = scmp.ne.s32.totalorder %s46, %s60
    %p62 = scmp.eq.s32.totalorder %s15, 0
    %p63 = por %p61, %p62
    %s65 = sadd.s32 %s64, 1
    %p68 = scmp.eq.s32.totalorder %s9, 1
    %p69 = scmp.ne.s32.totalorder %s64, %s66
    %p70 = scmp.eq.s32.totalorder %s9, 0
    %p71 = por %p69, %p70
    %p72 = scmp.ne.s32.totalorder %s64, %s66
    %p73 = scmp.eq.s32.totalorder %s14, 1
    %p74 = por %p72, %p73
    %p75 = scmp.ne.s32.totalorder %s66, %s67
    %p76 = scmp.eq.s32.totalorder %s14, 0
    %p77 = por %p75, %p76
    %p78 = scmp.ne.s32.totalorder %s66, %s67
    %p79 = scmp.eq.s32.totalorder %s15, 1
    %p80 = por %p78, %p79
    %p82 = scmp.ne.s32.totalorder %s67, %s81
    %p83 = scmp.eq.s32.totalorder %s15, 0
    %p84 = por %p82, %p83
    %s85 = ssub.s32 %s9, %s16
    %p86 = scmp.eq.s32.totalorder %s85, 0
    %s88 = sadd.s32 %s87, 1
    %s89 = scalar_select %p86, %s87, %s88
    %p92 = pneg %p86
    %p93 = scmp.eq.s32.totalorder %s9, 1
    %p94 = por %p92, %p93
    %p95 = scmp.ne.s32.totalorder %s87, %s90
    %p96 = scmp.eq.s32.totalorder %s9, 0
    %p97 = por %p95, %p96
    %p98 = scmp.ne.s32.totalorder %s87, %s90
    %p99 = scmp.eq.s32.totalorder %s14, 1
    %p100 = por %p98, %p99
    %p101 = scmp.ne.s32.totalorder %s90, %s91
    %p102 = scmp.eq.s32.totalorder %s14, 0
    %p103 = por %p101, %p102
    %p104 = scmp.ne.s32.totalorder %s90, %s91
    %p105 = scmp.eq.s32.totalorder %s15, 1
    %p106 = por %p104, %p105
    %p108 = scmp.ne.s32.totalorder %s91, %s107
    %p109 = scmp.eq.s32.totalorder %s15, 0
    %p110 = por %p108, %p109
    %p111 = scmp.le.s32.totalorder 1, %s9
    %p112 = scmp.lt.s32.totalorder %s9, 3
    %p113 = pnand %p111, %p112
    %p114 = pneg %p113
    // Predicated region
    $region9: #{up_forward.5} parent=5 // pred_check
      _
    $region10: #{up_forward.5} parent=5 // pred_check_branch
      %116 = sbr.rel (%p113) target = $region12
    $region11: #{up_forward.5} parent=5 // pred_region
      %s117 = ssub.s32 %s9, 1
      // Predicated region
      $region13: #{up_forward.5} parent=11 // pred_check
        %p118 = pneg %p56
      $region14: #{up_forward.5} parent=11 // pred_check_branch
        %120 = sbr.rel (%p118) target = $region16
      $region15: #{up_forward.5} parent=11 // pred_region
        _
      $region16: #{up_forward.5} parent=11 // pred_fallthru
        _
      // Predicated region
      $region17: #{up_forward.5} parent=11 // pred_check
        %p121 = pneg %p77
      $region18: #{up_forward.5} parent=11 // pred_check_branch
        %123 = sbr.rel (%p121) target = $region20
      $region19: #{up_forward.5} parent=11 // pred_region
        _
      $region20: #{up_forward.5} parent=11 // pred_fallthru
        _
    $region12: #{up_forward.5} parent=5 // pred_fallthru
      _
    %p124 = scmp.lt.s32.totalorder %s9, 2
    // Predicated region
    $region21: #{up_forward.5} parent=5 // pred_check
      %p125 = pneg %p124
    $region22: #{up_forward.5} parent=5 // pred_check_branch
      %127 = sbr.rel (%p125) target = $region24
    $region23: #{up_forward.5} parent=5 // pred_region
      // Predicated region
      $region25: #{up_forward.5} parent=23 // pred_check
        %p128 = pneg %p29
      $region26: #{up_forward.5} parent=23 // pred_check_branch
        %130 = sbr.rel (%p128) target = $region28
      $region27: #{up_forward.5} parent=23 // pred_region
        %s131 = smul.u32 64, %s9
        %p132 = scmp.lt.s32.totalorder %s131, 127
        %s133 = scalar_select %p132, %s131, 127
        %s134 = smul.addr %s133, 8
        %s135 = scalar_lea.vmem %s0, %s134
        %s136 = smul.u32 64, %s9
      $region28: #{up_forward.5} parent=23 // pred_fallthru
        _
    $region24: #{up_forward.5} parent=5 // pred_fallthru
      _
    %p137 = scmp.le.s32.totalorder 1, %s9
    %p138 = scmp.lt.s32.totalorder %s9, 3
    %p139 = pnand %p137, %p138
    %p140 = pneg %p139
    // Predicated region
    $region29: #{up_forward.5} parent=5 // pred_check
      _
    $region30: #{up_forward.5} parent=5 // pred_check_branch
      %142 = sbr.rel (%p139) target = $region32
    $region31: #{up_forward.5} parent=5 // pred_region
      %s143 = ssub.s32 %s9, 1
      %s144 = smul.u32 64, %s14
      %p145 = scmp.lt.s32.totalorder %s144, 127
      %s146 = scalar_select %p145, %s144, 127
      %s147 = smul.addr %s146, 8
      %s148 = scalar_lea.vmem %s0, %s147
      %p149 = pneg %p35
      %p150 = pneg %p32
      %p151 = pneg %p56
      %p152 = pneg %p53
      %p153 = pneg %p77
      %p154 = pneg %p74
      %p155 = pneg %p103
      %p156 = pneg %p100
      %s157 = smul.u32 64, %s14
      %p158 = scmp.lt.s32.totalorder %s157, 127
      %s159 = scalar_select %p158, %s157, 127
      %s160 = smul.addr %s159, 8
      %s161 = scalar_lea.vmem %s3, %s160
      %s162 = smul.u32 64, %s14
      %p163 = scmp.lt.s32.totalorder %s162, 127
      %s164 = scalar_select %p163, %s162, 127
      %s165 = smul.addr %s164, 8
      %s166 = scalar_lea.vmem %s0, %s165
      %s167 = smul.u32 64, %s14
      %s168 = smul.u32 64, %s14
      %p169 = scmp.lt.s32.totalorder %s168, 127
      %s170 = scalar_select %p169, %s168, 127
      %s171 = smul.addr %s170, 8
      %s172 = scalar_lea.vmem %s3, %s171
      %s173 = smul.u32 64, %s14
      %v174 = vld [vmem:[%s166] sm:$0xff]
      %v175 = vld [vmem:[%s166 + $0x8] sm:$0xff]
      %v176 = vld [vmem:[%s166 + $0x10] sm:$0xff]
      %v177 = vld [vmem:[%s166 + $0x18] sm:$0xff]
      %v178 = vld [vmem:[%s166 + $0x20] sm:$0xff]
      %v179 = vld [vmem:[%s166 + $0x28] sm:$0xff]
      %v180 = vld [vmem:[%s166 + $0x30] sm:$0xff]
      %v181 = vld [vmem:[%s166 + $0x38] sm:$0xff]
      %v182 = vld [vmem:[%s166 + $0x40] sm:$0xff]
      %v183 = vld [vmem:[%s166 + $0x48] sm:$0xff]
      %v184 = vld [vmem:[%s166 + $0x50] sm:$0xff]
      %v185 = vld [vmem:[%s166 + $0x58] sm:$0xff]
      %v186 = vld [vmem:[%s166 + $0x60] sm:$0xff]
      %v187 = vld [vmem:[%s166 + $0x68] sm:$0xff]
      %v188 = vld [vmem:[%s166 + $0x70] sm:$0xff]
      %v189 = vld [vmem:[%s166 + $0x78] sm:$0xff]
      %v190 = vld [vmem:[%s166 + $0x80] sm:$0xff]
      %v191 = vld [vmem:[%s166 + $0x88] sm:$0xff]
      %v192 = vld [vmem:[%s166 + $0x90] sm:$0xff]
      %v193 = vld [vmem:[%s166 + $0x98] sm:$0xff]
      %v194 = vld [vmem:[%s166 + $0xa0] sm:$0xff]
      %v195 = vld [vmem:[%s166 + $0xa8] sm:$0xff]
      %v196 = vld [vmem:[%s166 + $0xb0] sm:$0xff]
      %v197 = vld [vmem:[%s166 + $0xb8] sm:$0xff]
      %v198 = vld [vmem:[%s166 + $0xc0] sm:$0xff]
      %v199 = vld [vmem:[%s166 + $0xc8] sm:$0xff]
      %v200 = vld [vmem:[%s166 + $0xd0] sm:$0xff]
      %v201 = vld [vmem:[%s166 + $0xd8] sm:$0xff]
      %v202 = vld [vmem:[%s166 + $0xe0] sm:$0xff]
      %v203 = vld [vmem:[%s166 + $0xe8] sm:$0xff]
      %v204 = vld [vmem:[%s166 + $0xf0] sm:$0xff]
      %v205 = vld [vmem:[%s166 + $0xf8] sm:$0xff]
      %v206 = vld [vmem:[%s166 + $0x100] sm:$0xff]
      %v207 = vld [vmem:[%s166 + $0x108] sm:$0xff]
      %v208 = vld [vmem:[%s166 + $0x110] sm:$0xff]
      %v209 = vld [vmem:[%s166 + $0x118] sm:$0xff]
      %v210 = vld [vmem:[%s166 + $0x120] sm:$0xff]
      %v211 = vld [vmem:[%s166 + $0x128] sm:$0xff]
      %v212 = vld [vmem:[%s166 + $0x130] sm:$0xff]
      %v213 = vld [vmem:[%s166 + $0x138] sm:$0xff]
      %v214 = vld [vmem:[%s166 + $0x140] sm:$0xff]
      %v215 = vld [vmem:[%s166 + $0x148] sm:$0xff]
      %v216 = vld [vmem:[%s166 + $0x150] sm:$0xff]
      %v217 = vld [vmem:[%s166 + $0x158] sm:$0xff]
      %v218 = vld [vmem:[%s166 + $0x160] sm:$0xff]
      %v219 = vld [vmem:[%s166 + $0x168] sm:$0xff]
      %v220 = vld [vmem:[%s166 + $0x170] sm:$0xff]
      %v221 = vld [vmem:[%s166 + $0x178] sm:$0xff]
      %v222 = vld [vmem:[%s166 + $0x180] sm:$0xff]
      %v223 = vld [vmem:[%s166 + $0x188] sm:$0xff]
      %v224 = vld [vmem:[%s166 + $0x190] sm:$0xff]
      %v225 = vld [vmem:[%s166 + $0x198] sm:$0xff]
      %v226 = vld [vmem:[%s166 + $0x1a0] sm:$0xff]
      %v227 = vld [vmem:[%s166 + $0x1a8] sm:$0xff]
      %v228 = vld [vmem:[%s166 + $0x1b0] sm:$0xff]
      %v229 = vld [vmem:[%s166 + $0x1b8] sm:$0xff]
      %v230 = vld [vmem:[%s166 + $0x1c0] sm:$0xff]
      %v231 = vld [vmem:[%s166 + $0x1c8] sm:$0xff]
      %v232 = vld [vmem:[%s166 + $0x1d0] sm:$0xff]
      %v233 = vld [vmem:[%s166 + $0x1d8] sm:$0xff]
      %v234 = vld [vmem:[%s166 + $0x1e0] sm:$0xff]
      %v235 = vld [vmem:[%s166 + $0x1e8] sm:$0xff]
      %v236 = vld [vmem:[%s166 + $0x1f0] sm:$0xff]
      %v237 = vld [vmem:[%s166 + $0x1f8] sm:$0xff]
      %v238 = vld [vmem:[%s1] sm:$0x1]
      %v240 = vlaneseq
      %v241 = vshrl.u32 %v240, 7
      %v242 = vsub.s32 0, %v241
      %v243 = vrot.slane %v238, %v242
      %v245 = vmul.f32 %v174, %v243
      %v246 = vmul.f32 %v175, %v243
      %v247 = vmul.f32 %v176, %v243
      %v248 = vmul.f32 %v177, %v243
      %v249 = vmul.f32 %v178, %v243
      %v250 = vmul.f32 %v179, %v243
      %v251 = vmul.f32 %v180, %v243
      %v252 = vmul.f32 %v181, %v243
      %v253 = vmul.f32 %v182, %v243
      %v254 = vmul.f32 %v183, %v243
      %v255 = vmul.f32 %v184, %v243
      %v256 = vmul.f32 %v185, %v243
      %v257 = vmul.f32 %v186, %v243
      %v258 = vmul.f32 %v187, %v243
      %v259 = vmul.f32 %v188, %v243
      %v260 = vmul.f32 %v189, %v243
      %v261 = vmul.f32 %v190, %v243
      %v262 = vmul.f32 %v191, %v243
      %v263 = vmul.f32 %v192, %v243
      %v264 = vmul.f32 %v193, %v243
      %v265 = vmul.f32 %v194, %v243
      %v266 = vmul.f32 %v195, %v243
      %v267 = vmul.f32 %v196, %v243
      %v268 = vmul.f32 %v197, %v243
      %v269 = vmul.f32 %v198, %v243
      %v270 = vmul.f32 %v199, %v243
      %v271 = vmul.f32 %v200, %v243
      %v272 = vmul.f32 %v201, %v243
      %v273 = vmul.f32 %v202, %v243
      %v274 = vmul.f32 %v203, %v243
      %v275 = vmul.f32 %v204, %v243
      %v276 = vmul.f32 %v205, %v243
      %v277 = vmul.f32 %v206, %v243
      %v278 = vmul.f32 %v207, %v243
      %v279 = vmul.f32 %v208, %v243
      %v280 = vmul.f32 %v209, %v243
      %v281 = vmul.f32 %v210, %v243
      %v282 = vmul.f32 %v211, %v243
      %v283 = vmul.f32 %v212, %v243
      %v284 = vmul.f32 %v213, %v243
      %v285 = vmul.f32 %v214, %v243
      %v286 = vmul.f32 %v215, %v243
      %v287 = vmul.f32 %v216, %v243
      %v288 = vmul.f32 %v217, %v243
      %v289 = vmul.f32 %v218, %v243
      %v290 = vmul.f32 %v219, %v243
      %v291 = vmul.f32 %v220, %v243
      %v292 = vmul.f32 %v221, %v243
      %v293 = vmul.f32 %v222, %v243
      %v294 = vmul.f32 %v223, %v243
      %v295 = vmul.f32 %v224, %v243
      %v296 = vmul.f32 %v225, %v243
      %v297 = vmul.f32 %v226, %v243
      %v298 = vmul.f32 %v227, %v243
      %v299 = vmul.f32 %v228, %v243
      %v300 = vmul.f32 %v229, %v243
      %v301 = vmul.f32 %v230, %v243
      %v302 = vmul.f32 %v231, %v243
      %v303 = vmul.f32 %v232, %v243
      %v304 = vmul.f32 %v233, %v243
      %v305 = vmul.f32 %v234, %v243
      %v306 = vmul.f32 %v235, %v243
      %v307 = vmul.f32 %v236, %v243
      %v308 = vmul.f32 %v237, %v243
      %v309 = vld [vmem:[%s2] sm:$0x1]
      %v311 = vlaneseq
      %v312 = vshrl.u32 %v311, 7
      %v313 = vsub.s32 0, %v312
      %v314 = vrot.slane %v309, %v313
      %v316 = vadd.f32 %v245, %v314
      %v317 = vadd.f32 %v246, %v314
      %v318 = vadd.f32 %v247, %v314
      %v319 = vadd.f32 %v248, %v314
      %v320 = vadd.f32 %v249, %v314
      %v321 = vadd.f32 %v250, %v314
      %v322 = vadd.f32 %v251, %v314
      %v323 = vadd.f32 %v252, %v314
      %v324 = vadd.f32 %v253, %v314
      %v325 = vadd.f32 %v254, %v314
      %v326 = vadd.f32 %v255, %v314
      %v327 = vadd.f32 %v256, %v314
      %v328 = vadd.f32 %v257, %v314
      %v329 = vadd.f32 %v258, %v314
      %v330 = vadd.f32 %v259, %v314
      %v331 = vadd.f32 %v260, %v314
      %v332 = vadd.f32 %v261, %v314
      %v333 = vadd.f32 %v262, %v314
      %v334 = vadd.f32 %v263, %v314
      %v335 = vadd.f32 %v264, %v314
      %v336 = vadd.f32 %v265, %v314
      %v337 = vadd.f32 %v266, %v314
      %v338 = vadd.f32 %v267, %v314
      %v339 = vadd.f32 %v268, %v314
      %v340 = vadd.f32 %v269, %v314
      %v341 = vadd.f32 %v270, %v314
      %v342 = vadd.f32 %v271, %v314
      %v343 = vadd.f32 %v272, %v314
      %v344 = vadd.f32 %v273, %v314
      %v345 = vadd.f32 %v274, %v314
      %v346 = vadd.f32 %v275, %v314
      %v347 = vadd.f32 %v276, %v314
      %v348 = vadd.f32 %v277, %v314
      %v349 = vadd.f32 %v278, %v314
      %v350 = vadd.f32 %v279, %v314
      %v351 = vadd.f32 %v280, %v314
      %v352 = vadd.f32 %v281, %v314
      %v353 = vadd.f32 %v282, %v314
      %v354 = vadd.f32 %v283, %v314
      %v355 = vadd.f32 %v284, %v314
      %v356 = vadd.f32 %v285, %v314
      %v357 = vadd.f32 %v286, %v314
      %v358 = vadd.f32 %v287, %v314
      %v359 = vadd.f32 %v288, %v314
      %v360 = vadd.f32 %v289, %v314
      %v361 = vadd.f32 %v290, %v314
      %v362 = vadd.f32 %v291, %v314
      %v363 = vadd.f32 %v292, %v314
      %v364 = vadd.f32 %v293, %v314
      %v365 = vadd.f32 %v294, %v314
      %v366 = vadd.f32 %v295, %v314
      %v367 = vadd.f32 %v296, %v314
      %v368 = vadd.f32 %v297, %v314
      %v369 = vadd.f32 %v298, %v314
      %v370 = vadd.f32 %v299, %v314
      %v371 = vadd.f32 %v300, %v314
      %v372 = vadd.f32 %v301, %v314
      %v373 = vadd.f32 %v302, %v314
      %v374 = vadd.f32 %v303, %v314
      %v375 = vadd.f32 %v304, %v314
      %v376 = vadd.f32 %v305, %v314
      %v377 = vadd.f32 %v306, %v314
      %v378 = vadd.f32 %v307, %v314
      %v379 = vadd.f32 %v308, %v314
      %v380 = vmax.f32 %v316, 0.0
      %v381 = vmax.f32 %v317, 0.0
      %v382 = vmax.f32 %v318, 0.0
      %v383 = vmax.f32 %v319, 0.0
      %v384 = vmax.f32 %v320, 0.0
      %v385 = vmax.f32 %v321, 0.0
      %v386 = vmax.f32 %v322, 0.0
      %v387 = vmax.f32 %v323, 0.0
      %v388 = vmax.f32 %v324, 0.0
      %v389 = vmax.f32 %v325, 0.0
      %v390 = vmax.f32 %v326, 0.0
      %v391 = vmax.f32 %v327, 0.0
      %v392 = vmax.f32 %v328, 0.0
      %v393 = vmax.f32 %v329, 0.0
      %v394 = vmax.f32 %v330, 0.0
      %v395 = vmax.f32 %v331, 0.0
      %v396 = vmax.f32 %v332, 0.0
      %v397 = vmax.f32 %v333, 0.0
      %v398 = vmax.f32 %v334, 0.0
      %v399 = vmax.f32 %v335, 0.0
      %v400 = vmax.f32 %v336, 0.0
      %v401 = vmax.f32 %v337, 0.0
      %v402 = vmax.f32 %v338, 0.0
      %v403 = vmax.f32 %v339, 0.0
      %v404 = vmax.f32 %v340, 0.0
      %v405 = vmax.f32 %v341, 0.0
      %v406 = vmax.f32 %v342, 0.0
      %v407 = vmax.f32 %v343, 0.0
      %v408 = vmax.f32 %v344, 0.0
      %v409 = vmax.f32 %v345, 0.0
      %v410 = vmax.f32 %v346, 0.0
      %v411 = vmax.f32 %v347, 0.0
      %v412 = vmax.f32 %v348, 0.0
      %v413 = vmax.f32 %v349, 0.0
      %v414 = vmax.f32 %v350, 0.0
      %v415 = vmax.f32 %v351, 0.0
      %v416 = vmax.f32 %v352, 0.0
      %v417 = vmax.f32 %v353, 0.0
      %v418 = vmax.f32 %v354, 0.0
      %v419 = vmax.f32 %v355, 0.0
      %v420 = vmax.f32 %v356, 0.0
      %v421 = vmax.f32 %v357, 0.0
      %v422 = vmax.f32 %v358, 0.0
      %v423 = vmax.f32 %v359, 0.0
      %v424 = vmax.f32 %v360, 0.0
      %v425 = vmax.f32 %v361, 0.0
      %v426 = vmax.f32 %v362, 0.0
      %v427 = vmax.f32 %v363, 0.0
      %v428 = vmax.f32 %v364, 0.0
      %v429 = vmax.f32 %v365, 0.0
      %v430 = vmax.f32 %v366, 0.0
      %v431 = vmax.f32 %v367, 0.0
      %v432 = vmax.f32 %v368, 0.0
      %v433 = vmax.f32 %v369, 0.0
      %v434 = vmax.f32 %v370, 0.0
      %v435 = vmax.f32 %v371, 0.0
      %v436 = vmax.f32 %v372, 0.0
      %v437 = vmax.f32 %v373, 0.0
      %v438 = vmax.f32 %v374, 0.0
      %v439 = vmax.f32 %v375, 0.0
      %v440 = vmax.f32 %v376, 0.0
      %v441 = vmax.f32 %v377, 0.0
      %v442 = vmax.f32 %v378, 0.0
      %v443 = vmax.f32 %v379, 0.0
      %444 = vst [vmem:[%s172] sm:$0xff] %v380
      %445 = vst [vmem:[%s172 + $0x8] sm:$0xff] %v381
      %446 = vst [vmem:[%s172 + $0x10] sm:$0xff] %v382
      %447 = vst [vmem:[%s172 + $0x18] sm:$0xff] %v383
      %448 = vst [vmem:[%s172 + $0x20] sm:$0xff] %v384
      %449 = vst [vmem:[%s172 + $0x28] sm:$0xff] %v385
      %450 = vst [vmem:[%s172 + $0x30] sm:$0xff] %v386
      %451 = vst [vmem:[%s172 + $0x38] sm:$0xff] %v387
      %452 = vst [vmem:[%s172 + $0x40] sm:$0xff] %v388
      %453 = vst [vmem:[%s172 + $0x48] sm:$0xff] %v389
      %454 = vst [vmem:[%s172 + $0x50] sm:$0xff] %v390
      %455 = vst [vmem:[%s172 + $0x58] sm:$0xff] %v391
      %456 = vst [vmem:[%s172 + $0x60] sm:$0xff] %v392
      %457 = vst [vmem:[%s172 + $0x68] sm:$0xff] %v393
      %458 = vst [vmem:[%s172 + $0x70] sm:$0xff] %v394
      %459 = vst [vmem:[%s172 + $0x78] sm:$0xff] %v395
      %460 = vst [vmem:[%s172 + $0x80] sm:$0xff] %v396
      %461 = vst [vmem:[%s172 + $0x88] sm:$0xff] %v397
      %462 = vst [vmem:[%s172 + $0x90] sm:$0xff] %v398
      %463 = vst [vmem:[%s172 + $0x98] sm:$0xff] %v399
      %464 = vst [vmem:[%s172 + $0xa0] sm:$0xff] %v400
      %465 = vst [vmem:[%s172 + $0xa8] sm:$0xff] %v401
      %466 = vst [vmem:[%s172 + $0xb0] sm:$0xff] %v402
      %467 = vst [vmem:[%s172 + $0xb8] sm:$0xff] %v403
      %468 = vst [vmem:[%s172 + $0xc0] sm:$0xff] %v404
      %469 = vst [vmem:[%s172 + $0xc8] sm:$0xff] %v405
      %470 = vst [vmem:[%s172 + $0xd0] sm:$0xff] %v406
      %471 = vst [vmem:[%s172 + $0xd8] sm:$0xff] %v407
      %472 = vst [vmem:[%s172 + $0xe0] sm:$0xff] %v408
      %473 = vst [vmem:[%s172 + $0xe8] sm:$0xff] %v409
      %474 = vst [vmem:[%s172 + $0xf0] sm:$0xff] %v410
      %475 = vst [vmem:[%s172 + $0xf8] sm:$0xff] %v411
      %476 = vst [vmem:[%s172 + $0x100] sm:$0xff] %v412
      %477 = vst [vmem:[%s172 + $0x108] sm:$0xff] %v413
      %478 = vst [vmem:[%s172 + $0x110] sm:$0xff] %v414
      %479 = vst [vmem:[%s172 + $0x118] sm:$0xff] %v415
      %480 = vst [vmem:[%s172 + $0x120] sm:$0xff] %v416
      %481 = vst [vmem:[%s172 + $0x128] sm:$0xff] %v417
      %482 = vst [vmem:[%s172 + $0x130] sm:$0xff] %v418
      %483 = vst [vmem:[%s172 + $0x138] sm:$0xff] %v419
      %484 = vst [vmem:[%s172 + $0x140] sm:$0xff] %v420
      %485 = vst [vmem:[%s172 + $0x148] sm:$0xff] %v421
      %486 = vst [vmem:[%s172 + $0x150] sm:$0xff] %v422
      %487 = vst [vmem:[%s172 + $0x158] sm:$0xff] %v423
      %488 = vst [vmem:[%s172 + $0x160] sm:$0xff] %v424
      %489 = vst [vmem:[%s172 + $0x168] sm:$0xff] %v425
      %490 = vst [vmem:[%s172 + $0x170] sm:$0xff] %v426
      %491 = vst [vmem:[%s172 + $0x178] sm:$0xff] %v427
      %492 = vst [vmem:[%s172 + $0x180] sm:$0xff] %v428
      %493 = vst [vmem:[%s172 + $0x188] sm:$0xff] %v429
      %494 = vst [vmem:[%s172 + $0x190] sm:$0xff] %v430
      %495 = vst [vmem:[%s172 + $0x198] sm:$0xff] %v431
      %496 = vst [vmem:[%s172 + $0x1a0] sm:$0xff] %v432
      %497 = vst [vmem:[%s172 + $0x1a8] sm:$0xff] %v433
      %498 = vst [vmem:[%s172 + $0x1b0] sm:$0xff] %v434
      %499 = vst [vmem:[%s172 + $0x1b8] sm:$0xff] %v435
      %500 = vst [vmem:[%s172 + $0x1c0] sm:$0xff] %v436
      %501 = vst [vmem:[%s172 + $0x1c8] sm:$0xff] %v437
      %502 = vst [vmem:[%s172 + $0x1d0] sm:$0xff] %v438
      %503 = vst [vmem:[%s172 + $0x1d8] sm:$0xff] %v439
      %504 = vst [vmem:[%s172 + $0x1e0] sm:$0xff] %v440
      %505 = vst [vmem:[%s172 + $0x1e8] sm:$0xff] %v441
      %506 = vst [vmem:[%s172 + $0x1f0] sm:$0xff] %v442
      %507 = vst [vmem:[%s172 + $0x1f8] sm:$0xff] %v443
      %s508 = smul.u32 64, %s14
      %p509 = scmp.lt.s32.totalorder %s508, 127
      %s510 = scalar_select %p509, %s508, 127
      %s511 = smul.addr %s510, 8
      %s512 = scalar_lea.vmem %s3, %s511
      // Predicated region
      $region33: #{up_forward.5} parent=31 // pred_check
        %p513 = pneg %p100
      $region34: #{up_forward.5} parent=31 // pred_check_branch
        %515 = sbr.rel (%p513) target = $region36
      $region35: #{up_forward.5} parent=31 // pred_region
        %s516 = smul.u32 64, %s14
      $region36: #{up_forward.5} parent=31 // pred_fallthru
        _
    $region32: #{up_forward.5} parent=5 // pred_fallthru
      _
    %p517 = scmp.le.s32.totalorder 2, %s9
    // Predicated region
    $region37: #{up_forward.5} parent=5 // pred_check
      %p518 = pneg %p517
    $region38: #{up_forward.5} parent=5 // pred_check_branch
      %520 = sbr.rel (%p518) target = $region40
    $region39: #{up_forward.5} parent=5 // pred_region
      %s521 = ssub.s32 %s9, 2
      // Predicated region
      $region41: #{up_forward.5} parent=39 // pred_check
        %p522 = pneg %p106
      $region42: #{up_forward.5} parent=39 // pred_check_branch
        %524 = sbr.rel (%p522) target = $region44
      $region43: #{up_forward.5} parent=39 // pred_region
        %s525 = smul.u32 64, %s15
        %p526 = scmp.lt.s32.totalorder %s525, 127
        %s527 = scalar_select %p526, %s525, 127
        %s528 = smul.addr %s527, 8
        %s529 = scalar_lea.vmem %s3, %s528
      $region44: #{up_forward.5} parent=39 // pred_fallthru
        _
    $region40: #{up_forward.5} parent=5 // pred_fallthru
      _
  $region6: #{up_forward.5} parent=0 // loop_footer
    %s13 = sadd.s32 1, %s9
  $region7: #{up_forward.5} parent=0 // loop_footer_branch
    %8 = sbr.rel target = $region3
  $region8: #{up_forward.5} parent=0 // loop_exit
    _

// kernel: up_forward.4
$region0: #{up_forward.4}
  #allocation0 [shape = 'u32[]', space=smem, size = 0x4, offset = 0x4, fixed_abs, tag = 'smem constant byte address 0x4 - core index']
  #allocation1 [shape = 'u32[144,128]{1,0:T(1,128)}', space=vmem, size = 0x12000, scoped, tag = 'internal scratch']
  #allocation2 [shape = 'f32[512,128]{1,0:T(8,128)}', space=vmem, size = 0x40000, scoped, tag = 'scratch operand']
  %s0 = inlined_call_operand.vmem [shape: bf16[1024,256], index: 0, kind: input, shape index: {}]
  %s1 = inlined_call_operand.vmem [shape: bf16[256,128], index: 1, kind: input, shape index: {}]
  %s2 = inlined_call_operand.vmem [shape: f32[1024,128], index: 2, kind: output, shape index: {0}]
  %s3 = inlined_call_operand.vmem [shape: f32[16,128], index: 3, kind: output, shape index: {1}]
  %4 = xla_tuple %s2, %s3
  %s5 = sld [smem:[#allocation0]]
  $region98: #{up_forward.4} parent=0
    _
  %s7 = ssub.s32 1, %s5
  %s8 = scalar_select 0, %s7, %s5
  $region1: #{up_forward.4} parent=0
    #allocation3 [shape = 'u8[262144]{0}', space=vmem, size = 0x40000, scoped, tag = 'input window, operand 0']
    loop: start=0, step=1, limit=6
    $region2: #{up_forward.4} parent=1 // loop_pre_header
      _
    $region3: #{up_forward.4} parent=1 // loop_header
      %s10 = sphi 0, %s14
      %p11 = scmp.ge.s32.totalorder %s10, 6
      %s17 = sphi 0, %s29
      %s18 = sphi 0, %s25
      %s19 = sphi 0, %s17
      %s20 = sphi 0, %s18
      %s21 = sphi 0, %s19
      %s22 = sphi 0, %s20
      %s34 = sphi 0, %s36
      %s37 = sphi 0, %s34
      %s38 = sphi 0, %s37
      %s54 = sphi 0, %s38
      %s60 = sphi 0, %s62
      %s63 = sphi 0, %s60
      %s64 = sphi 0, %s63
      %s80 = sphi 0, %s64
      %s86 = sphi 0, %s88
      %s89 = sphi 0, %s86
      %s90 = sphi 0, %s89
      %s106 = sphi 0, %s90
      %s112 = sphi 0, %s114
      %s115 = sphi 0, %s112
      %s116 = sphi 0, %s115
      %s132 = sphi 0, %s116
    $region4: #{up_forward.4} parent=1 // loop_header_branch
      %13 = sbr.rel (%p11) target = $region8
    $region5: #{up_forward.4} parent=1 // loop_body
      %s15 = ssub.s32 %s10, 1
      %s16 = ssub.s32 %s10, 2
      %s23 = sadd.s32 1, %s18
      %p24 = scmp.ge.s32.totalorder %s23, 2
      %s25 = scalar_select %p24, 0, %s23
      %s26 = sadd.s32 1, %s17
      %s27 = scalar_select %p24, %s26, %s17
      %p28 = scmp.ge.s32.totalorder %s27, 2
      %s29 = scalar_select %p28, 0, %s27
      %s30 = ssub.s32 %s17, %s29
      %s31 = ssub.s32 %s18, %s25
      %s32 = sor.u32 %s30, %s31
      %p33 = scmp.eq.s32.totalorder %s32, 0
      %s35 = sadd.s32 %s34, 1
      %s36 = scalar_select %p33, %s34, %s35
      %p39 = pneg %p33
      %p40 = scmp.eq.s32.totalorder %s10, 3
      %p41 = por %p39, %p40
      %p42 = scmp.ne.s32.totalorder %s34, %s37
      %p43 = scmp.eq.s32.totalorder %s10, 0
      %p44 = por %p42, %p43
      %p45 = scmp.ne.s32.totalorder %s34, %s37
      %p46 = scmp.eq.s32.totalorder %s15, 3
      %p47 = por %p45, %p46
      %p48 = scmp.ne.s32.totalorder %s37, %s38
      %p49 = scmp.eq.s32.totalorder %s15, 0
      %p50 = por %p48, %p49
      %p51 = scmp.ne.s32.totalorder %s37, %s38
      %p52 = scmp.eq.s32.totalorder %s16, 3
      %p53 = por %p51, %p52
      %p55 = scmp.ne.s32.totalorder %s38, %s54
      %p56 = scmp.eq.s32.totalorder %s16, 0
      %p57 = por %p55, %p56
      %s58 = ssub.s32 %s18, %s25
      %p59 = scmp.eq.s32.totalorder %s58, 0
      %s61 = sadd.s32 %s60, 1
      %s62 = scalar_select %p59, %s60, %s61
      %p65 = pneg %p59
      %p66 = scmp.eq.s32.totalorder %s10, 3
      %p67 = por %p65, %p66
      %p68 = scmp.ne.s32.totalorder %s60, %s63
      %p69 = scmp.eq.s32.totalorder %s10, 0
      %p70 = por %p68, %p69
      %p71 = scmp.ne.s32.totalorder %s60, %s63
      %p72 = scmp.eq.s32.totalorder %s15, 3
      %p73 = por %p71, %p72
      %p74 = scmp.ne.s32.totalorder %s63, %s64
      %p75 = scmp.eq.s32.totalorder %s15, 0
      %p76 = por %p74, %p75
      %p77 = scmp.ne.s32.totalorder %s63, %s64
      %p78 = scmp.eq.s32.totalorder %s16, 3
      %p79 = por %p77, %p78
      %p81 = scmp.ne.s32.totalorder %s64, %s80
      %p82 = scmp.eq.s32.totalorder %s16, 0
      %p83 = por %p81, %p82
      %s84 = ssub.s32 %s17, %s29
      %p85 = scmp.eq.s32.totalorder %s84, 0
      %s87 = sadd.s32 %s86, 1
      %s88 = scalar_select %p85, %s86, %s87
      %p91 = pneg %p85
      %p92 = scmp.eq.s32.totalorder %s10, 3
      %p93 = por %p91, %p92
      %p94 = scmp.ne.s32.totalorder %s86, %s89
      %p95 = scmp.eq.s32.totalorder %s10, 0
      %p96 = por %p94, %p95
      %p97 = scmp.ne.s32.totalorder %s86, %s89
      %p98 = scmp.eq.s32.totalorder %s15, 3
      %p99 = por %p97, %p98
      %p100 = scmp.ne.s32.totalorder %s89, %s90
      %p101 = scmp.eq.s32.totalorder %s15, 0
      %p102 = por %p100, %p101
      %p103 = scmp.ne.s32.totalorder %s89, %s90
      %p104 = scmp.eq.s32.totalorder %s16, 3
      %p105 = por %p103, %p104
      %p107 = scmp.ne.s32.totalorder %s90, %s106
      %p108 = scmp.eq.s32.totalorder %s16, 0
      %p109 = por %p107, %p108
      %s110 = ssub.s32 %s17, %s29
      %p111 = scmp.eq.s32.totalorder %s110, 0
      %s113 = sadd.s32 %s112, 1
      %s114 = scalar_select %p111, %s112, %s113
      %p117 = pneg %p111
      %p118 = scmp.eq.s32.totalorder %s10, 3
      %p119 = por %p117, %p118
      %p120 = scmp.ne.s32.totalorder %s112, %s115
      %p121 = scmp.eq.s32.totalorder %s10, 0
      %p122 = por %p120, %p121
      %p123 = scmp.ne.s32.totalorder %s112, %s115
      %p124 = scmp.eq.s32.totalorder %s15, 3
      %p125 = por %p123, %p124
      %p126 = scmp.ne.s32.totalorder %s115, %s116
      %p127 = scmp.eq.s32.totalorder %s15, 0
      %p128 = por %p126, %p127
      %p129 = scmp.ne.s32.totalorder %s115, %s116
      %p130 = scmp.eq.s32.totalorder %s16, 3
      %p131 = por %p129, %p130
      %p133 = scmp.ne.s32.totalorder %s116, %s132
      %p134 = scmp.eq.s32.totalorder %s16, 0
      %p135 = por %p133, %p134
      %p136 = scmp.le.s32.totalorder 1, %s10
      %p137 = scmp.lt.s32.totalorder %s10, 5
      %p138 = pnand %p136, %p137
      %p139 = pneg %p138
      // Predicated region
      $region9: #{up_forward.4} parent=5 // pred_check
        _
      $region10: #{up_forward.4} parent=5 // pred_check_branch
        %141 = sbr.rel (%p138) target = $region12
      $region11: #{up_forward.4} parent=5 // pred_region
        %s142 = ssub.s32 %s10, 1
      $region12: #{up_forward.4} parent=5 // pred_fallthru
        _
      %p143 = scmp.lt.s32.totalorder %s10, 4
      // Predicated region
      $region13: #{up_forward.4} parent=5 // pred_check
        %p144 = pneg %p143
      $region14: #{up_forward.4} parent=5 // pred_check_branch
        %146 = sbr.rel (%p144) target = $region16
      $region15: #{up_forward.4} parent=5 // pred_region
        // Predicated region
        $region17: #{up_forward.4} parent=15 // pred_check
          %p147 = pneg %p44
        $region18: #{up_forward.4} parent=15 // pred_check_branch
          %149 = sbr.rel (%p147) target = $region20
        $region19: #{up_forward.4} parent=15 // pred_region
          %s150 = sand.u32 %s34, 1
          %s151 = sand.u32 %s34, 1
          %s152 = smul.addr %s151, 256
          %s153 = scalar_lea.vmem [#allocation3], %s152
          %s154 = smul.u32 64, %s17
          %s155 = smul.addr %s154, 2
          %s156 = sadd.s32 %s18, %s155
          %s157 = smul.addr %s156, 4
          %s158 = scalar_lea.vmem %s0, %s157
          // Predicated region
          $region21: #{up_forward.4} parent=19 // pred_check
            _
          $region22: #{up_forward.4} parent=19 // pred_check_branch
            %160 = sbr.rel (0) target = $region24
          $region23: #{up_forward.4} parent=19 // pred_region
            // Predicated region
            $region25: #{up_forward.4} parent=23 // pred_check
              _
            $region26: #{up_forward.4} parent=23 // pred_check_branch
              %162 = sbr.rel target = $region28
            $region27: #{up_forward.4} parent=23 // pred_region
              // Predicated region
              $region40: #{up_forward.4} parent=27 // pred_check
                _
              $region41: #{up_forward.4} parent=27 // pred_check_branch
                %304 = sbr.rel (0) target = $region43
              $region42: #{up_forward.4} parent=27 // pred_region
                loop: start=0, step=1, limit=1
                $region44: #{up_forward.4} parent=42 // loop_pre_header
                  _
                $region45: #{up_forward.4} parent=42 // loop_header
                  %s306 = sphi 0, %s310
                  %p307 = scmp.ge.s32.totalorder %s306, 1
                  %s311 = sphi %s158, %s158
                  %s312 = sphi %s153, %s153
                $region46: #{up_forward.4} parent=42 // loop_header_branch
                  %309 = sbr.rel (%p307) target = $region50
                $region47: #{up_forward.4} parent=42 // loop_body
                  _
                $region48: #{up_forward.4} parent=42 // loop_footer
                  %s310 = sadd.s32 1, %s306
                $region49: #{up_forward.4} parent=42 // loop_footer_branch
                  %305 = sbr.rel target = $region45
                $region50: #{up_forward.4} parent=42 // loop_exit
                  _
                %s314 = ssub.s32 16, 1
                loop: start=0, step=1, limit=1
                $region51: #{up_forward.4} parent=42 // loop_pre_header
                  _
                $region52: #{up_forward.4} parent=42 // loop_header
                  %s316 = sphi 0, %s320
                  %p317 = scmp.ge.s32.totalorder %s316, 1
                  %s321 = sphi %s158, %s158
                  %s322 = sphi %s153, %s153
                $region53: #{up_forward.4} parent=42 // loop_header_branch
                  %319 = sbr.rel (%p317) target = $region57
                $region54: #{up_forward.4} parent=42 // loop_body
                  %v323 = vld [vmem:[%s321] sm:%s314]
                  %324 = vst [vmem:[%s322] sm:%s314] %v323
                  %v325 = vld [vmem:[%s321 + $0x8] sm:%s314]
                  %326 = vst [vmem:[%s322 + $0x4] sm:%s314] %v325
                  %v327 = vld [vmem:[%s321 + $0x10] sm:%s314]
                  %328 = vst [vmem:[%s322 + $0x8] sm:%s314] %v327
                  %v329 = vld [vmem:[%s321 + $0x18] sm:%s314]
                  %330 = vst [vmem:[%s322 + $0xc] sm:%s314] %v329
                  %v331 = vld [vmem:[%s321 + $0x20] sm:%s314]
                  %332 = vst [vmem:[%s322 + $0x10] sm:%s314] %v331
                  %v333 = vld [vmem:[%s321 + $0x28] sm:%s314]
                  %334 = vst [vmem:[%s322 + $0x14] sm:%s314] %v333
                  %v335 = vld [vmem:[%s321 + $0x30] sm:%s314]
                  %336 = vst [vmem:[%s322 + $0x18] sm:%s314] %v335
                  %v337 = vld [vmem:[%s321 + $0x38] sm:%s314]
                  %338 = vst [vmem:[%s322 + $0x1c] sm:%s314] %v337
                  %v339 = vld [vmem:[%s321 + $0x40] sm:%s314]
                  %340 = vst [vmem:[%s322 + $0x20] sm:%s314] %v339
                  %v341 = vld [vmem:[%s321 + $0x48] sm:%s314]
                  %342 = vst [vmem:[%s322 + $0x24] sm:%s314] %v341
                  %v343 = vld [vmem:[%s321 + $0x50] sm:%s314]
                  %344 = vst [vmem:[%s322 + $0x28] sm:%s314] %v343
                  %v345 = vld [vmem:[%s321 + $0x58] sm:%s314]
                  %346 = vst [vmem:[%s322 + $0x2c] sm:%s314] %v345
                  %v347 = vld [vmem:[%s321 + $0x60] sm:%s314]
                  %348 = vst [vmem:[%s322 + $0x30] sm:%s314] %v347
                  %v349 = vld [vmem:[%s321 + $0x68] sm:%s314]
                  %350 = vst [vmem:[%s322 + $0x34] sm:%s314] %v349
                  %v351 = vld [vmem:[%s321 + $0x70] sm:%s314]
                  %352 = vst [vmem:[%s322 + $0x38] sm:%s314] %v351
                  %v353 = vld [vmem:[%s321 + $0x78] sm:%s314]
                  %354 = vst [vmem:[%s322 + $0x3c] sm:%s314] %v353
                  %v355 = vld [vmem:[%s321 + $0x80] sm:%s314]
                  %356 = vst [vmem:[%s322 + $0x40] sm:%s314] %v355
                  %v357 = vld [vmem:[%s321 + $0x88] sm:%s314]
                  %358 = vst [vmem:[%s322 + $0x44] sm:%s314] %v357
                  %v359 = vld [vmem:[%s321 + $0x90] sm:%s314]
                  %360 = vst [vmem:[%s322 + $0x48] sm:%s314] %v359
                  %v361 = vld [vmem:[%s321 + $0x98] sm:%s314]
                  %362 = vst [vmem:[%s322 + $0x4c] sm:%s314] %v361
                  %v363 = vld [vmem:[%s321 + $0xa0] sm:%s314]
                  %364 = vst [vmem:[%s322 + $0x50] sm:%s314] %v363
                  %v365 = vld [vmem:[%s321 + $0xa8] sm:%s314]
                  %366 = vst [vmem:[%s322 + $0x54] sm:%s314] %v365
                  %v367 = vld [vmem:[%s321 + $0xb0] sm:%s314]
                  %368 = vst [vmem:[%s322 + $0x58] sm:%s314] %v367
                  %v369 = vld [vmem:[%s321 + $0xb8] sm:%s314]
                  %370 = vst [vmem:[%s322 + $0x5c] sm:%s314] %v369
                  %v371 = vld [vmem:[%s321 + $0xc0] sm:%s314]
                  %372 = vst [vmem:[%s322 + $0x60] sm:%s314] %v371
                  %v373 = vld [vmem:[%s321 + $0xc8] sm:%s314]
                  %374 = vst [vmem:[%s322 + $0x64] sm:%s314] %v373
                  %v375 = vld [vmem:[%s321 + $0xd0] sm:%s314]
                  %376 = vst [vmem:[%s322 + $0x68] sm:%s314] %v375
                  %v377 = vld [vmem:[%s321 + $0xd8] sm:%s314]
                  %378 = vst [vmem:[%s322 + $0x6c] sm:%s314] %v377
                  %v379 = vld [vmem:[%s321 + $0xe0] sm:%s314]
                  %380 = vst [vmem:[%s322 + $0x70] sm:%s314] %v379
                  %v381 = vld [vmem:[%s321 + $0xe8] sm:%s314]
                  %382 = vst [vmem:[%s322 + $0x74] sm:%s314] %v381
                  %v383 = vld [vmem:[%s321 + $0xf0] sm:%s314]
                  %384 = vst [vmem:[%s322 + $0x78] sm:%s314] %v383
                  %v385 = vld [vmem:[%s321 + $0xf8] sm:%s314]
                  %386 = vst [vmem:[%s322 + $0x7c] sm:%s314] %v385
                  %v387 = vld [vmem:[%s321 + $0x100] sm:%s314]
                  %388 = vst [vmem:[%s322 + $0x80] sm:%s314] %v387
                  %v389 = vld [vmem:[%s321 + $0x108] sm:%s314]
                  %390 = vst [vmem:[%s322 + $0x84] sm:%s314] %v389
                  %v391 = vld [vmem:[%s321 + $0x110] sm:%s314]
                  %392 = vst [vmem:[%s322 + $0x88] sm:%s314] %v391
                  %v393 = vld [vmem:[%s321 + $0x118] sm:%s314]
                  %394 = vst [vmem:[%s322 + $0x8c] sm:%s314] %v393
                  %v395 = vld [vmem:[%s321 + $0x120] sm:%s314]
                  %396 = vst [vmem:[%s322 + $0x90] sm:%s314] %v395
                  %v397 = vld [vmem:[%s321 + $0x128] sm:%s314]
                  %398 = vst [vmem:[%s322 + $0x94] sm:%s314] %v397
                  %v399 = vld [vmem:[%s321 + $0x130] sm:%s314]
                  %400 = vst [vmem:[%s322 + $0x98] sm:%s314] %v399
                  %v401 = vld [vmem:[%s321 + $0x138] sm:%s314]
                  %402 = vst [vmem:[%s322 + $0x9c] sm:%s314] %v401
                  %v403 = vld [vmem:[%s321 + $0x140] sm:%s314]
                  %404 = vst [vmem:[%s322 + $0xa0] sm:%s314] %v403
                  %v405 = vld [vmem:[%s321 + $0x148] sm:%s314]
                  %406 = vst [vmem:[%s322 + $0xa4] sm:%s314] %v405
                  %v407 = vld [vmem:[%s321 + $0x150] sm:%s314]
                  %408 = vst [vmem:[%s322 + $0xa8] sm:%s314] %v407
                  %v409 = vld [vmem:[%s321 + $0x158] sm:%s314]
                  %410 = vst [vmem:[%s322 + $0xac] sm:%s314] %v409
                  %v411 = vld [vmem:[%s321 + $0x160] sm:%s314]
                  %412 = vst [vmem:[%s322 + $0xb0] sm:%s314] %v411
                  %v413 = vld [vmem:[%s321 + $0x168] sm:%s314]
                  %414 = vst [vmem:[%s322 + $0xb4] sm:%s314] %v413
                  %v415 = vld [vmem:[%s321 + $0x170] sm:%s314]
                  %416 = vst [vmem:[%s322 + $0xb8] sm:%s314] %v415
                  %v417 = vld [vmem:[%s321 + $0x178] sm:%s314]
                  %418 = vst [vmem:[%s322 + $0xbc] sm:%s314] %v417
                  %v419 = vld [vmem:[%s321 + $0x180] sm:%s314]
                  %420 = vst [vmem:[%s322 + $0xc0] sm:%s314] %v419
                  %v421 = vld [vmem:[%s321 + $0x188] sm:%s314]
                  %422 = vst [vmem:[%s322 + $0xc4] sm:%s314] %v421
                  %v423 = vld [vmem:[%s321 + $0x190] sm:%s314]
                  %424 = vst [vmem:[%s322 + $0xc8] sm:%s314] %v423
                  %v425 = vld [vmem:[%s321 + $0x198] sm:%s314]
                  %426 = vst [vmem:[%s322 + $0xcc] sm:%s314] %v425
                  %v427 = vld [vmem:[%s321 + $0x1a0] sm:%s314]
                  %428 = vst [vmem:[%s322 + $0xd0] sm:%s314] %v427
                  %v429 = vld [vmem:[%s321 + $0x1a8] sm:%s314]
                  %430 = vst [vmem:[%s322 + $0xd4] sm:%s314] %v429
                  %v431 = vld [vmem:[%s321 + $0x1b0] sm:%s314]
                  %432 = vst [vmem:[%s322 + $0xd8] sm:%s314] %v431
                  %v433 = vld [vmem:[%s321 + $0x1b8] sm:%s314]
                  %434 = vst [vmem:[%s322 + $0xdc] sm:%s314] %v433
                  %v435 = vld [vmem:[%s321 + $0x1c0] sm:%s314]
                  %436 = vst [vmem:[%s322 + $0xe0] sm:%s314] %v435
                  %v437 = vld [vmem:[%s321 + $0x1c8] sm:%s314]
                  %438 = vst [vmem:[%s322 + $0xe4] sm:%s314] %v437
                  %v439 = vld [vmem:[%s321 + $0x1d0] sm:%s314]
                  %440 = vst [vmem:[%s322 + $0xe8] sm:%s314] %v439
                  %v441 = vld [vmem:[%s321 + $0x1d8] sm:%s314]
                  %442 = vst [vmem:[%s322 + $0xec] sm:%s314] %v441
                  %v443 = vld [vmem:[%s321 + $0x1e0] sm:%s314]
                  %444 = vst [vmem:[%s322 + $0xf0] sm:%s314] %v443
                  %v445 = vld [vmem:[%s321 + $0x1e8] sm:%s314]
                  %446 = vst [vmem:[%s322 + $0xf4] sm:%s314] %v445
                  %v447 = vld [vmem:[%s321 + $0x1f0] sm:%s314]
                  %448 = vst [vmem:[%s322 + $0xf8] sm:%s314] %v447
                  %v449 = vld [vmem:[%s321 + $0x1f8] sm:%s314]
                  %450 = vst [vmem:[%s322 + $0xfc] sm:%s314] %v449
                $region55: #{up_forward.4} parent=42 // loop_footer
                  %s320 = sadd.s32 1, %s316
                $region56: #{up_forward.4} parent=42 // loop_footer_branch
                  %315 = sbr.rel target = $region52
                $region57: #{up_forward.4} parent=42 // loop_exit
                  _
              $region43: #{up_forward.4} parent=27 // pred_fallthru
                _
            $region28: #{up_forward.4} parent=23 // pred_fallthru
              _
            // Predicated region
            $region29: #{up_forward.4} parent=23 // pred_check
              _
            $region30: #{up_forward.4} parent=23 // pred_check_branch
              %164 = sbr.rel (0) target = $region32
            $region31: #{up_forward.4} parent=23 // pred_region
              %s166 = ssub.s32 16, 1
              loop: start=0, step=1, limit=1
              $region33: #{up_forward.4} parent=31 // loop_pre_header
                _
              $region34: #{up_forward.4} parent=31 // loop_header
                %s168 = sphi 0, %s172
                %p169 = scmp.ge.s32.totalorder %s168, 1
                %s173 = sphi %s158, %s158
                %s174 = sphi %s153, %s153
              $region35: #{up_forward.4} parent=31 // loop_header_branch
                %171 = sbr.rel (%p169) target = $region39
              $region36: #{up_forward.4} parent=31 // loop_body
                %v175 = vld [vmem:[%s173] sm:%s166]
                %176 = vst [vmem:[%s174] sm:%s166] %v175
                %v177 = vld [vmem:[%s173 + $0x8] sm:%s166]
                %178 = vst [vmem:[%s174 + $0x4] sm:%s166] %v177
                %v179 = vld [vmem:[%s173 + $0x10] sm:%s166]
                %180 = vst [vmem:[%s174 + $0x8] sm:%s166] %v179
                %v181 = vld [vmem:[%s173 + $0x18] sm:%s166]
                %182 = vst [vmem:[%s174 + $0xc] sm:%s166] %v181
                %v183 = vld [vmem:[%s173 + $0x20] sm:%s166]
                %184 = vst [vmem:[%s174 + $0x10] sm:%s166] %v183
                %v185 = vld [vmem:[%s173 + $0x28] sm:%s166]
                %186 = vst [vmem:[%s174 + $0x14] sm:%s166] %v185
                %v187 = vld [vmem:[%s173 + $0x30] sm:%s166]
                %188 = vst [vmem:[%s174 + $0x18] sm:%s166] %v187
                %v189 = vld [vmem:[%s173 + $0x38] sm:%s166]
                %190 = vst [vmem:[%s174 + $0x1c] sm:%s166] %v189
                %v191 = vld [vmem:[%s173 + $0x40] sm:%s166]
                %192 = vst [vmem:[%s174 + $0x20] sm:%s166] %v191
                %v193 = vld [vmem:[%s173 + $0x48] sm:%s166]
                %194 = vst [vmem:[%s174 + $0x24] sm:%s166] %v193
                %v195 = vld [vmem:[%s173 + $0x50] sm:%s166]
                %196 = vst [vmem:[%s174 + $0x28] sm:%s166] %v195
                %v197 = vld [vmem:[%s173 + $0x58] sm:%s166]
                %198 = vst [vmem:[%s174 + $0x2c] sm:%s166] %v197
                %v199 = vld [vmem:[%s173 + $0x60] sm:%s166]
                %200 = vst [vmem:[%s174 + $0x30] sm:%s166] %v199
                %v201 = vld [vmem:[%s173 + $0x68] sm:%s166]
                %202 = vst [vmem:[%s174 + $0x34] sm:%s166] %v201
                %v203 = vld [vmem:[%s173 + $0x70] sm:%s166]
                %204 = vst [vmem:[%s174 + $0x38] sm:%s166] %v203
                %v205 = vld [vmem:[%s173 + $0x78] sm:%s166]
                %206 = vst [vmem:[%s174 + $0x3c] sm:%s166] %v205
                %v207 = vld [vmem:[%s173 + $0x80] sm:%s166]
                %208 = vst [vmem:[%s174 + $0x40] sm:%s166] %v207
                %v209 = vld [vmem:[%s173 + $0x88] sm:%s166]
                %210 = vst [vmem:[%s174 + $0x44] sm:%s166] %v209
                %v211 = vld [vmem:[%s173 + $0x90] sm:%s166]
                %212 = vst [vmem:[%s174 + $0x48] sm:%s166] %v211
                %v213 = vld [vmem:[%s173 + $0x98] sm:%s166]
                %214 = vst [vmem:[%s174 + $0x4c] sm:%s166] %v213
                %v215 = vld [vmem:[%s173 + $0xa0] sm:%s166]
                %216 = vst [vmem:[%s174 + $0x50] sm:%s166] %v215
                %v217 = vld [vmem:[%s173 + $0xa8] sm:%s166]
                %218 = vst [vmem:[%s174 + $0x54] sm:%s166] %v217
                %v219 = vld [vmem:[%s173 + $0xb0] sm:%s166]
                %220 = vst [vmem:[%s174 + $0x58] sm:%s166] %v219
                %v221 = vld [vmem:[%s173 + $0xb8] sm:%s166]
                %222 = vst [vmem:[%s174 + $0x5c] sm:%s166] %v221
                %v223 = vld [vmem:[%s173 + $0xc0] sm:%s166]
                %224 = vst [vmem:[%s174 + $0x60] sm:%s166] %v223
                %v225 = vld [vmem:[%s173 + $0xc8] sm:%s166]
                %226 = vst [vmem:[%s174 + $0x64] sm:%s166] %v225
                %v227 = vld [vmem:[%s173 + $0xd0] sm:%s166]
                %228 = vst [vmem:[%s174 + $0x68] sm:%s166] %v227
                %v229 = vld [vmem:[%s173 + $0xd8] sm:%s166]
                %230 = vst [vmem:[%s174 + $0x6c] sm:%s166] %v229
                %v231 = vld [vmem:[%s173 + $0xe0] sm:%s166]
                %232 = vst [vmem:[%s174 + $0x70] sm:%s166] %v231
                %v233 = vld [vmem:[%s173 + $0xe8] sm:%s166]
                %234 = vst [vmem:[%s174 + $0x74] sm:%s166] %v233
                %v235 = vld [vmem:[%s173 + $0xf0] sm:%s166]
                %236 = vst [vmem:[%s174 + $0x78] sm:%s166] %v235
                %v237 = vld [vmem:[%s173 + $0xf8] sm:%s166]
                %238 = vst [vmem:[%s174 + $0x7c] sm:%s166] %v237
                %v239 = vld [vmem:[%s173 + $0x100] sm:%s166]
                %240 = vst [vmem:[%s174 + $0x80] sm:%s166] %v239
                %v241 = vld [vmem:[%s173 + $0x108] sm:%s166]
                %242 = vst [vmem:[%s174 + $0x84] sm:%s166] %v241
                %v243 = vld [vmem:[%s173 + $0x110] sm:%s166]
                %244 = vst [vmem:[%s174 + $0x88] sm:%s166] %v243
                %v245 = vld [vmem:[%s173 + $0x118] sm:%s166]
                %246 = vst [vmem:[%s174 + $0x8c] sm:%s166] %v245
                %v247 = vld [vmem:[%s173 + $0x120] sm:%s166]
                %248 = vst [vmem:[%s174 + $0x90] sm:%s166] %v247
                %v249 = vld [vmem:[%s173 + $0x128] sm:%s166]
                %250 = vst [vmem:[%s174 + $0x94] sm:%s166] %v249
                %v251 = vld [vmem:[%s173 + $0x130] sm:%s166]
                %252 = vst [vmem:[%s174 + $0x98] sm:%s166] %v251
                %v253 = vld [vmem:[%s173 + $0x138] sm:%s166]
                %254 = vst [vmem:[%s174 + $0x9c] sm:%s166] %v253
                %v255 = vld [vmem:[%s173 + $0x140] sm:%s166]
                %256 = vst [vmem:[%s174 + $0xa0] sm:%s166] %v255
                %v257 = vld [vmem:[%s173 + $0x148] sm:%s166]
                %258 = vst [vmem:[%s174 + $0xa4] sm:%s166] %v257
                %v259 = vld [vmem:[%s173 + $0x150] sm:%s166]
                %260 = vst [vmem:[%s174 + $0xa8] sm:%s166] %v259
                %v261 = vld [vmem:[%s173 + $0x158] sm:%s166]
                %262 = vst [vmem:[%s174 + $0xac] sm:%s166] %v261
                %v263 = vld [vmem:[%s173 + $0x160] sm:%s166]
                %264 = vst [vmem:[%s174 + $0xb0] sm:%s166] %v263
                %v265 = vld [vmem:[%s173 + $0x168] sm:%s166]
                %266 = vst [vmem:[%s174 + $0xb4] sm:%s166] %v265
                %v267 = vld [vmem:[%s173 + $0x170] sm:%s166]
                %268 = vst [vmem:[%s174 + $0xb8] sm:%s166] %v267
                %v269 = vld [vmem:[%s173 + $0x178] sm:%s166]
                %270 = vst [vmem:[%s174 + $0xbc] sm:%s166] %v269
                %v271 = vld [vmem:[%s173 + $0x180] sm:%s166]
                %272 = vst [vmem:[%s174 + $0xc0] sm:%s166] %v271
                %v273 = vld [vmem:[%s173 + $0x188] sm:%s166]
                %274 = vst [vmem:[%s174 + $0xc4] sm:%s166] %v273
                %v275 = vld [vmem:[%s173 + $0x190] sm:%s166]
                %276 = vst [vmem:[%s174 + $0xc8] sm:%s166] %v275
                %v277 = vld [vmem:[%s173 + $0x198] sm:%s166]
                %278 = vst [vmem:[%s174 + $0xcc] sm:%s166] %v277
                %v279 = vld [vmem:[%s173 + $0x1a0] sm:%s166]
                %280 = vst [vmem:[%s174 + $0xd0] sm:%s166] %v279
                %v281 = vld [vmem:[%s173 + $0x1a8] sm:%s166]
                %282 = vst [vmem:[%s174 + $0xd4] sm:%s166] %v281
                %v283 = vld [vmem:[%s173 + $0x1b0] sm:%s166]
                %284 = vst [vmem:[%s174 + $0xd8] sm:%s166] %v283
                %v285 = vld [vmem:[%s173 + $0x1b8] sm:%s166]
                %286 = vst [vmem:[%s174 + $0xdc] sm:%s166] %v285
                %v287 = vld [vmem:[%s173 + $0x1c0] sm:%s166]
                %288 = vst [vmem:[%s174 + $0xe0] sm:%s166] %v287
                %v289 = vld [vmem:[%s173 + $0x1c8] sm:%s166]
                %290 = vst [vmem:[%s174 + $0xe4] sm:%s166] %v289
                %v291 = vld [vmem:[%s173 + $0x1d0] sm:%s166]
                %292 = vst [vmem:[%s174 + $0xe8] sm:%s166] %v291
                %v293 = vld [vmem:[%s173 + $0x1d8] sm:%s166]
                %294 = vst [vmem:[%s174 + $0xec] sm:%s166] %v293
                %v295 = vld [vmem:[%s173 + $0x1e0] sm:%s166]
                %296 = vst [vmem:[%s174 + $0xf0] sm:%s166] %v295
                %v297 = vld [vmem:[%s173 + $0x1e8] sm:%s166]
                %298 = vst [vmem:[%s174 + $0xf4] sm:%s166] %v297
                %v299 = vld [vmem:[%s173 + $0x1f0] sm:%s166]
                %300 = vst [vmem:[%s174 + $0xf8] sm:%s166] %v299
                %v301 = vld [vmem:[%s173 + $0x1f8] sm:%s166]
                %302 = vst [vmem:[%s174 + $0xfc] sm:%s166] %v301
              $region37: #{up_forward.4} parent=31 // loop_footer
                %s172 = sadd.s32 1, %s168
              $region38: #{up_forward.4} parent=31 // loop_footer_branch
                %167 = sbr.rel target = $region34
              $region39: #{up_forward.4} parent=31 // loop_exit
                _
            $region32: #{up_forward.4} parent=23 // pred_fallthru
              _
          $region24: #{up_forward.4} parent=19 // pred_fallthru
            _
          %451 = vnop
        $region20: #{up_forward.4} parent=15 // pred_fallthru
          _
        // Predicated region
        $region58: #{up_forward.4} parent=15 // pred_check
          %p452 = pneg %p70
        $region59: #{up_forward.4} parent=15 // pred_check_branch
          %454 = sbr.rel (%p452) target = $region61
        $region60: #{up_forward.4} parent=15 // pred_region
          %s455 = smul.u32 16, %s18
          %p456 = scmp.lt.s32.totalorder %s455, 31
          %s457 = scalar_select %p456, %s455, 31
          %s458 = smul.addr %s457, 4
          %s459 = scalar_lea.vmem %s1, %s458
          %s460 = smul.u32 16, %s18
        $region61: #{up_forward.4} parent=15 // pred_fallthru
          _
      $region16: #{up_forward.4} parent=5 // pred_fallthru
        _
      %p461 = scmp.le.s32.totalorder 1, %s10
      %p462 = scmp.lt.s32.totalorder %s10, 5
      %p463 = pnand %p461, %p462
      %p464 = pneg %p463
      // Predicated region
      $region62: #{up_forward.4} parent=5 // pred_check
        _
      $region63: #{up_forward.4} parent=5 // pred_check_branch
        %466 = sbr.rel (%p463) target = $region65
      $region64: #{up_forward.4} parent=5 // pred_region
        %s467 = ssub.s32 %s10, 1
        %s468 = sand.u32 %s37, 1
        %s469 = sand.u32 %s37, 1
        %s470 = smul.addr %s469, 256
        %s471 = scalar_lea.vmem [#allocation3], %s470
        // Predicated region
        $region66: #{up_forward.4} parent=64 // pred_check
          %p472 = pneg %p50
        $region67: #{up_forward.4} parent=64 // pred_check_branch
          %474 = sbr.rel (%p472) target = $region69
        $region68: #{up_forward.4} parent=64 // pred_region
          _
        $region69: #{up_forward.4} parent=64 // pred_fallthru
          _
        %s475 = sand.u32 %s37, 1
        %s476 = sand.u32 %s37, 1
        %s477 = smul.addr %s476, 256
        %s478 = scalar_lea.vmem [#allocation3], %s477
        %p479 = pneg %p50
        %p480 = pneg %p47
        %s481 = smul.u32 16, %s20
        %p482 = scmp.lt.s32.totalorder %s481, 31
        %s483 = scalar_select %p482, %s481, 31
        %s484 = smul.addr %s483, 4
        %s485 = scalar_lea.vmem %s1, %s484
        %p486 = pneg %p76
        %p487 = pneg %p73
        %p488 = pneg %p102
        %p489 = pneg %p99
        %s490 = smul.u32 64, %s19
        %p491 = scmp.lt.s32.totalorder %s490, 127
        %s492 = scalar_select %p491, %s490, 127
        %s493 = smul.addr %s492, 8
        %s494 = scalar_lea.vmem %s2, %s493
        %p495 = pneg %p128
        %p496 = pneg %p125
        %p497 = scmp.lt.s32.totalorder %s19, 1
        %s498 = scalar_select %p497, %s19, 1
        %s499 = smul.addr %s498, 8
        %s500 = scalar_lea.vmem %s3, %s499
        %s501 = smul.u32 64, %s19
        %s502 = smul.u32 16, %s20
        %p503 = scmp.lt.s32.totalorder %s502, 31
        %s504 = scalar_select %p503, %s502, 31
        %s505 = smul.addr %s504, 4
        %s506 = scalar_lea.vmem %s1, %s505
        %s507 = smul.u32 16, %s20
        %s508 = smul.u32 64, %s19
        %p509 = scmp.lt.s32.totalorder %s508, 127
        %s510 = scalar_select %p509, %s508, 127
        %s511 = smul.addr %s510, 8
        %s512 = scalar_lea.vmem %s2, %s511
        %s513 = smul.u32 64, %s19
        %p514 = scmp.lt.s32.totalorder %s19, 1
        %s515 = scalar_select %p514, %s19, 1
        %s516 = smul.addr %s515, 8
        %s517 = scalar_lea.vmem %s3, %s516
        %p519 = scmp.eq.s32.totalorder %s20, 0
        // Predicated region
        $region70: #{up_forward.4} parent=64 // pred_check
          %p520 = pneg %p519
        $region71: #{up_forward.4} parent=64 // pred_check_branch
          %522 = sbr.rel (%p520) target = $region73
        $region72: #{up_forward.4} parent=64 // pred_region
          %523 = vst [vmem:[#allocation2] sm:$0xff] 0.0
          %524 = vst [vmem:[#allocation2 + $0x8] sm:$0xff] 0.0
          %525 = vst [vmem:[#allocation2 + $0x10] sm:$0xff] 0.0
          %526 = vst [vmem:[#allocation2 + $0x18] sm:$0xff] 0.0
          %527 = vst [vmem:[#allocation2 + $0x20] sm:$0xff] 0.0
          %528 = vst [vmem:[#allocation2 + $0x28] sm:$0xff] 0.0
          %529 = vst [vmem:[#allocation2 + $0x30] sm:$0xff] 0.0
          %530 = vst [vmem:[#allocation2 + $0x38] sm:$0xff] 0.0
          %531 = vst [vmem:[#allocation2 + $0x40] sm:$0xff] 0.0
          %532 = vst [vmem:[#allocation2 + $0x48] sm:$0xff] 0.0
          %533 = vst [vmem:[#allocation2 + $0x50] sm:$0xff] 0.0
          %534 = vst [vmem:[#allocation2 + $0x58] sm:$0xff] 0.0
          %535 = vst [vmem:[#allocation2 + $0x60] sm:$0xff] 0.0
          %536 = vst [vmem:[#allocation2 + $0x68] sm:$0xff] 0.0
          %537 = vst [vmem:[#allocation2 + $0x70] sm:$0xff] 0.0
          %538 = vst [vmem:[#allocation2 + $0x78] sm:$0xff] 0.0
          %539 = vst [vmem:[#allocation2 + $0x80] sm:$0xff] 0.0
          %540 = vst [vmem:[#allocation2 + $0x88] sm:$0xff] 0.0
          %541 = vst [vmem:[#allocation2 + $0x90] sm:$0xff] 0.0
          %542 = vst [vmem:[#allocation2 + $0x98] sm:$0xff] 0.0
          %543 = vst [vmem:[#allocation2 + $0xa0] sm:$0xff] 0.0
          %544 = vst [vmem:[#allocation2 + $0xa8] sm:$0xff] 0.0
          %545 = vst [vmem:[#allocation2 + $0xb0] sm:$0xff] 0.0
          %546 = vst [vmem:[#allocation2 + $0xb8] sm:$0xff] 0.0
          %547 = vst [vmem:[#allocation2 + $0xc0] sm:$0xff] 0.0
          %548 = vst [vmem:[#allocation2 + $0xc8] sm:$0xff] 0.0
          %549 = vst [vmem:[#allocation2 + $0xd0] sm:$0xff] 0.0
          %550 = vst [vmem:[#allocation2 + $0xd8] sm:$0xff] 0.0
          %551 = vst [vmem:[#allocation2 + $0xe0] sm:$0xff] 0.0
          %552 = vst [vmem:[#allocation2 + $0xe8] sm:$0xff] 0.0
          %553 = vst [vmem:[#allocation2 + $0xf0] sm:$0xff] 0.0
          %554 = vst [vmem:[#allocation2 + $0xf8] sm:$0xff] 0.0
          %555 = vst [vmem:[#allocation2 + $0x100] sm:$0xff] 0.0
          %556 = vst [vmem:[#allocation2 + $0x108] sm:$0xff] 0.0
          %557 = vst [vmem:[#allocation2 + $0x110] sm:$0xff] 0.0
          %558 = vst [vmem:[#allocation2 + $0x118] sm:$0xff] 0.0
          %559 = vst [vmem:[#allocation2 + $0x120] sm:$0xff] 0.0
          %560 = vst [vmem:[#allocation2 + $0x128] sm:$0xff] 0.0
          %561 = vst [vmem:[#allocation2 + $0x130] sm:$0xff] 0.0
          %562 = vst [vmem:[#allocation2 + $0x138] sm:$0xff] 0.0
          %563 = vst [vmem:[#allocation2 + $0x140] sm:$0xff] 0.0
          %564 = vst [vmem:[#allocation2 + $0x148] sm:$0xff] 0.0
          %565 = vst [vmem:[#allocation2 + $0x150] sm:$0xff] 0.0
          %566 = vst [vmem:[#allocation2 + $0x158] sm:$0xff] 0.0
          %567 = vst [vmem:[#allocation2 + $0x160] sm:$0xff] 0.0
          %568 = vst [vmem:[#allocation2 + $0x168] sm:$0xff] 0.0
          %569 = vst [vmem:[#allocation2 + $0x170] sm:$0xff] 0.0
          %570 = vst [vmem:[#allocation2 + $0x178] sm:$0xff] 0.0
          %571 = vst [vmem:[#allocation2 + $0x180] sm:$0xff] 0.0
          %572 = vst [vmem:[#allocation2 + $0x188] sm:$0xff] 0.0
          %573 = vst [vmem:[#allocation2 + $0x190] sm:$0xff] 0.0
          %574 = vst [vmem:[#allocation2 + $0x198] sm:$0xff] 0.0
          %575 = vst [vmem:[#allocation2 + $0x1a0] sm:$0xff] 0.0
          %576 = vst [vmem:[#allocation2 + $0x1a8] sm:$0xff] 0.0
          %577 = vst [vmem:[#allocation2 + $0x1b0] sm:$0xff] 0.0
          %578 = vst [vmem:[#allocation2 + $0x1b8] sm:$0xff] 0.0
          %579 = vst [vmem:[#allocation2 + $0x1c0] sm:$0xff] 0.0
          %580 = vst [vmem:[#allocation2 + $0x1c8] sm:$0xff] 0.0
          %581 = vst [vmem:[#allocation2 + $0x1d0] sm:$0xff] 0.0
          %582 = vst [vmem:[#allocation2 + $0x1d8] sm:$0xff] 0.0
          %583 = vst [vmem:[#allocation2 + $0x1e0] sm:$0xff] 0.0
          %584 = vst [vmem:[#allocation2 + $0x1e8] sm:$0xff] 0.0
          %585 = vst [vmem:[#allocation2 + $0x1f0] sm:$0xff] 0.0
          %586 = vst [vmem:[#allocation2 + $0x1f8] sm:$0xff] 0.0
        $region73: #{up_forward.4} parent=64 // pred_fallthru
          _
        %v587 = vld [vmem:[#allocation2] sm:$0xff]
        %v588 = vld [vmem:[#allocation2 + $0x8] sm:$0xff]
        %v589 = vld [vmem:[#allocation2 + $0x10] sm:$0xff]
        %v590 = vld [vmem:[#allocation2 + $0x18] sm:$0xff]
        %v591 = vld [vmem:[#allocation2 + $0x20] sm:$0xff]
        %v592 = vld [vmem:[#allocation2 + $0x28] sm:$0xff]
        %v593 = vld [vmem:[#allocation2 + $0x30] sm:$0xff]
        %v594 = vld [vmem:[#allocation2 + $0x38] sm:$0xff]
        %v595 = vld [vmem:[#allocation2 + $0x40] sm:$0xff]
        %v596 = vld [vmem:[#allocation2 + $0x48] sm:$0xff]
        %v597 = vld [vmem:[#allocation2 + $0x50] sm:$0xff]
        %v598 = vld [vmem:[#allocation2 + $0x58] sm:$0xff]
        %v599 = vld [vmem:[#allocation2 + $0x60] sm:$0xff]
        %v600 = vld [vmem:[#allocation2 + $0x68] sm:$0xff]
        %v601 = vld [vmem:[#allocation2 + $0x70] sm:$0xff]
        %v602 = vld [vmem:[#allocation2 + $0x78] sm:$0xff]
        %v603 = vld [vmem:[#allocation2 + $0x80] sm:$0xff]
        %v604 = vld [vmem:[#allocation2 + $0x88] sm:$0xff]
        %v605 = vld [vmem:[#allocation2 + $0x90] sm:$0xff]
        %v606 = vld [vmem:[#allocation2 + $0x98] sm:$0xff]
        %v607 = vld [vmem:[#allocation2 + $0xa0] sm:$0xff]
        %v608 = vld [vmem:[#allocation2 + $0xa8] sm:$0xff]
        %v609 = vld [vmem:[#allocation2 + $0xb0] sm:$0xff]
        %v610 = vld [vmem:[#allocation2 + $0xb8] sm:$0xff]
        %v611 = vld [vmem:[#allocation2 + $0xc0] sm:$0xff]
        %v612 = vld [vmem:[#allocation2 + $0xc8] sm:$0xff]
        %v613 = vld [vmem:[#allocation2 + $0xd0] sm:$0xff]
        %v614 = vld [vmem:[#allocation2 + $0xd8] sm:$0xff]
        %v615 = vld [vmem:[#allocation2 + $0xe0] sm:$0xff]
        %v616 = vld [vmem:[#allocation2 + $0xe8] sm:$0xff]
        %v617 = vld [vmem:[#allocation2 + $0xf0] sm:$0xff]
        %v618 = vld [vmem:[#allocation2 + $0xf8] sm:$0xff]
        %v619 = vld [vmem:[#allocation2 + $0x100] sm:$0xff]
        %v620 = vld [vmem:[#allocation2 + $0x108] sm:$0xff]
        %v621 = vld [vmem:[#allocation2 + $0x110] sm:$0xff]
        %v622 = vld [vmem:[#allocation2 + $0x118] sm:$0xff]
        %v623 = vld [vmem:[#allocation2 + $0x120] sm:$0xff]
        %v624 = vld [vmem:[#allocation2 + $0x128] sm:$0xff]
        %v625 = vld [vmem:[#allocation2 + $0x130] sm:$0xff]
        %v626 = vld [vmem:[#allocation2 + $0x138] sm:$0xff]
        %v627 = vld [vmem:[#allocation2 + $0x140] sm:$0xff]
        %v628 = vld [vmem:[#allocation2 + $0x148] sm:$0xff]
        %v629 = vld [vmem:[#allocation2 + $0x150] sm:$0xff]
        %v630 = vld [vmem:[#allocation2 + $0x158] sm:$0xff]
        %v631 = vld [vmem:[#allocation2 + $0x160] sm:$0xff]
        %v632 = vld [vmem:[#allocation2 + $0x168] sm:$0xff]
        %v633 = vld [vmem:[#allocation2 + $0x170] sm:$0xff]
        %v634 = vld [vmem:[#allocation2 + $0x178] sm:$0xff]
        %v635 = vld [vmem:[#allocation2 + $0x180] sm:$0xff]
        %v636 = vld [vmem:[#allocation2 + $0x188] sm:$0xff]
        %v637 = vld [vmem:[#allocation2 + $0x190] sm:$0xff]
        %v638 = vld [vmem:[#allocation2 + $0x198] sm:$0xff]
        %v639 = vld [vmem:[#allocation2 + $0x1a0] sm:$0xff]
        %v640 = vld [vmem:[#allocation2 + $0x1a8] sm:$0xff]
        %v641 = vld [vmem:[#allocation2 + $0x1b0] sm:$0xff]
        %v642 = vld [vmem:[#allocation2 + $0x1b8] sm:$0xff]
        %v643 = vld [vmem:[#allocation2 + $0x1c0] sm:$0xff]
        %v644 = vld [vmem:[#allocation2 + $0x1c8] sm:$0xff]
        %v645 = vld [vmem:[#allocation2 + $0x1d0] sm:$0xff]
        %v646 = vld [vmem:[#allocation2 + $0x1d8] sm:$0xff]
        %v647 = vld [vmem:[#allocation2 + $0x1e0] sm:$0xff]
        %v648 = vld [vmem:[#allocation2 + $0x1e8] sm:$0xff]
        %v649 = vld [vmem:[#allocation2 + $0x1f0] sm:$0xff]
        %v650 = vld [vmem:[#allocation2 + $0x1f8] sm:$0xff]
        %v651 = vld [vmem:[%s471] sm:$0xf]
        %v652 = vld [vmem:[%s471 + $0x4] sm:$0xf]
        %v653 = vld [vmem:[%s471 + $0x8] sm:$0xf]
        %v654 = vld [vmem:[%s471 + $0xc] sm:$0xf]
        %v655 = vld [vmem:[%s471 + $0x10] sm:$0xf]
        %v656 = vld [vmem:[%s471 + $0x14] sm:$0xf]
        %v657 = vld [vmem:[%s471 + $0x18] sm:$0xf]
        %v658 = vld [vmem:[%s471 + $0x1c] sm:$0xf]
        %v659 = vld [vmem:[%s471 + $0x20] sm:$0xf]
        %v660 = vld [vmem:[%s471 + $0x24] sm:$0xf]
        %v661 = vld [vmem:[%s471 + $0x28] sm:$0xf]
        %v662 = vld [vmem:[%s471 + $0x2c] sm:$0xf]
        %v663 = vld [vmem:[%s471 + $0x30] sm:$0xf]
        %v664 = vld [vmem:[%s471 + $0x34] sm:$0xf]
        %v665 = vld [vmem:[%s471 + $0x38] sm:$0xf]
        %v666 = vld [vmem:[%s471 + $0x3c] sm:$0xf]
        %v667 = vld [vmem:[%s471 + $0x40] sm:$0xf]
        %v668 = vld [vmem:[%s471 + $0x44] sm:$0xf]
        %v669 = vld [vmem:[%s471 + $0x48] sm:$0xf]
        %v670 = vld [vmem:[%s471 + $0x4c] sm:$0xf]
        %v671 = vld [vmem:[%s471 + $0x50] sm:$0xf]
        %v672 = vld [vmem:[%s471 + $0x54] sm:$0xf]
        %v673 = vld [vmem:[%s471 + $0x58] sm:$0xf]
        %v674 = vld [vmem:[%s471 + $0x5c] sm:$0xf]
        %v675 = vld [vmem:[%s471 + $0x60] sm:$0xf]
        %v676 = vld [vmem:[%s471 + $0x64] sm:$0xf]
        %v677 = vld [vmem:[%s471 + $0x68] sm:$0xf]
        %v678 = vld [vmem:[%s471 + $0x6c] sm:$0xf]
        %v679 = vld [vmem:[%s471 + $0x70] sm:$0xf]
        %v680 = vld [vmem:[%s471 + $0x74] sm:$0xf]
        %v681 = vld [vmem:[%s471 + $0x78] sm:$0xf]
        %v682 = vld [vmem:[%s471 + $0x7c] sm:$0xf]
        %v683 = vld [vmem:[%s471 + $0x80] sm:$0xf]
        %v684 = vld [vmem:[%s471 + $0x84] sm:$0xf]
        %v685 = vld [vmem:[%s471 + $0x88] sm:$0xf]
        %v686 = vld [vmem:[%s471 + $0x8c] sm:$0xf]
        %v687 = vld [vmem:[%s471 + $0x90] sm:$0xf]
        %v688 = vld [vmem:[%s471 + $0x94] sm:$0xf]
        %v689 = vld [vmem:[%s471 + $0x98] sm:$0xf]
        %v690 = vld [vmem:[%s471 + $0x9c] sm:$0xf]
        %v691 = vld [vmem:[%s471 + $0xa0] sm:$0xf]
        %v692 = vld [vmem:[%s471 + $0xa4] sm:$0xf]
        %v693 = vld [vmem:[%s471 + $0xa8] sm:$0xf]
        %v694 = vld [vmem:[%s471 + $0xac] sm:$0xf]
        %v695 = vld [vmem:[%s471 + $0xb0] sm:$0xf]
        %v696 = vld [vmem:[%s471 + $0xb4] sm:$0xf]
        %v697 = vld [vmem:[%s471 + $0xb8] sm:$0xf]
        %v698 = vld [vmem:[%s471 + $0xbc] sm:$0xf]
        %v699 = vld [vmem:[%s471 + $0xc0] sm:$0xf]
        %v700 = vld [vmem:[%s471 + $0xc4] sm:$0xf]
        %v701 = vld [vmem:[%s471 + $0xc8] sm:$0xf]
        %v702 = vld [vmem:[%s471 + $0xcc] sm:$0xf]
        %v703 = vld [vmem:[%s471 + $0xd0] sm:$0xf]
        %v704 = vld [vmem:[%s471 + $0xd4] sm:$0xf]
        %v705 = vld [vmem:[%s471 + $0xd8] sm:$0xf]
        %v706 = vld [vmem:[%s471 + $0xdc] sm:$0xf]
        %v707 = vld [vmem:[%s471 + $0xe0] sm:$0xf]
        %v708 = vld [vmem:[%s471 + $0xe4] sm:$0xf]
        %v709 = vld [vmem:[%s471 + $0xe8] sm:$0xf]
        %v710 = vld [vmem:[%s471 + $0xec] sm:$0xf]
        %v711 = vld [vmem:[%s471 + $0xf0] sm:$0xf]
        %v712 = vld [vmem:[%s471 + $0xf4] sm:$0xf]
        %v713 = vld [vmem:[%s471 + $0xf8] sm:$0xf]
        %v714 = vld [vmem:[%s471 + $0xfc] sm:$0xf]
        %v715 = vld [vmem:[%s506] sm:$0xf]
        %v716 = vld [vmem:[%s506 + $0x4] sm:$0xf]
        %v717 = vld [vmem:[%s506 + $0x8] sm:$0xf]
        %v718 = vld [vmem:[%s506 + $0xc] sm:$0xf]
        %v719 = vld [vmem:[%s506 + $0x10] sm:$0xf]
        %v720 = vld [vmem:[%s506 + $0x14] sm:$0xf]
        %v721 = vld [vmem:[%s506 + $0x18] sm:$0xf]
        %v722 = vld [vmem:[%s506 + $0x1c] sm:$0xf]
        %v723 = vld [vmem:[%s506 + $0x20] sm:$0xf]
        %v724 = vld [vmem:[%s506 + $0x24] sm:$0xf]
        %v725 = vld [vmem:[%s506 + $0x28] sm:$0xf]
        %v726 = vld [vmem:[%s506 + $0x2c] sm:$0xf]
        %v727 = vld [vmem:[%s506 + $0x30] sm:$0xf]
        %v728 = vld [vmem:[%s506 + $0x34] sm:$0xf]
        %v729 = vld [vmem:[%s506 + $0x38] sm:$0xf]
        %v730 = vld [vmem:[%s506 + $0x3c] sm:$0xf]
        %v795 = vunpack.c.l.b16 %v651
        %v796 = vunpack.c.l.b16 %v652
        %v797 = vunpack.c.l.b16 %v653
        %v798 = vunpack.c.l.b16 %v654
        %v799 = vunpack.c.l.b16 %v655
        %v800 = vunpack.c.l.b16 %v656
        %v801 = vunpack.c.l.b16 %v657
        %v802 = vunpack.c.l.b16 %v658
        %v803 = vunpack.c.l.b16 %v659
        %v804 = vunpack.c.l.b16 %v660
        %v805 = vunpack.c.l.b16 %v661
        %v806 = vunpack.c.l.b16 %v662
        %v807 = vunpack.c.l.b16 %v663
        %v808 = vunpack.c.l.b16 %v664
        %v809 = vunpack.c.l.b16 %v665
        %v810 = vunpack.c.l.b16 %v666
        %v811 = vunpack.c.l.b16 %v667
        %v812 = vunpack.c.l.b16 %v668
        %v813 = vunpack.c.l.b16 %v669
        %v814 = vunpack.c.l.b16 %v670
        %v815 = vunpack.c.l.b16 %v671
        %v816 = vunpack.c.l.b16 %v672
        %v817 = vunpack.c.l.b16 %v673
        %v818 = vunpack.c.l.b16 %v674
        %v819 = vunpack.c.l.b16 %v675
        %v820 = vunpack.c.l.b16 %v676
        %v821 = vunpack.c.l.b16 %v677
        %v822 = vunpack.c.l.b16 %v678
        %v823 = vunpack.c.l.b16 %v679
        %v824 = vunpack.c.l.b16 %v680
        %v825 = vunpack.c.l.b16 %v681
        %v826 = vunpack.c.l.b16 %v682
        %v827 = vunpack.c.l.b16 %v683
        %v828 = vunpack.c.l.b16 %v684
        %v829 = vunpack.c.l.b16 %v685
        %v830 = vunpack.c.l.b16 %v686
        %v831 = vunpack.c.l.b16 %v687
        %v832 = vunpack.c.l.b16 %v688
        %v833 = vunpack.c.l.b16 %v689
        %v834 = vunpack.c.l.b16 %v690
        %v835 = vunpack.c.l.b16 %v691
        %v836 = vunpack.c.l.b16 %v692
        %v837 = vunpack.c.l.b16 %v693
        %v838 = vunpack.c.l.b16 %v694
        %v839 = vunpack.c.l.b16 %v695
        %v840 = vunpack.c.l.b16 %v696
        %v841 = vunpack.c.l.b16 %v697
        %v842 = vunpack.c.l.b16 %v698
        %v843 = vunpack.c.l.b16 %v699
        %v844 = vunpack.c.l.b16 %v700
        %v845 = vunpack.c.l.b16 %v701
        %v846 = vunpack.c.l.b16 %v702
        %v847 = vunpack.c.l.b16 %v703
        %v848 = vunpack.c.l.b16 %v704
        %v849 = vunpack.c.l.b16 %v705
        %v850 = vunpack.c.l.b16 %v706
        %v851 = vunpack.c.l.b16 %v707
        %v852 = vunpack.c.l.b16 %v708
        %v853 = vunpack.c.l.b16 %v709
        %v854 = vunpack.c.l.b16 %v710
        %v855 = vunpack.c.l.b16 %v711
        %v856 = vunpack.c.l.b16 %v712
        %v857 = vunpack.c.l.b16 %v713
        %v858 = vunpack.c.l.b16 %v714
        %v859 = vpack.c.b16 %v796, %v795
        %v860 = vpack.c.b16 %v798, %v797
        %v861 = vpack.c.b16 %v800, %v799
        %v862 = vpack.c.b16 %v802, %v801
        %v863 = vpack.c.b16 %v804, %v803
        %v864 = vpack.c.b16 %v806, %v805
        %v865 = vpack.c.b16 %v808, %v807
        %v866 = vpack.c.b16 %v810, %v809
        %v867 = vpack.c.b16 %v812, %v811
        %v868 = vpack.c.b16 %v814, %v813
        %v869 = vpack.c.b16 %v816, %v815
        %v870 = vpack.c.b16 %v818, %v817
        %v871 = vpack.c.b16 %v820, %v819
        %v872 = vpack.c.b16 %v822, %v821
        %v873 = vpack.c.b16 %v824, %v823
        %v874 = vpack.c.b16 %v826, %v825
        %v875 = vpack.c.b16 %v828, %v827
        %v876 = vpack.c.b16 %v830, %v829
        %v877 = vpack.c.b16 %v832, %v831
        %v878 = vpack.c.b16 %v834, %v833
        %v879 = vpack.c.b16 %v836, %v835
        %v880 = vpack.c.b16 %v838, %v837
        %v881 = vpack.c.b16 %v840, %v839
        %v882 = vpack.c.b16 %v842, %v841
        %v883 = vpack.c.b16 %v844, %v843
        %v884 = vpack.c.b16 %v846, %v845
        %v885 = vpack.c.b16 %v848, %v847
        %v886 = vpack.c.b16 %v850, %v849
        %v887 = vpack.c.b16 %v852, %v851
        %v888 = vpack.c.b16 %v854, %v853
        %v889 = vpack.c.b16 %v856, %v855
        %v890 = vpack.c.b16 %v858, %v857
        %v939 = vunpack.c.l.b16 %v715
        %v940 = vunpack.c.l.b16 %v716
        %v941 = vunpack.c.l.b16 %v717
        %v942 = vunpack.c.l.b16 %v718
        %v943 = vunpack.c.l.b16 %v719
        %v944 = vunpack.c.l.b16 %v720
        %v945 = vunpack.c.l.b16 %v721
        %v946 = vunpack.c.l.b16 %v722
        %v947 = vunpack.c.l.b16 %v723
        %v948 = vunpack.c.l.b16 %v724
        %v949 = vunpack.c.l.b16 %v725
        %v950 = vunpack.c.l.b16 %v726
        %v951 = vunpack.c.l.b16 %v727
        %v952 = vunpack.c.l.b16 %v728
        %v953 = vunpack.c.l.b16 %v729
        %v954 = vunpack.c.l.b16 %v730
        %v955 = vpack.c.b16 %v940, %v939
        %v956 = vpack.c.b16 %v942, %v941
        %v957 = vpack.c.b16 %v944, %v943
        %v958 = vpack.c.b16 %v946, %v945
        %v959 = vpack.c.b16 %v948, %v947
        %v960 = vpack.c.b16 %v950, %v949
        %v961 = vpack.c.b16 %v952, %v951
        %v962 = vpack.c.b16 %v954, %v953
        %971 = vmatprep.subr.bf16.mxu0 0
        %972 = vmatpush1.bf16.msra.mxu0 %v962
        %973 = vmatprep.subr.bf16.mxu0 0
        %974 = vmatpush1.bf16.msra.mxu0 %v961
        %975 = vmatprep.subr.bf16.mxu0 0
        %976 = vmatpush1.bf16.msra.mxu0 %v960
        %977 = vmatprep.subr.bf16.mxu0 0
        %978 = vmatpush1.bf16.msra.mxu0 %v959
        %979 = vmatprep.subr.bf16.mxu0 0
        %980 = vmatpush1.bf16.msra.mxu0 %v958
        %981 = vmatprep.subr.bf16.mxu0 0
        %982 = vmatpush1.bf16.msra.mxu0 %v957
        %983 = vmatprep.subr.bf16.mxu0 0
        %984 = vmatpush1.bf16.msra.mxu0 %v956
        %985 = vmatprep.subr.bf16.mxu0 0
        %986 = vmatpush1.bf16.msra.mxu0 %v955
        %987 = vmatprep.subr.bf16.mxu0 0
        %988 = vmatpush2.bf16.msra.mxu0 0
        %989 = vmatprep.subr.bf16.mxu0 0
        %990 = vmatpush2.bf16.msra.mxu0 0
        %991 = vmatprep.subr.bf16.mxu0 0
        %992 = vmatpush2.bf16.msra.mxu0 0
        %993 = vmatprep.subr.bf16.mxu0 0
        %994 = vmatpush2.bf16.msra.mxu0 0
        %995 = vmatprep.subr.bf16.mxu0 0
        %996 = vmatpush2.bf16.msra.mxu0 0
        %997 = vmatprep.subr.bf16.mxu0 0
        %998 = vmatpush2.bf16.msra.mxu0 0
        %999 = vmatprep.subr.bf16.mxu0 0
        %1000 = vmatpush2.bf16.msra.mxu0 0
        %1001 = vmatprep.subr.bf16.mxu0 0
        %1002 = vmatpush2.bf16.msra.mxu0 0
        %1003 = vmatprep.mubr.bf16.mxu0 0
        %1004 = vmatmul.mubr.bf16.gmra.mxu0 %v859
        %v1005 = vpop.f32.mrf.mxu0
        %v1006 = vadd.f32 0.0, %v1005
        %v1007 = vpop.f32.mrf.mxu0
        %v1008 = vpop.f32.mrf.mxu0
        %v1009 = vadd.f32 0.0, %v1008
        %v1010 = vpop.f32.mrf.mxu0
        %1011 = vmatprep.mubr.bf16.mxu0 0
        %1012 = vmatmul.mubr.bf16.gmra.mxu0 %v860
        %v1013 = vpop.f32.mrf.mxu0
        %v1014 = vadd.f32 0.0, %v1013
        %v1015 = vpop.f32.mrf.mxu0
        %v1016 = vpop.f32.mrf.mxu0
        %v1017 = vadd.f32 0.0, %v1016
        %v1018 = vpop.f32.mrf.mxu0
        %1019 = vmatprep.mubr.bf16.mxu0 0
        %1020 = vmatmul.mubr.bf16.gmra.mxu0 %v861
        %v1021 = vpop.f32.mrf.mxu0
        %v1022 = vadd.f32 0.0, %v1021
        %v1023 = vpop.f32.mrf.mxu0
        %v1024 = vpop.f32.mrf.mxu0
        %v1025 = vadd.f32 0.0, %v1024
        %v1026 = vpop.f32.mrf.mxu0
        %1027 = vmatprep.mubr.bf16.mxu0 0
        %1028 = vmatmul.mubr.bf16.gmra.mxu0 %v862
        %v1029 = vpop.f32.mrf.mxu0
        %v1030 = vadd.f32 0.0, %v1029
        %v1031 = vpop.f32.mrf.mxu0
        %v1032 = vpop.f32.mrf.mxu0
        %v1033 = vadd.f32 0.0, %v1032
        %v1034 = vpop.f32.mrf.mxu0
        %1035 = vmatprep.mubr.bf16.mxu0 0
        %1036 = vmatmul.mubr.bf16.gmra.mxu0 %v863
        %v1037 = vpop.f32.mrf.mxu0
        %v1038 = vadd.f32 0.0, %v1037
        %v1039 = vpop.f32.mrf.mxu0
        %v1040 = vpop.f32.mrf.mxu0
        %v1041 = vadd.f32 0.0, %v1040
        %v1042 = vpop.f32.mrf.mxu0
        %1043 = vmatprep.mubr.bf16.mxu0 0
        %1044 = vmatmul.mubr.bf16.gmra.mxu0 %v864
        %v1045 = vpop.f32.mrf.mxu0
        %v1046 = vadd.f32 0.0, %v1045
        %v1047 = vpop.f32.mrf.mxu0
        %v1048 = vpop.f32.mrf.mxu0
        %v1049 = vadd.f32 0.0, %v1048
        %v1050 = vpop.f32.mrf.mxu0
        %1051 = vmatprep.mubr.bf16.mxu0 0
        %1052 = vmatmul.mubr.bf16.gmra.mxu0 %v865
        %v1053 = vpop.f32.mrf.mxu0
        %v1054 = vadd.f32 0.0, %v1053
        %v1055 = vpop.f32.mrf.mxu0
        %v1056 = vpop.f32.mrf.mxu0
        %v1057 = vadd.f32 0.0, %v1056
        %v1058 = vpop.f32.mrf.mxu0
        %1059 = vmatprep.mubr.bf16.mxu0 0
        %1060 = vmatmul.mubr.bf16.gmra.mxu0 %v866
        %v1061 = vpop.f32.mrf.mxu0
        %v1062 = vadd.f32 0.0, %v1061
        %v1063 = vpop.f32.mrf.mxu0
        %v1064 = vpop.f32.mrf.mxu0
        %v1065 = vadd.f32 0.0, %v1064
        %v1066 = vpop.f32.mrf.mxu0
        %1067 = vmatprep.mubr.bf16.mxu0 0
        %1068 = vmatmul.mubr.bf16.gmra.mxu0 %v867
        %v1069 = vpop.f32.mrf.mxu0
        %v1070 = vadd.f32 0.0, %v1069
        %v1071 = vpop.f32.mrf.mxu0
        %v1072 = vpop.f32.mrf.mxu0
        %v1073 = vadd.f32 0.0, %v1072
        %v1074 = vpop.f32.mrf.mxu0
        %1075 = vmatprep.mubr.bf16.mxu0 0
        %1076 = vmatmul.mubr.bf16.gmra.mxu0 %v868
        %v1077 = vpop.f32.mrf.mxu0
        %v1078 = vadd.f32 0.0, %v1077
        %v1079 = vpop.f32.mrf.mxu0
        %v1080 = vpop.f32.mrf.mxu0
        %v1081 = vadd.f32 0.0, %v1080
        %v1082 = vpop.f32.mrf.mxu0
        %1083 = vmatprep.mubr.bf16.mxu0 0
        %1084 = vmatmul.mubr.bf16.gmra.mxu0 %v869
        %v1085 = vpop.f32.mrf.mxu0
        %v1086 = vadd.f32 0.0, %v1085
        %v1087 = vpop.f32.mrf.mxu0
        %v1088 = vpop.f32.mrf.mxu0
        %v1089 = vadd.f32 0.0, %v1088
        %v1090 = vpop.f32.mrf.mxu0
        %1091 = vmatprep.mubr.bf16.mxu0 0
        %1092 = vmatmul.mubr.bf16.gmra.mxu0 %v870
        %v1093 = vpop.f32.mrf.mxu0
        %v1094 = vadd.f32 0.0, %v1093
        %v1095 = vpop.f32.mrf.mxu0
        %v1096 = vpop.f32.mrf.mxu0
        %v1097 = vadd.f32 0.0, %v1096
        %v1098 = vpop.f32.mrf.mxu0
        %1099 = vmatprep.mubr.bf16.mxu0 0
        %1100 = vmatmul.mubr.bf16.gmra.mxu0 %v871
        %v1101 = vpop.f32.mrf.mxu0
        %v1102 = vadd.f32 0.0, %v1101
        %v1103 = vpop.f32.mrf.mxu0
        %v1104 = vpop.f32.mrf.mxu0
        %v1105 = vadd.f32 0.0, %v1104
        %v1106 = vpop.f32.mrf.mxu0
        %1107 = vmatprep.mubr.bf16.mxu0 0
        %1108 = vmatmul.mubr.bf16.gmra.mxu0 %v872
        %v1109 = vpop.f32.mrf.mxu0
        %v1110 = vadd.f32 0.0, %v1109
        %v1111 = vpop.f32.mrf.mxu0
        %v1112 = vpop.f32.mrf.mxu0
        %v1113 = vadd.f32 0.0, %v1112
        %v1114 = vpop.f32.mrf.mxu0
        %1115 = vmatprep.mubr.bf16.mxu0 0
        %1116 = vmatmul.mubr.bf16.gmra.mxu0 %v873
        %v1117 = vpop.f32.mrf.mxu0
        %v1118 = vadd.f32 0.0, %v1117
        %v1119 = vpop.f32.mrf.mxu0
        %v1120 = vpop.f32.mrf.mxu0
        %v1121 = vadd.f32 0.0, %v1120
        %v1122 = vpop.f32.mrf.mxu0
        %1123 = vmatprep.mubr.bf16.mxu0 0
        %1124 = vmatmul.mubr.bf16.gmra.mxu0 %v874
        %v1125 = vpop.f32.mrf.mxu0
        %v1126 = vadd.f32 0.0, %v1125
        %v1127 = vpop.f32.mrf.mxu0
        %v1128 = vpop.f32.mrf.mxu0
        %v1129 = vadd.f32 0.0, %v1128
        %v1130 = vpop.f32.mrf.mxu0
        %1131 = vmatprep.mubr.bf16.mxu0 0
        %1132 = vmatmul.mubr.bf16.gmra.mxu0 %v875
        %v1133 = vpop.f32.mrf.mxu0
        %v1134 = vadd.f32 0.0, %v1133
        %v1135 = vpop.f32.mrf.mxu0
        %v1136 = vpop.f32.mrf.mxu0
        %v1137 = vadd.f32 0.0, %v1136
        %v1138 = vpop.f32.mrf.mxu0
        %1139 = vmatprep.mubr.bf16.mxu0 0
        %1140 = vmatmul.mubr.bf16.gmra.mxu0 %v876
        %v1141 = vpop.f32.mrf.mxu0
        %v1142 = vadd.f32 0.0, %v1141
        %v1143 = vpop.f32.mrf.mxu0
        %v1144 = vpop.f32.mrf.mxu0
        %v1145 = vadd.f32 0.0, %v1144
        %v1146 = vpop.f32.mrf.mxu0
        %1147 = vmatprep.mubr.bf16.mxu0 0
        %1148 = vmatmul.mubr.bf16.gmra.mxu0 %v877
        %v1149 = vpop.f32.mrf.mxu0
        %v1150 = vadd.f32 0.0, %v1149
        %v1151 = vpop.f32.mrf.mxu0
        %v1152 = vpop.f32.mrf.mxu0
        %v1153 = vadd.f32 0.0, %v1152
        %v1154 = vpop.f32.mrf.mxu0
        %1155 = vmatprep.mubr.bf16.mxu0 0
        %1156 = vmatmul.mubr.bf16.gmra.mxu0 %v878
        %v1157 = vpop.f32.mrf.mxu0
        %v1158 = vadd.f32 0.0, %v1157
        %v1159 = vpop.f32.mrf.mxu0
        %v1160 = vpop.f32.mrf.mxu0
        %v1161 = vadd.f32 0.0, %v1160
        %v1162 = vpop.f32.mrf.mxu0
        %1163 = vmatprep.mubr.bf16.mxu0 0
        %1164 = vmatmul.mubr.bf16.gmra.mxu0 %v879
        %v1165 = vpop.f32.mrf.mxu0
        %v1166 = vadd.f32 0.0, %v1165
        %v1167 = vpop.f32.mrf.mxu0
        %v1168 = vpop.f32.mrf.mxu0
        %v1169 = vadd.f32 0.0, %v1168
        %v1170 = vpop.f32.mrf.mxu0
        %1171 = vmatprep.mubr.bf16.mxu0 0
        %1172 = vmatmul.mubr.bf16.gmra.mxu0 %v880
        %v1173 = vpop.f32.mrf.mxu0
        %v1174 = vadd.f32 0.0, %v1173
        %v1175 = vpop.f32.mrf.mxu0
        %v1176 = vpop.f32.mrf.mxu0
        %v1177 = vadd.f32 0.0, %v1176
        %v1178 = vpop.f32.mrf.mxu0
        %1179 = vmatprep.mubr.bf16.mxu0 0
        %1180 = vmatmul.mubr.bf16.gmra.mxu0 %v881
        %v1181 = vpop.f32.mrf.mxu0
        %v1182 = vadd.f32 0.0, %v1181
        %v1183 = vpop.f32.mrf.mxu0
        %v1184 = vpop.f32.mrf.mxu0
        %v1185 = vadd.f32 0.0, %v1184
        %v1186 = vpop.f32.mrf.mxu0
        %1187 = vmatprep.mubr.bf16.mxu0 0
        %1188 = vmatmul.mubr.bf16.gmra.mxu0 %v882
        %v1189 = vpop.f32.mrf.mxu0
        %v1190 = vadd.f32 0.0, %v1189
        %v1191 = vpop.f32.mrf.mxu0
        %v1192 = vpop.f32.mrf.mxu0
        %v1193 = vadd.f32 0.0, %v1192
        %v1194 = vpop.f32.mrf.mxu0
        %1195 = vmatprep.mubr.bf16.mxu0 0
        %1196 = vmatmul.mubr.bf16.gmra.mxu0 %v883
        %v1197 = vpop.f32.mrf.mxu0
        %v1198 = vadd.f32 0.0, %v1197
        %v1199 = vpop.f32.mrf.mxu0
        %v1200 = vpop.f32.mrf.mxu0
        %v1201 = vadd.f32 0.0, %v1200
        %v1202 = vpop.f32.mrf.mxu0
        %1203 = vmatprep.mubr.bf16.mxu0 0
        %1204 = vmatmul.mubr.bf16.gmra.mxu0 %v884
        %v1205 = vpop.f32.mrf.mxu0
        %v1206 = vadd.f32 0.0, %v1205
        %v1207 = vpop.f32.mrf.mxu0
        %v1208 = vpop.f32.mrf.mxu0
        %v1209 = vadd.f32 0.0, %v1208
        %v1210 = vpop.f32.mrf.mxu0
        %1211 = vmatprep.mubr.bf16.mxu0 0
        %1212 = vmatmul.mubr.bf16.gmra.mxu0 %v885
        %v1213 = vpop.f32.mrf.mxu0
        %v1214 = vadd.f32 0.0, %v1213
        %v1215 = vpop.f32.mrf.mxu0
        %v1216 = vpop.f32.mrf.mxu0
        %v1217 = vadd.f32 0.0, %v1216
        %v1218 = vpop.f32.mrf.mxu0
        %1219 = vmatprep.mubr.bf16.mxu0 0
        %1220 = vmatmul.mubr.bf16.gmra.mxu0 %v886
        %v1221 = vpop.f32.mrf.mxu0
        %v1222 = vadd.f32 0.0, %v1221
        %v1223 = vpop.f32.mrf.mxu0
        %v1224 = vpop.f32.mrf.mxu0
        %v1225 = vadd.f32 0.0, %v1224
        %v1226 = vpop.f32.mrf.mxu0
        %1227 = vmatprep.mubr.bf16.mxu0 0
        %1228 = vmatmul.mubr.bf16.gmra.mxu0 %v887
        %v1229 = vpop.f32.mrf.mxu0
        %v1230 = vadd.f32 0.0, %v1229
        %v1231 = vpop.f32.mrf.mxu0
        %v1232 = vpop.f32.mrf.mxu0
        %v1233 = vadd.f32 0.0, %v1232
        %v1234 = vpop.f32.mrf.mxu0
        %1235 = vmatprep.mubr.bf16.mxu0 0
        %1236 = vmatmul.mubr.bf16.gmra.mxu0 %v888
        %v1237 = vpop.f32.mrf.mxu0
        %v1238 = vadd.f32 0.0, %v1237
        %v1239 = vpop.f32.mrf.mxu0
        %v1240 = vpop.f32.mrf.mxu0
        %v1241 = vadd.f32 0.0, %v1240
        %v1242 = vpop.f32.mrf.mxu0
        %1243 = vmatprep.mubr.bf16.mxu0 0
        %1244 = vmatmul.mubr.bf16.gmra.mxu0 %v889
        %v1245 = vpop.f32.mrf.mxu0
        %v1246 = vadd.f32 0.0, %v1245
        %v1247 = vpop.f32.mrf.mxu0
        %v1248 = vpop.f32.mrf.mxu0
        %v1249 = vadd.f32 0.0, %v1248
        %v1250 = vpop.f32.mrf.mxu0
        %1251 = vmatprep.mubr.bf16.mxu0 0
        %1252 = vmatmul.mubr.bf16.gmra.mxu0 %v890
        %v1253 = vpop.f32.mrf.mxu0
        %v1254 = vadd.f32 0.0, %v1253
        %v1255 = vpop.f32.mrf.mxu0
        %v1256 = vpop.f32.mrf.mxu0
        %v1257 = vadd.f32 0.0, %v1256
        %v1258 = vpop.f32.mrf.mxu0
        %1259 = vdwg.mxu0
        %v1260 = vadd.f32 %v587, %v1006
        %v1261 = vadd.f32 %v588, %v1009
        %v1262 = vadd.f32 %v589, %v1014
        %v1263 = vadd.f32 %v590, %v1017
        %v1264 = vadd.f32 %v591, %v1022
        %v1265 = vadd.f32 %v592, %v1025
        %v1266 = vadd.f32 %v593, %v1030
        %v1267 = vadd.f32 %v594, %v1033
        %v1268 = vadd.f32 %v595, %v1038
        %v1269 = vadd.f32 %v596, %v1041
        %v1270 = vadd.f32 %v597, %v1046
        %v1271 = vadd.f32 %v598, %v1049
        %v1272 = vadd.f32 %v599, %v1054
        %v1273 = vadd.f32 %v600, %v1057
        %v1274 = vadd.f32 %v601, %v1062
        %v1275 = vadd.f32 %v602, %v1065
        %v1276 = vadd.f32 %v603, %v1070
        %v1277 = vadd.f32 %v604, %v1073
        %v1278 = vadd.f32 %v605, %v1078
        %v1279 = vadd.f32 %v606, %v1081
        %v1280 = vadd.f32 %v607, %v1086
        %v1281 = vadd.f32 %v608, %v1089
        %v1282 = vadd.f32 %v609, %v1094
        %v1283 = vadd.f32 %v610, %v1097
        %v1284 = vadd.f32 %v611, %v1102
        %v1285 = vadd.f32 %v612, %v1105
        %v1286 = vadd.f32 %v613, %v1110
        %v1287 = vadd.f32 %v614, %v1113
        %v1288 = vadd.f32 %v615, %v1118
        %v1289 = vadd.f32 %v616, %v1121
        %v1290 = vadd.f32 %v617, %v1126
        %v1291 = vadd.f32 %v618, %v1129
        %v1292 = vadd.f32 %v619, %v1134
        %v1293 = vadd.f32 %v620, %v1137
        %v1294 = vadd.f32 %v621, %v1142
        %v1295 = vadd.f32 %v622, %v1145
        %v1296 = vadd.f32 %v623, %v1150
        %v1297 = vadd.f32 %v624, %v1153
        %v1298 = vadd.f32 %v625, %v1158
        %v1299 = vadd.f32 %v626, %v1161
        %v1300 = vadd.f32 %v627, %v1166
        %v1301 = vadd.f32 %v628, %v1169
        %v1302 = vadd.f32 %v629, %v1174
        %v1303 = vadd.f32 %v630, %v1177
        %v1304 = vadd.f32 %v631, %v1182
        %v1305 = vadd.f32 %v632, %v1185
        %v1306 = vadd.f32 %v633, %v1190
        %v1307 = vadd.f32 %v634, %v1193
        %v1308 = vadd.f32 %v635, %v1198
        %v1309 = vadd.f32 %v636, %v1201
        %v1310 = vadd.f32 %v637, %v1206
        %v1311 = vadd.f32 %v638, %v1209
        %v1312 = vadd.f32 %v639, %v1214
        %v1313 = vadd.f32 %v640, %v1217
        %v1314 = vadd.f32 %v641, %v1222
        %v1315 = vadd.f32 %v642, %v1225
        %v1316 = vadd.f32 %v643, %v1230
        %v1317 = vadd.f32 %v644, %v1233
        %v1318 = vadd.f32 %v645, %v1238
        %v1319 = vadd.f32 %v646, %v1241
        %v1320 = vadd.f32 %v647, %v1246
        %v1321 = vadd.f32 %v648, %v1249
        %v1322 = vadd.f32 %v649, %v1254
        %v1323 = vadd.f32 %v650, %v1257
        %1324 = vst [vmem:[#allocation2] sm:$0xff] %v1260
        %1325 = vst [vmem:[#allocation2 + $0x8] sm:$0xff] %v1261
        %1326 = vst [vmem:[#allocation2 + $0x10] sm:$0xff] %v1262
        %1327 = vst [vmem:[#allocation2 + $0x18] sm:$0xff] %v1263
        %1328 = vst [vmem:[#allocation2 + $0x20] sm:$0xff] %v1264
        %1329 = vst [vmem:[#allocation2 + $0x28] sm:$0xff] %v1265
        %1330 = vst [vmem:[#allocation2 + $0x30] sm:$0xff] %v1266
        %1331 = vst [vmem:[#allocation2 + $0x38] sm:$0xff] %v1267
        %1332 = vst [vmem:[#allocation2 + $0x40] sm:$0xff] %v1268
        %1333 = vst [vmem:[#allocation2 + $0x48] sm:$0xff] %v1269
        %1334 = vst [vmem:[#allocation2 + $0x50] sm:$0xff] %v1270
        %1335 = vst [vmem:[#allocation2 + $0x58] sm:$0xff] %v1271
        %1336 = vst [vmem:[#allocation2 + $0x60] sm:$0xff] %v1272
        %1337 = vst [vmem:[#allocation2 + $0x68] sm:$0xff] %v1273
        %1338 = vst [vmem:[#allocation2 + $0x70] sm:$0xff] %v1274
        %1339 = vst [vmem:[#allocation2 + $0x78] sm:$0xff] %v1275
        %1340 = vst [vmem:[#allocation2 + $0x80] sm:$0xff] %v1276
        %1341 = vst [vmem:[#allocation2 + $0x88] sm:$0xff] %v1277
        %1342 = vst [vmem:[#allocation2 + $0x90] sm:$0xff] %v1278
        %1343 = vst [vmem:[#allocation2 + $0x98] sm:$0xff] %v1279
        %1344 = vst [vmem:[#allocation2 + $0xa0] sm:$0xff] %v1280
        %1345 = vst [vmem:[#allocation2 + $0xa8] sm:$0xff] %v1281
        %1346 = vst [vmem:[#allocation2 + $0xb0] sm:$0xff] %v1282
        %1347 = vst [vmem:[#allocation2 + $0xb8] sm:$0xff] %v1283
        %1348 = vst [vmem:[#allocation2 + $0xc0] sm:$0xff] %v1284
        %1349 = vst [vmem:[#allocation2 + $0xc8] sm:$0xff] %v1285
        %1350 = vst [vmem:[#allocation2 + $0xd0] sm:$0xff] %v1286
        %1351 = vst [vmem:[#allocation2 + $0xd8] sm:$0xff] %v1287
        %1352 = vst [vmem:[#allocation2 + $0xe0] sm:$0xff] %v1288
        %1353 = vst [vmem:[#allocation2 + $0xe8] sm:$0xff] %v1289
        %1354 = vst [vmem:[#allocation2 + $0xf0] sm:$0xff] %v1290
        %1355 = vst [vmem:[#allocation2 + $0xf8] sm:$0xff] %v1291
        %1356 = vst [vmem:[#allocation2 + $0x100] sm:$0xff] %v1292
        %1357 = vst [vmem:[#allocation2 + $0x108] sm:$0xff] %v1293
        %1358 = vst [vmem:[#allocation2 + $0x110] sm:$0xff] %v1294
        %1359 = vst [vmem:[#allocation2 + $0x118] sm:$0xff] %v1295
        %1360 = vst [vmem:[#allocation2 + $0x120] sm:$0xff] %v1296
        %1361 = vst [vmem:[#allocation2 + $0x128] sm:$0xff] %v1297
        %1362 = vst [vmem:[#allocation2 + $0x130] sm:$0xff] %v1298
        %1363 = vst [vmem:[#allocation2 + $0x138] sm:$0xff] %v1299
        %1364 = vst [vmem:[#allocation2 + $0x140] sm:$0xff] %v1300
        %1365 = vst [vmem:[#allocation2 + $0x148] sm:$0xff] %v1301
        %1366 = vst [vmem:[#allocation2 + $0x150] sm:$0xff] %v1302
        %1367 = vst [vmem:[#allocation2 + $0x158] sm:$0xff] %v1303
        %1368 = vst [vmem:[#allocation2 + $0x160] sm:$0xff] %v1304
        %1369 = vst [vmem:[#allocation2 + $0x168] sm:$0xff] %v1305
        %1370 = vst [vmem:[#allocation2 + $0x170] sm:$0xff] %v1306
        %1371 = vst [vmem:[#allocation2 + $0x178] sm:$0xff] %v1307
        %1372 = vst [vmem:[#allocation2 + $0x180] sm:$0xff] %v1308
        %1373 = vst [vmem:[#allocation2 + $0x188] sm:$0xff] %v1309
        %1374 = vst [vmem:[#allocation2 + $0x190] sm:$0xff] %v1310
        %1375 = vst [vmem:[#allocation2 + $0x198] sm:$0xff] %v1311
        %1376 = vst [vmem:[#allocation2 + $0x1a0] sm:$0xff] %v1312
        %1377 = vst [vmem:[#allocation2 + $0x1a8] sm:$0xff] %v1313
        %1378 = vst [vmem:[#allocation2 + $0x1b0] sm:$0xff] %v1314
        %1379 = vst [vmem:[#allocation2 + $0x1b8] sm:$0xff] %v1315
        %1380 = vst [vmem:[#allocation2 + $0x1c0] sm:$0xff] %v1316
        %1381 = vst [vmem:[#allocation2 + $0x1c8] sm:$0xff] %v1317
        %1382 = vst [vmem:[#allocation2 + $0x1d0] sm:$0xff] %v1318
        %1383 = vst [vmem:[#allocation2 + $0x1d8] sm:$0xff] %v1319
        %1384 = vst [vmem:[#allocation2 + $0x1e0] sm:$0xff] %v1320
        %1385 = vst [vmem:[#allocation2 + $0x1e8] sm:$0xff] %v1321
        %1386 = vst [vmem:[#allocation2 + $0x1f0] sm:$0xff] %v1322
        %1387 = vst [vmem:[#allocation2 + $0x1f8] sm:$0xff] %v1323
        %p1388 = scmp.eq.s32.totalorder %s20, 1
        // Predicated region
        $region74: #{up_forward.4} parent=64 // pred_check
          %p1389 = pneg %p1388
        $region75: #{up_forward.4} parent=64 // pred_check_branch
          %1391 = sbr.rel (%p1389) target = $region77
        $region76: #{up_forward.4} parent=64 // pred_region
          %v1392 = vld [vmem:[#allocation2] sm:$0xff]
          %v1393 = vld [vmem:[#allocation2 + $0x8] sm:$0xff]
          %v1394 = vld [vmem:[#allocation2 + $0x10] sm:$0xff]
          %v1395 = vld [vmem:[#allocation2 + $0x18] sm:$0xff]
          %v1396 = vld [vmem:[#allocation2 + $0x20] sm:$0xff]
          %v1397 = vld [vmem:[#allocation2 + $0x28] sm:$0xff]
          %v1398 = vld [vmem:[#allocation2 + $0x30] sm:$0xff]
          %v1399 = vld [vmem:[#allocation2 + $0x38] sm:$0xff]
          %v1400 = vld [vmem:[#allocation2 + $0x40] sm:$0xff]
          %v1401 = vld [vmem:[#allocation2 + $0x48] sm:$0xff]
          %v1402 = vld [vmem:[#allocation2 + $0x50] sm:$0xff]
          %v1403 = vld [vmem:[#allocation2 + $0x58] sm:$0xff]
          %v1404 = vld [vmem:[#allocation2 + $0x60] sm:$0xff]
          %v1405 = vld [vmem:[#allocation2 + $0x68] sm:$0xff]
          %v1406 = vld [vmem:[#allocation2 + $0x70] sm:$0xff]
          %v1407 = vld [vmem:[#allocation2 + $0x78] sm:$0xff]
          %v1408 = vld [vmem:[#allocation2 + $0x80] sm:$0xff]
          %v1409 = vld [vmem:[#allocation2 + $0x88] sm:$0xff]
          %v1410 = vld [vmem:[#allocation2 + $0x90] sm:$0xff]
          %v1411 = vld [vmem:[#allocation2 + $0x98] sm:$0xff]
          %v1412 = vld [vmem:[#allocation2 + $0xa0] sm:$0xff]
          %v1413 = vld [vmem:[#allocation2 + $0xa8] sm:$0xff]
          %v1414 = vld [vmem:[#allocation2 + $0xb0] sm:$0xff]
          %v1415 = vld [vmem:[#allocation2 + $0xb8] sm:$0xff]
          %v1416 = vld [vmem:[#allocation2 + $0xc0] sm:$0xff]
          %v1417 = vld [vmem:[#allocation2 + $0xc8] sm:$0xff]
          %v1418 = vld [vmem:[#allocation2 + $0xd0] sm:$0xff]
          %v1419 = vld [vmem:[#allocation2 + $0xd8] sm:$0xff]
          %v1420 = vld [vmem:[#allocation2 + $0xe0] sm:$0xff]
          %v1421 = vld [vmem:[#allocation2 + $0xe8] sm:$0xff]
          %v1422 = vld [vmem:[#allocation2 + $0xf0] sm:$0xff]
          %v1423 = vld [vmem:[#allocation2 + $0xf8] sm:$0xff]
          %v1424 = vld [vmem:[#allocation2 + $0x100] sm:$0xff]
          %v1425 = vld [vmem:[#allocation2 + $0x108] sm:$0xff]
          %v1426 = vld [vmem:[#allocation2 + $0x110] sm:$0xff]
          %v1427 = vld [vmem:[#allocation2 + $0x118] sm:$0xff]
          %v1428 = vld [vmem:[#allocation2 + $0x120] sm:$0xff]
          %v1429 = vld [vmem:[#allocation2 + $0x128] sm:$0xff]
          %v1430 = vld [vmem:[#allocation2 + $0x130] sm:$0xff]
          %v1431 = vld [vmem:[#allocation2 + $0x138] sm:$0xff]
          %v1432 = vld [vmem:[#allocation2 + $0x140] sm:$0xff]
          %v1433 = vld [vmem:[#allocation2 + $0x148] sm:$0xff]
          %v1434 = vld [vmem:[#allocation2 + $0x150] sm:$0xff]
          %v1435 = vld [vmem:[#allocation2 + $0x158] sm:$0xff]
          %v1436 = vld [vmem:[#allocation2 + $0x160] sm:$0xff]
          %v1437 = vld [vmem:[#allocation2 + $0x168] sm:$0xff]
          %v1438 = vld [vmem:[#allocation2 + $0x170] sm:$0xff]
          %v1439 = vld [vmem:[#allocation2 + $0x178] sm:$0xff]
          %v1440 = vld [vmem:[#allocation2 + $0x180] sm:$0xff]
          %v1441 = vld [vmem:[#allocation2 + $0x188] sm:$0xff]
          %v1442 = vld [vmem:[#allocation2 + $0x190] sm:$0xff]
          %v1443 = vld [vmem:[#allocation2 + $0x198] sm:$0xff]
          %v1444 = vld [vmem:[#allocation2 + $0x1a0] sm:$0xff]
          %v1445 = vld [vmem:[#allocation2 + $0x1a8] sm:$0xff]
          %v1446 = vld [vmem:[#allocation2 + $0x1b0] sm:$0xff]
          %v1447 = vld [vmem:[#allocation2 + $0x1b8] sm:$0xff]
          %v1448 = vld [vmem:[#allocation2 + $0x1c0] sm:$0xff]
          %v1449 = vld [vmem:[#allocation2 + $0x1c8] sm:$0xff]
          %v1450 = vld [vmem:[#allocation2 + $0x1d0] sm:$0xff]
          %v1451 = vld [vmem:[#allocation2 + $0x1d8] sm:$0xff]
          %v1452 = vld [vmem:[#allocation2 + $0x1e0] sm:$0xff]
          %v1453 = vld [vmem:[#allocation2 + $0x1e8] sm:$0xff]
          %v1454 = vld [vmem:[#allocation2 + $0x1f0] sm:$0xff]
          %v1455 = vld [vmem:[#allocation2 + $0x1f8] sm:$0xff]
          %1456 = vst [vmem:[%s512] sm:$0xff] %v1392
          %1457 = vst [vmem:[%s512 + $0x8] sm:$0xff] %v1393
          %1458 = vst [vmem:[%s512 + $0x10] sm:$0xff] %v1394
          %1459 = vst [vmem:[%s512 + $0x18] sm:$0xff] %v1395
          %1460 = vst [vmem:[%s512 + $0x20] sm:$0xff] %v1396
          %1461 = vst [vmem:[%s512 + $0x28] sm:$0xff] %v1397
          %1462 = vst [vmem:[%s512 + $0x30] sm:$0xff] %v1398
          %1463 = vst [vmem:[%s512 + $0x38] sm:$0xff] %v1399
          %1464 = vst [vmem:[%s512 + $0x40] sm:$0xff] %v1400
          %1465 = vst [vmem:[%s512 + $0x48] sm:$0xff] %v1401
          %1466 = vst [vmem:[%s512 + $0x50] sm:$0xff] %v1402
          %1467 = vst [vmem:[%s512 + $0x58] sm:$0xff] %v1403
          %1468 = vst [vmem:[%s512 + $0x60] sm:$0xff] %v1404
          %1469 = vst [vmem:[%s512 + $0x68] sm:$0xff] %v1405
          %1470 = vst [vmem:[%s512 + $0x70] sm:$0xff] %v1406
          %1471 = vst [vmem:[%s512 + $0x78] sm:$0xff] %v1407
          %1472 = vst [vmem:[%s512 + $0x80] sm:$0xff] %v1408
          %1473 = vst [vmem:[%s512 + $0x88] sm:$0xff] %v1409
          %1474 = vst [vmem:[%s512 + $0x90] sm:$0xff] %v1410
          %1475 = vst [vmem:[%s512 + $0x98] sm:$0xff] %v1411
          %1476 = vst [vmem:[%s512 + $0xa0] sm:$0xff] %v1412
          %1477 = vst [vmem:[%s512 + $0xa8] sm:$0xff] %v1413
          %1478 = vst [vmem:[%s512 + $0xb0] sm:$0xff] %v1414
          %1479 = vst [vmem:[%s512 + $0xb8] sm:$0xff] %v1415
          %1480 = vst [vmem:[%s512 + $0xc0] sm:$0xff] %v1416
          %1481 = vst [vmem:[%s512 + $0xc8] sm:$0xff] %v1417
          %1482 = vst [vmem:[%s512 + $0xd0] sm:$0xff] %v1418
          %1483 = vst [vmem:[%s512 + $0xd8] sm:$0xff] %v1419
          %1484 = vst [vmem:[%s512 + $0xe0] sm:$0xff] %v1420
          %1485 = vst [vmem:[%s512 + $0xe8] sm:$0xff] %v1421
          %1486 = vst [vmem:[%s512 + $0xf0] sm:$0xff] %v1422
          %1487 = vst [vmem:[%s512 + $0xf8] sm:$0xff] %v1423
          %1488 = vst [vmem:[%s512 + $0x100] sm:$0xff] %v1424
          %1489 = vst [vmem:[%s512 + $0x108] sm:$0xff] %v1425
          %1490 = vst [vmem:[%s512 + $0x110] sm:$0xff] %v1426
          %1491 = vst [vmem:[%s512 + $0x118] sm:$0xff] %v1427
          %1492 = vst [vmem:[%s512 + $0x120] sm:$0xff] %v1428
          %1493 = vst [vmem:[%s512 + $0x128] sm:$0xff] %v1429
          %1494 = vst [vmem:[%s512 + $0x130] sm:$0xff] %v1430
          %1495 = vst [vmem:[%s512 + $0x138] sm:$0xff] %v1431
          %1496 = vst [vmem:[%s512 + $0x140] sm:$0xff] %v1432
          %1497 = vst [vmem:[%s512 + $0x148] sm:$0xff] %v1433
          %1498 = vst [vmem:[%s512 + $0x150] sm:$0xff] %v1434
          %1499 = vst [vmem:[%s512 + $0x158] sm:$0xff] %v1435
          %1500 = vst [vmem:[%s512 + $0x160] sm:$0xff] %v1436
          %1501 = vst [vmem:[%s512 + $0x168] sm:$0xff] %v1437
          %1502 = vst [vmem:[%s512 + $0x170] sm:$0xff] %v1438
          %1503 = vst [vmem:[%s512 + $0x178] sm:$0xff] %v1439
          %1504 = vst [vmem:[%s512 + $0x180] sm:$0xff] %v1440
          %1505 = vst [vmem:[%s512 + $0x188] sm:$0xff] %v1441
          %1506 = vst [vmem:[%s512 + $0x190] sm:$0xff] %v1442
          %1507 = vst [vmem:[%s512 + $0x198] sm:$0xff] %v1443
          %1508 = vst [vmem:[%s512 + $0x1a0] sm:$0xff] %v1444
          %1509 = vst [vmem:[%s512 + $0x1a8] sm:$0xff] %v1445
          %1510 = vst [vmem:[%s512 + $0x1b0] sm:$0xff] %v1446
          %1511 = vst [vmem:[%s512 + $0x1b8] sm:$0xff] %v1447
          %1512 = vst [vmem:[%s512 + $0x1c0] sm:$0xff] %v1448
          %1513 = vst [vmem:[%s512 + $0x1c8] sm:$0xff] %v1449
          %1514 = vst [vmem:[%s512 + $0x1d0] sm:$0xff] %v1450
          %1515 = vst [vmem:[%s512 + $0x1d8] sm:$0xff] %v1451
          %1516 = vst [vmem:[%s512 + $0x1e0] sm:$0xff] %v1452
          %1517 = vst [vmem:[%s512 + $0x1e8] sm:$0xff] %v1453
          %1518 = vst [vmem:[%s512 + $0x1f0] sm:$0xff] %v1454
          %1519 = vst [vmem:[%s512 + $0x1f8] sm:$0xff] %v1455
          %v1520 = vadd.f32 %v1392, %v1393
          %v1521 = vadd.f32 %v1520, %v1394
          %v1522 = vadd.f32 %v1521, %v1395
          %v1523 = vadd.f32 %v1522, %v1396
          %v1524 = vadd.f32 %v1523, %v1397
          %v1525 = vadd.f32 %v1524, %v1398
          %v1526 = vadd.f32 %v1525, %v1399
          %v1527 = vadd.f32 %v1526, %v1400
          %v1528 = vadd.f32 %v1527, %v1401
          %v1529 = vadd.f32 %v1528, %v1402
          %v1530 = vadd.f32 %v1529, %v1403
          %v1531 = vadd.f32 %v1530, %v1404
          %v1532 = vadd.f32 %v1531, %v1405
          %v1533 = vadd.f32 %v1532, %v1406
          %v1534 = vadd.f32 %v1533, %v1407
          %v1535 = vadd.f32 %v1534, %v1408
          %v1536 = vadd.f32 %v1535, %v1409
          %v1537 = vadd.f32 %v1536, %v1410
          %v1538 = vadd.f32 %v1537, %v1411
          %v1539 = vadd.f32 %v1538, %v1412
          %v1540 = vadd.f32 %v1539, %v1413
          %v1541 = vadd.f32 %v1540, %v1414
          %v1542 = vadd.f32 %v1541, %v1415
          %v1543 = vadd.f32 %v1542, %v1416
          %v1544 = vadd.f32 %v1543, %v1417
          %v1545 = vadd.f32 %v1544, %v1418
          %v1546 = vadd.f32 %v1545, %v1419
          %v1547 = vadd.f32 %v1546, %v1420
          %v1548 = vadd.f32 %v1547, %v1421
          %v1549 = vadd.f32 %v1548, %v1422
          %v1550 = vadd.f32 %v1549, %v1423
          %v1551 = vadd.f32 %v1550, %v1424
          %v1552 = vadd.f32 %v1551, %v1425
          %v1553 = vadd.f32 %v1552, %v1426
          %v1554 = vadd.f32 %v1553, %v1427
          %v1555 = vadd.f32 %v1554, %v1428
          %v1556 = vadd.f32 %v1555, %v1429
          %v1557 = vadd.f32 %v1556, %v1430
          %v1558 = vadd.f32 %v1557, %v1431
          %v1559 = vadd.f32 %v1558, %v1432
          %v1560 = vadd.f32 %v1559, %v1433
          %v1561 = vadd.f32 %v1560, %v1434
          %v1562 = vadd.f32 %v1561, %v1435
          %v1563 = vadd.f32 %v1562, %v1436
          %v1564 = vadd.f32 %v1563, %v1437
          %v1565 = vadd.f32 %v1564, %v1438
          %v1566 = vadd.f32 %v1565, %v1439
          %v1567 = vadd.f32 %v1566, %v1440
          %v1568 = vadd.f32 %v1567, %v1441
          %v1569 = vadd.f32 %v1568, %v1442
          %v1570 = vadd.f32 %v1569, %v1443
          %v1571 = vadd.f32 %v1570, %v1444
          %v1572 = vadd.f32 %v1571, %v1445
          %v1573 = vadd.f32 %v1572, %v1446
          %v1574 = vadd.f32 %v1573, %v1447
          %v1575 = vadd.f32 %v1574, %v1448
          %v1576 = vadd.f32 %v1575, %v1449
          %v1577 = vadd.f32 %v1576, %v1450
          %v1578 = vadd.f32 %v1577, %v1451
          %v1579 = vadd.f32 %v1578, %v1452
          %v1580 = vadd.f32 %v1579, %v1453
          %v1581 = vadd.f32 %v1580, %v1454
          %v1582 = vadd.f32 %v1581, %v1455
          %v1583 = vrot.slane %v1582, 4
          %v1584 = vadd.f32 %v1582, %v1583
          %v1585 = vrot.slane %v1584, 2
          %v1586 = vadd.f32 %v1584, %v1585
          %v1587 = vrot.slane %v1586, 1
          %v1588 = vadd.f32 %v1586, %v1587
          %v1589 = vmul.f32 %v1392, %v1392
          %v1590 = vmul.f32 %v1393, %v1393
          %v1591 = vmul.f32 %v1394, %v1394
          %v1592 = vmul.f32 %v1395, %v1395
          %v1593 = vmul.f32 %v1396, %v1396
          %v1594 = vmul.f32 %v1397, %v1397
          %v1595 = vmul.f32 %v1398, %v1398
          %v1596 = vmul.f32 %v1399, %v1399
          %v1597 = vmul.f32 %v1400, %v1400
          %v1598 = vmul.f32 %v1401, %v1401
          %v1599 = vmul.f32 %v1402, %v1402
          %v1600 = vmul.f32 %v1403, %v1403
          %v1601 = vmul.f32 %v1404, %v1404
          %v1602 = vmul.f32 %v1405, %v1405
          %v1603 = vmul.f32 %v1406, %v1406
          %v1604 = vmul.f32 %v1407, %v1407
          %v1605 = vmul.f32 %v1408, %v1408
          %v1606 = vmul.f32 %v1409, %v1409
          %v1607 = vmul.f32 %v1410, %v1410
          %v1608 = vmul.f32 %v1411, %v1411
          %v1609 = vmul.f32 %v1412, %v1412
          %v1610 = vmul.f32 %v1413, %v1413
          %v1611 = vmul.f32 %v1414, %v1414
          %v1612 = vmul.f32 %v1415, %v1415
          %v1613 = vmul.f32 %v1416, %v1416
          %v1614 = vmul.f32 %v1417, %v1417
          %v1615 = vmul.f32 %v1418, %v1418
          %v1616 = vmul.f32 %v1419, %v1419
          %v1617 = vmul.f32 %v1420, %v1420
          %v1618 = vmul.f32 %v1421, %v1421
          %v1619 = vmul.f32 %v1422, %v1422
          %v1620 = vmul.f32 %v1423, %v1423
          %v1621 = vmul.f32 %v1424, %v1424
          %v1622 = vmul.f32 %v1425, %v1425
          %v1623 = vmul.f32 %v1426, %v1426
          %v1624 = vmul.f32 %v1427, %v1427
          %v1625 = vmul.f32 %v1428, %v1428
          %v1626 = vmul.f32 %v1429, %v1429
          %v1627 = vmul.f32 %v1430, %v1430
          %v1628 = vmul.f32 %v1431, %v1431
          %v1629 = vmul.f32 %v1432, %v1432
          %v1630 = vmul.f32 %v1433, %v1433
          %v1631 = vmul.f32 %v1434, %v1434
          %v1632 = vmul.f32 %v1435, %v1435
          %v1633 = vmul.f32 %v1436, %v1436
          %v1634 = vmul.f32 %v1437, %v1437
          %v1635 = vmul.f32 %v1438, %v1438
          %v1636 = vmul.f32 %v1439, %v1439
          %v1637 = vmul.f32 %v1440, %v1440
          %v1638 = vmul.f32 %v1441, %v1441
          %v1639 = vmul.f32 %v1442, %v1442
          %v1640 = vmul.f32 %v1443, %v1443
          %v1641 = vmul.f32 %v1444, %v1444
          %v1642 = vmul.f32 %v1445, %v1445
          %v1643 = vmul.f32 %v1446, %v1446
          %v1644 = vmul.f32 %v1447, %v1447
          %v1645 = vmul.f32 %v1448, %v1448
          %v1646 = vmul.f32 %v1449, %v1449
          %v1647 = vmul.f32 %v1450, %v1450
          %v1648 = vmul.f32 %v1451, %v1451
          %v1649 = vmul.f32 %v1452, %v1452
          %v1650 = vmul.f32 %v1453, %v1453
          %v1651 = vmul.f32 %v1454, %v1454
          %v1652 = vmul.f32 %v1455, %v1455
          %v1653 = vadd.f32 %v1589, %v1590
          %v1654 = vadd.f32 %v1653, %v1591
          %v1655 = vadd.f32 %v1654, %v1592
          %v1656 = vadd.f32 %v1655, %v1593
          %v1657 = vadd.f32 %v1656, %v1594
          %v1658 = vadd.f32 %v1657, %v1595
          %v1659 = vadd.f32 %v1658, %v1596
          %v1660 = vadd.f32 %v1659, %v1597
          %v1661 = vadd.f32 %v1660, %v1598
          %v1662 = vadd.f32 %v1661, %v1599
          %v1663 = vadd.f32 %v1662, %v1600
          %v1664 = vadd.f32 %v1663, %v1601
          %v1665 = vadd.f32 %v1664, %v1602
          %v1666 = vadd.f32 %v1665, %v1603
          %v1667 = vadd.f32 %v1666, %v1604
          %v1668 = vadd.f32 %v1667, %v1605
          %v1669 = vadd.f32 %v1668, %v1606
          %v1670 = vadd.f32 %v1669, %v1607
          %v1671 = vadd.f32 %v1670, %v1608
          %v1672 = vadd.f32 %v1671, %v1609
          %v1673 = vadd.f32 %v1672, %v1610
          %v1674 = vadd.f32 %v1673, %v1611
          %v1675 = vadd.f32 %v1674, %v1612
          %v1676 = vadd.f32 %v1675, %v1613
          %v1677 = vadd.f32 %v1676, %v1614
          %v1678 = vadd.f32 %v1677, %v1615
          %v1679 = vadd.f32 %v1678, %v1616
          %v1680 = vadd.f32 %v1679, %v1617
          %v1681 = vadd.f32 %v1680, %v1618
          %v1682 = vadd.f32 %v1681, %v1619
          %v1683 = vadd.f32 %v1682, %v1620
          %v1684 = vadd.f32 %v1683, %v1621
          %v1685 = vadd.f32 %v1684, %v1622
          %v1686 = vadd.f32 %v1685, %v1623
          %v1687 = vadd.f32 %v1686, %v1624
          %v1688 = vadd.f32 %v1687, %v1625
          %v1689 = vadd.f32 %v1688, %v1626
          %v1690 = vadd.f32 %v1689, %v1627
          %v1691 = vadd.f32 %v1690, %v1628
          %v1692 = vadd.f32 %v1691, %v1629
          %v1693 = vadd.f32 %v1692, %v1630
          %v1694 = vadd.f32 %v1693, %v1631
          %v1695 = vadd.f32 %v1694, %v1632
          %v1696 = vadd.f32 %v1695, %v1633
          %v1697 = vadd.f32 %v1696, %v1634
          %v1698 = vadd.f32 %v1697, %v1635
          %v1699 = vadd.f32 %v1698, %v1636
          %v1700 = vadd.f32 %v1699, %v1637
          %v1701 = vadd.f32 %v1700, %v1638
          %v1702 = vadd.f32 %v1701, %v1639
          %v1703 = vadd.f32 %v1702, %v1640
          %v1704 = vadd.f32 %v1703, %v1641
          %v1705 = vadd.f32 %v1704, %v1642
          %v1706 = vadd.f32 %v1705, %v1643
          %v1707 = vadd.f32 %v1706, %v1644
          %v1708 = vadd.f32 %v1707, %v1645
          %v1709 = vadd.f32 %v1708, %v1646
          %v1710 = vadd.f32 %v1709, %v1647
          %v1711 = vadd.f32 %v1710, %v1648
          %v1712 = vadd.f32 %v1711, %v1649
          %v1713 = vadd.f32 %v1712, %v1650
          %v1714 = vadd.f32 %v1713, %v1651
          %v1715 = vadd.f32 %v1714, %v1652
          %v1716 = vrot.slane %v1715, 4
          %v1717 = vadd.f32 %v1715, %v1716
          %v1718 = vrot.slane %v1717, 2
          %v1719 = vadd.f32 %v1717, %v1718
          %v1720 = vrot.slane %v1719, 1
          %v1721 = vadd.f32 %v1719, %v1720
          %v1722 = vlaneseq
          %v1723 = vshrl.u32 %v1722, 7
          %vm1724 = vcmp.eq.s32.totalorder %v1723, 0
          %vm1725 = vcmp.eq.s32.totalorder %v1723, 1
          %v1726 = vsel %vm1725, %v1721, 0.0
          %v1727 = vsel %vm1724, %v1588, %v1726
          %1728 = vst [vmem:[%s517] sm:$0xff] %v1727
        $region77: #{up_forward.4} parent=64 // pred_fallthru
          _
        %s1729 = smul.u32 64, %s19
        %p1730 = scmp.lt.s32.totalorder %s1729, 127
        %s1731 = scalar_select %p1730, %s1729, 127
        %s1732 = smul.addr %s1731, 8
        %s1733 = scalar_lea.vmem %s2, %s1732
        %p1734 = scmp.lt.s32.totalorder %s19, 1
        %s1735 = scalar_select %p1734, %s19, 1
        %s1736 = smul.addr %s1735, 8
        %s1737 = scalar_lea.vmem %s3, %s1736
        // Predicated region
        $region78: #{up_forward.4} parent=64 // pred_check
          %p1738 = pneg %p99
        $region79: #{up_forward.4} parent=64 // pred_check_branch
          %1740 = sbr.rel (%p1738) target = $region81
        $region80: #{up_forward.4} parent=64 // pred_region
          %s1741 = smul.u32 64, %s19
        $region81: #{up_forward.4} parent=64 // pred_fallthru
          _
        // Predicated region
        $region82: #{up_forward.4} parent=64 // pred_check
          %p1742 = pneg %p125
        $region83: #{up_forward.4} parent=64 // pred_check_branch
          %1744 = sbr.rel (%p1742) target = $region85
        $region84: #{up_forward.4} parent=64 // pred_region
          _
        $region85: #{up_forward.4} parent=64 // pred_fallthru
          _
      $region65: #{up_forward.4} parent=5 // pred_fallthru
        _
      %p1745 = scmp.le.s32.totalorder 2, %s10
      // Predicated region
      $region86: #{up_forward.4} parent=5 // pred_check
        %p1746 = pneg %p1745
      $region87: #{up_forward.4} parent=5 // pred_check_branch
        %1748 = sbr.rel (%p1746) target = $region89
      $region88: #{up_forward.4} parent=5 // pred_region
        %s1749 = ssub.s32 %s10, 2
        // Predicated region
        $region90: #{up_forward.4} parent=88 // pred_check
          %p1750 = pneg %p105
        $region91: #{up_forward.4} parent=88 // pred_check_branch
          %1752 = sbr.rel (%p1750) target = $region93
        $region92: #{up_forward.4} parent=88 // pred_region
          %s1753 = smul.u32 64, %s21
          %p1754 = scmp.lt.s32.totalorder %s1753, 127
          %s1755 = scalar_select %p1754, %s1753, 127
          %s1756 = smul.addr %s1755, 8
          %s1757 = scalar_lea.vmem %s2, %s1756
        $region93: #{up_forward.4} parent=88 // pred_fallthru
          _
        // Predicated region
        $region94: #{up_forward.4} parent=88 // pred_check
          %p1758 = pneg %p131
        $region95: #{up_forward.4} parent=88 // pred_check_branch
          %1760 = sbr.rel (%p1758) target = $region97
        $region96: #{up_forward.4} parent=88 // pred_region
          %p1761 = scmp.lt.s32.totalorder %s21, 1
          %s1762 = scalar_select %p1761, %s21, 1
          %s1763 = smul.addr %s1762, 8
          %s1764 = scalar_lea.vmem %s3, %s1763
        $region97: #{up_forward.4} parent=88 // pred_fallthru
          _
      $region89: #{up_forward.4} parent=5 // pred_fallthru
        _
    $region6: #{up_forward.4} parent=1 // loop_footer
      %s14 = sadd.s32 1, %s10
    $region7: #{up_forward.4} parent=1 // loop_footer_branch
      %9 = sbr.rel target = $region3
    $region8: #{up_forward.4} parent=1 // loop_exit
      _

// kernel: up_forward.6
$region0: #{up_forward.6}
  #allocation0 [shape = 'u32[]', space=smem, size = 0x4, offset = 0x4, fixed_abs, tag = 'smem constant byte address 0x4 - core index']
  #allocation1 [shape = 'u32[144,128]{1,0:T(1,128)}', space=vmem, size = 0x12000, scoped, tag = 'internal scratch']
  #allocation2 [shape = 'f32[512,128]{1,0:T(8,128)}', space=vmem, size = 0x40000, scoped, tag = 'scratch operand']
  %s0 = inlined_call_operand.vmem [shape: bf16[1024,128], index: 0, kind: input, shape index: {}]
  %s1 = inlined_call_operand.vmem [shape: bf16[128,128], index: 1, kind: input, shape index: {}]
  %s2 = inlined_call_operand.vmem [shape: f32[1024,128], index: 2, kind: output, shape index: {0}]
  %s3 = inlined_call_operand.vmem [shape: f32[16,128], index: 3, kind: output, shape index: {1}]
  %4 = xla_tuple %s2, %s3
  %s5 = sld [smem:[#allocation0]]
  $region57: #{up_forward.6} parent=0
    _
  %s7 = ssub.s32 1, %s5
  %s8 = scalar_select 0, %s7, %s5
  loop: start=0, step=1, limit=4
  $region2: #{up_forward.6} parent=0 // loop_pre_header
    _
  $region3: #{up_forward.6} parent=0 // loop_header
    %s10 = sphi 0, %s14
    %p11 = scmp.ge.s32.totalorder %s10, 4
    %s17 = sphi 0, %s29
    %s18 = sphi 0, %s25
    %s19 = sphi 0, %s17
    %s20 = sphi 0, %s18
    %s21 = sphi 0, %s19
    %s22 = sphi 0, %s20
    %s34 = sphi 0, %s36
    %s37 = sphi 0, %s34
    %s38 = sphi 0, %s37
    %s54 = sphi 0, %s38
    %s60 = sphi 0, %s62
    %s63 = sphi 0, %s60
    %s64 = sphi 0, %s63
    %s80 = sphi 0, %s64
    %s86 = sphi 0, %s88
    %s89 = sphi 0, %s86
    %s90 = sphi 0, %s89
    %s106 = sphi 0, %s90
    %s112 = sphi 0, %s114
    %s115 = sphi 0, %s112
    %s116 = sphi 0, %s115
    %s132 = sphi 0, %s116
  $region4: #{up_forward.6} parent=0 // loop_header_branch
    %13 = sbr.rel (%p11) target = $region8
  $region5: #{up_forward.6} parent=0 // loop_body
    %s15 = ssub.s32 %s10, 1
    %s16 = ssub.s32 %s10, 2
    %s23 = sadd.s32 1, %s18
    %p24 = scmp.ge.s32.totalorder %s23, 1
    %s25 = scalar_select %p24, 0, %s23
    %s26 = sadd.s32 1, %s17
    %s27 = scalar_select %p24, %s26, %s17
    %p28 = scmp.ge.s32.totalorder %s27, 2
    %s29 = scalar_select %p28, 0, %s27
    %s30 = ssub.s32 %s17, %s29
    %s31 = ssub.s32 %s18, %s25
    %s32 = sor.u32 %s30, %s31
    %p33 = scmp.eq.s32.totalorder %s32, 0
    %s35 = sadd.s32 %s34, 1
    %s36 = scalar_select %p33, %s34, %s35
    %p39 = pneg %p33
    %p40 = scmp.eq.s32.totalorder %s10, 1
    %p41 = por %p39, %p40
    %p42 = scmp.ne.s32.totalorder %s34, %s37
    %p43 = scmp.eq.s32.totalorder %s10, 0
    %p44 = por %p42, %p43
    %p45 = scmp.ne.s32.totalorder %s34, %s37
    %p46 = scmp.eq.s32.totalorder %s15, 1
    %p47 = por %p45, %p46
    %p48 = scmp.ne.s32.totalorder %s37, %s38
    %p49 = scmp.eq.s32.totalorder %s15, 0
    %p50 = por %p48, %p49
    %p51 = scmp.ne.s32.totalorder %s37, %s38
    %p52 = scmp.eq.s32.totalorder %s16, 1
    %p53 = por %p51, %p52
    %p55 = scmp.ne.s32.totalorder %s38, %s54
    %p56 = scmp.eq.s32.totalorder %s16, 0
    %p57 = por %p55, %p56
    %s58 = ssub.s32 %s18, %s25
    %p59 = scmp.eq.s32.totalorder %s58, 0
    %s61 = sadd.s32 %s60, 1
    %s62 = scalar_select %p59, %s60, %s61
    %p65 = pneg %p59
    %p66 = scmp.eq.s32.totalorder %s10, 1
    %p67 = por %p65, %p66
    %p68 = scmp.ne.s32.totalorder %s60, %s63
    %p69 = scmp.eq.s32.totalorder %s10, 0
    %p70 = por %p68, %p69
    %p71 = scmp.ne.s32.totalorder %s60, %s63
    %p72 = scmp.eq.s32.totalorder %s15, 1
    %p73 = por %p71, %p72
    %p74 = scmp.ne.s32.totalorder %s63, %s64
    %p75 = scmp.eq.s32.totalorder %s15, 0
    %p76 = por %p74, %p75
    %p77 = scmp.ne.s32.totalorder %s63, %s64
    %p78 = scmp.eq.s32.totalorder %s16, 1
    %p79 = por %p77, %p78
    %p81 = scmp.ne.s32.totalorder %s64, %s80
    %p82 = scmp.eq.s32.totalorder %s16, 0
    %p83 = por %p81, %p82
    %s84 = ssub.s32 %s17, %s29
    %p85 = scmp.eq.s32.totalorder %s84, 0
    %s87 = sadd.s32 %s86, 1
    %s88 = scalar_select %p85, %s86, %s87
    %p91 = pneg %p85
    %p92 = scmp.eq.s32.totalorder %s10, 1
    %p93 = por %p91, %p92
    %p94 = scmp.ne.s32.totalorder %s86, %s89
    %p95 = scmp.eq.s32.totalorder %s10, 0
    %p96 = por %p94, %p95
    %p97 = scmp.ne.s32.totalorder %s86, %s89
    %p98 = scmp.eq.s32.totalorder %s15, 1
    %p99 = por %p97, %p98
    %p100 = scmp.ne.s32.totalorder %s89, %s90
    %p101 = scmp.eq.s32.totalorder %s15, 0
    %p102 = por %p100, %p101
    %p103 = scmp.ne.s32.totalorder %s89, %s90
    %p104 = scmp.eq.s32.totalorder %s16, 1
    %p105 = por %p103, %p104
    %p107 = scmp.ne.s32.totalorder %s90, %s106
    %p108 = scmp.eq.s32.totalorder %s16, 0
    %p109 = por %p107, %p108
    %s110 = ssub.s32 %s17, %s29
    %p111 = scmp.eq.s32.totalorder %s110, 0
    %s113 = sadd.s32 %s112, 1
    %s114 = scalar_select %p111, %s112, %s113
    %p117 = pneg %p111
    %p118 = scmp.eq.s32.totalorder %s10, 1
    %p119 = por %p117, %p118
    %p120 = scmp.ne.s32.totalorder %s112, %s115
    %p121 = scmp.eq.s32.totalorder %s10, 0
    %p122 = por %p120, %p121
    %p123 = scmp.ne.s32.totalorder %s112, %s115
    %p124 = scmp.eq.s32.totalorder %s15, 1
    %p125 = por %p123, %p124
    %p126 = scmp.ne.s32.totalorder %s115, %s116
    %p127 = scmp.eq.s32.totalorder %s15, 0
    %p128 = por %p126, %p127
    %p129 = scmp.ne.s32.totalorder %s115, %s116
    %p130 = scmp.eq.s32.totalorder %s16, 1
    %p131 = por %p129, %p130
    %p133 = scmp.ne.s32.totalorder %s116, %s132
    %p134 = scmp.eq.s32.totalorder %s16, 0
    %p135 = por %p133, %p134
    %p136 = scmp.le.s32.totalorder 1, %s10
    %p137 = scmp.lt.s32.totalorder %s10, 3
    %p138 = pnand %p136, %p137
    %p139 = pneg %p138
    // Predicated region
    $region9: #{up_forward.6} parent=5 // pred_check
      _
    $region10: #{up_forward.6} parent=5 // pred_check_branch
      %141 = sbr.rel (%p138) target = $region12
    $region11: #{up_forward.6} parent=5 // pred_region
      %s142 = ssub.s32 %s10, 1
      // Predicated region
      $region13: #{up_forward.6} parent=11 // pred_check
        %p143 = pneg %p76
      $region14: #{up_forward.6} parent=11 // pred_check_branch
        %145 = sbr.rel (%p143) target = $region16
      $region15: #{up_forward.6} parent=11 // pred_region
        %s146 = smul.u32 16, %s20
        %p147 = scmp.lt.s32.totalorder %s146, 15
        %s148 = scalar_select %p147, %s146, 15
        %s149 = smul.addr %s148, 4
        %s150 = scalar_lea.vmem %s1, %s149
        %s151 = smul.u32 16, %s20
      $region16: #{up_forward.6} parent=11 // pred_fallthru
        _
    $region12: #{up_forward.6} parent=5 // pred_fallthru
      _
    %p152 = scmp.lt.s32.totalorder %s10, 2
    // Predicated region
    $region17: #{up_forward.6} parent=5 // pred_check
      %p153 = pneg %p152
    $region18: #{up_forward.6} parent=5 // pred_check_branch
      %155 = sbr.rel (%p153) target = $region20
    $region19: #{up_forward.6} parent=5 // pred_region
      // Predicated region
      $region21: #{up_forward.6} parent=19 // pred_check
        %p156 = pneg %p44
      $region22: #{up_forward.6} parent=19 // pred_check_branch
        %158 = sbr.rel (%p156) target = $region24
      $region23: #{up_forward.6} parent=19 // pred_region
        %s159 = smul.u32 64, %s17
        %p160 = scmp.lt.s32.totalorder %s159, 127
        %s161 = scalar_select %p160, %s159, 127
        %p162 = scmp.lt.s32.totalorder %s18, 0
        %s163 = scalar_select %p162, %s18, 0
        %s164 = sadd.s32 %s163, %s161
        %s165 = smul.addr %s164, 4
        %s166 = scalar_lea.vmem %s0, %s165
        %s167 = smul.u32 64, %s17
      $region24: #{up_forward.6} parent=19 // pred_fallthru
        _
    $region20: #{up_forward.6} parent=5 // pred_fallthru
      _
    %p168 = scmp.le.s32.totalorder 1, %s10
    %p169 = scmp.lt.s32.totalorder %s10, 3
    %p170 = pnand %p168, %p169
    %p171 = pneg %p170
    // Predicated region
    $region25: #{up_forward.6} parent=5 // pred_check
      _
    $region26: #{up_forward.6} parent=5 // pred_check_branch
      %173 = sbr.rel (%p170) target = $region28
    $region27: #{up_forward.6} parent=5 // pred_region
      %s174 = ssub.s32 %s10, 1
      %s175 = smul.u32 64, %s19
      %p176 = scmp.lt.s32.totalorder %s175, 127
      %s177 = scalar_select %p176, %s175, 127
      %p178 = scmp.lt.s32.totalorder %s20, 0
      %s179 = scalar_select %p178, %s20, 0
      %s180 = sadd.s32 %s179, %s177
      %s181 = smul.addr %s180, 4
      %s182 = scalar_lea.vmem %s0, %s181
      %p183 = pneg %p50
      %p184 = pneg %p47
      %s185 = smul.u32 16, %s20
      %p186 = scmp.lt.s32.totalorder %s185, 15
      %s187 = scalar_select %p186, %s185, 15
      %s188 = smul.addr %s187, 4
      %s189 = scalar_lea.vmem %s1, %s188
      %p190 = pneg %p76
      %p191 = pneg %p73
      %p192 = pneg %p102
      %p193 = pneg %p99
      %s194 = smul.u32 64, %s19
      %p195 = scmp.lt.s32.totalorder %s194, 127
      %s196 = scalar_select %p195, %s194, 127
      %s197 = smul.addr %s196, 8
      %s198 = scalar_lea.vmem %s2, %s197
      %p199 = pneg %p128
      %p200 = pneg %p125
      %p201 = scmp.lt.s32.totalorder %s19, 1
      %s202 = scalar_select %p201, %s19, 1
      %s203 = smul.addr %s202, 8
      %s204 = scalar_lea.vmem %s3, %s203
      %s205 = smul.u32 64, %s19
      %p206 = scmp.lt.s32.totalorder %s205, 127
      %s207 = scalar_select %p206, %s205, 127
      %p208 = scmp.lt.s32.totalorder %s20, 0
      %s209 = scalar_select %p208, %s20, 0
      %s210 = sadd.s32 %s209, %s207
      %s211 = smul.addr %s210, 4
      %s212 = scalar_lea.vmem %s0, %s211
      %s213 = smul.u32 64, %s19
      %s214 = smul.u32 16, %s20
      %p215 = scmp.lt.s32.totalorder %s214, 15
      %s216 = scalar_select %p215, %s214, 15
      %s217 = smul.addr %s216, 4
      %s218 = scalar_lea.vmem %s1, %s217
      %s219 = smul.u32 16, %s20
      %s220 = smul.u32 64, %s19
      %p221 = scmp.lt.s32.totalorder %s220, 127
      %s222 = scalar_select %p221, %s220, 127
      %s223 = smul.addr %s222, 8
      %s224 = scalar_lea.vmem %s2, %s223
      %s225 = smul.u32 64, %s19
      %p226 = scmp.lt.s32.totalorder %s19, 1
      %s227 = scalar_select %p226, %s19, 1
      %s228 = smul.addr %s227, 8
      %s229 = scalar_lea.vmem %s3, %s228
      %p231 = scmp.eq.s32.totalorder %s20, 0
      // Predicated region
      $region29: #{up_forward.6} parent=27 // pred_check
        %p232 = pneg %p231
      $region30: #{up_forward.6} parent=27 // pred_check_branch
        %234 = sbr.rel (%p232) target = $region32
      $region31: #{up_forward.6} parent=27 // pred_region
        %235 = vst [vmem:[#allocation2] sm:$0xff] 0.0
        %236 = vst [vmem:[#allocation2 + $0x8] sm:$0xff] 0.0
        %237 = vst [vmem:[#allocation2 + $0x10] sm:$0xff] 0.0
        %238 = vst [vmem:[#allocation2 + $0x18] sm:$0xff] 0.0
        %239 = vst [vmem:[#allocation2 + $0x20] sm:$0xff] 0.0
        %240 = vst [vmem:[#allocation2 + $0x28] sm:$0xff] 0.0
        %241 = vst [vmem:[#allocation2 + $0x30] sm:$0xff] 0.0
        %242 = vst [vmem:[#allocation2 + $0x38] sm:$0xff] 0.0
        %243 = vst [vmem:[#allocation2 + $0x40] sm:$0xff] 0.0
        %244 = vst [vmem:[#allocation2 + $0x48] sm:$0xff] 0.0
        %245 = vst [vmem:[#allocation2 + $0x50] sm:$0xff] 0.0
        %246 = vst [vmem:[#allocation2 + $0x58] sm:$0xff] 0.0
        %247 = vst [vmem:[#allocation2 + $0x60] sm:$0xff] 0.0
        %248 = vst [vmem:[#allocation2 + $0x68] sm:$0xff] 0.0
        %249 = vst [vmem:[#allocation2 + $0x70] sm:$0xff] 0.0
        %250 = vst [vmem:[#allocation2 + $0x78] sm:$0xff] 0.0
        %251 = vst [vmem:[#allocation2 + $0x80] sm:$0xff] 0.0
        %252 = vst [vmem:[#allocation2 + $0x88] sm:$0xff] 0.0
        %253 = vst [vmem:[#allocation2 + $0x90] sm:$0xff] 0.0
        %254 = vst [vmem:[#allocation2 + $0x98] sm:$0xff] 0.0
        %255 = vst [vmem:[#allocation2 + $0xa0] sm:$0xff] 0.0
        %256 = vst [vmem:[#allocation2 + $0xa8] sm:$0xff] 0.0
        %257 = vst [vmem:[#allocation2 + $0xb0] sm:$0xff] 0.0
        %258 = vst [vmem:[#allocation2 + $0xb8] sm:$0xff] 0.0
        %259 = vst [vmem:[#allocation2 + $0xc0] sm:$0xff] 0.0
        %260 = vst [vmem:[#allocation2 + $0xc8] sm:$0xff] 0.0
        %261 = vst [vmem:[#allocation2 + $0xd0] sm:$0xff] 0.0
        %262 = vst [vmem:[#allocation2 + $0xd8] sm:$0xff] 0.0
        %263 = vst [vmem:[#allocation2 + $0xe0] sm:$0xff] 0.0
        %264 = vst [vmem:[#allocation2 + $0xe8] sm:$0xff] 0.0
        %265 = vst [vmem:[#allocation2 + $0xf0] sm:$0xff] 0.0
        %266 = vst [vmem:[#allocation2 + $0xf8] sm:$0xff] 0.0
        %267 = vst [vmem:[#allocation2 + $0x100] sm:$0xff] 0.0
        %268 = vst [vmem:[#allocation2 + $0x108] sm:$0xff] 0.0
        %269 = vst [vmem:[#allocation2 + $0x110] sm:$0xff] 0.0
        %270 = vst [vmem:[#allocation2 + $0x118] sm:$0xff] 0.0
        %271 = vst [vmem:[#allocation2 + $0x120] sm:$0xff] 0.0
        %272 = vst [vmem:[#allocation2 + $0x128] sm:$0xff] 0.0
        %273 = vst [vmem:[#allocation2 + $0x130] sm:$0xff] 0.0
        %274 = vst [vmem:[#allocation2 + $0x138] sm:$0xff] 0.0
        %275 = vst [vmem:[#allocation2 + $0x140] sm:$0xff] 0.0
        %276 = vst [vmem:[#allocation2 + $0x148] sm:$0xff] 0.0
        %277 = vst [vmem:[#allocation2 + $0x150] sm:$0xff] 0.0
        %278 = vst [vmem:[#allocation2 + $0x158] sm:$0xff] 0.0
        %279 = vst [vmem:[#allocation2 + $0x160] sm:$0xff] 0.0
        %280 = vst [vmem:[#allocation2 + $0x168] sm:$0xff] 0.0
        %281 = vst [vmem:[#allocation2 + $0x170] sm:$0xff] 0.0
        %282 = vst [vmem:[#allocation2 + $0x178] sm:$0xff] 0.0
        %283 = vst [vmem:[#allocation2 + $0x180] sm:$0xff] 0.0
        %284 = vst [vmem:[#allocation2 + $0x188] sm:$0xff] 0.0
        %285 = vst [vmem:[#allocation2 + $0x190] sm:$0xff] 0.0
        %286 = vst [vmem:[#allocation2 + $0x198] sm:$0xff] 0.0
        %287 = vst [vmem:[#allocation2 + $0x1a0] sm:$0xff] 0.0
        %288 = vst [vmem:[#allocation2 + $0x1a8] sm:$0xff] 0.0
        %289 = vst [vmem:[#allocation2 + $0x1b0] sm:$0xff] 0.0
        %290 = vst [vmem:[#allocation2 + $0x1b8] sm:$0xff] 0.0
        %291 = vst [vmem:[#allocation2 + $0x1c0] sm:$0xff] 0.0
        %292 = vst [vmem:[#allocation2 + $0x1c8] sm:$0xff] 0.0
        %293 = vst [vmem:[#allocation2 + $0x1d0] sm:$0xff] 0.0
        %294 = vst [vmem:[#allocation2 + $0x1d8] sm:$0xff] 0.0
        %295 = vst [vmem:[#allocation2 + $0x1e0] sm:$0xff] 0.0
        %296 = vst [vmem:[#allocation2 + $0x1e8] sm:$0xff] 0.0
        %297 = vst [vmem:[#allocation2 + $0x1f0] sm:$0xff] 0.0
        %298 = vst [vmem:[#allocation2 + $0x1f8] sm:$0xff] 0.0
      $region32: #{up_forward.6} parent=27 // pred_fallthru
        _
      %v299 = vld [vmem:[#allocation2] sm:$0xff]
      %v300 = vld [vmem:[#allocation2 + $0x8] sm:$0xff]
      %v301 = vld [vmem:[#allocation2 + $0x10] sm:$0xff]
      %v302 = vld [vmem:[#allocation2 + $0x18] sm:$0xff]
      %v303 = vld [vmem:[#allocation2 + $0x20] sm:$0xff]
      %v304 = vld [vmem:[#allocation2 + $0x28] sm:$0xff]
      %v305 = vld [vmem:[#allocation2 + $0x30] sm:$0xff]
      %v306 = vld [vmem:[#allocation2 + $0x38] sm:$0xff]
      %v307 = vld [vmem:[#allocation2 + $0x40] sm:$0xff]
      %v308 = vld [vmem:[#allocation2 + $0x48] sm:$0xff]
      %v309 = vld [vmem:[#allocation2 + $0x50] sm:$0xff]
      %v310 = vld [vmem:[#allocation2 + $0x58] sm:$0xff]
      %v311 = vld [vmem:[#allocation2 + $0x60] sm:$0xff]
      %v312 = vld [vmem:[#allocation2 + $0x68] sm:$0xff]
      %v313 = vld [vmem:[#allocation2 + $0x70] sm:$0xff]
      %v314 = vld [vmem:[#allocation2 + $0x78] sm:$0xff]
      %v315 = vld [vmem:[#allocation2 + $0x80] sm:$0xff]
      %v316 = vld [vmem:[#allocation2 + $0x88] sm:$0xff]
      %v317 = vld [vmem:[#allocation2 + $0x90] sm:$0xff]
      %v318 = vld [vmem:[#allocation2 + $0x98] sm:$0xff]
      %v319 = vld [vmem:[#allocation2 + $0xa0] sm:$0xff]
      %v320 = vld [vmem:[#allocation2 + $0xa8] sm:$0xff]
      %v321 = vld [vmem:[#allocation2 + $0xb0] sm:$0xff]
      %v322 = vld [vmem:[#allocation2 + $0xb8] sm:$0xff]
      %v323 = vld [vmem:[#allocation2 + $0xc0] sm:$0xff]
      %v324 = vld [vmem:[#allocation2 + $0xc8] sm:$0xff]
      %v325 = vld [vmem:[#allocation2 + $0xd0] sm:$0xff]
      %v326 = vld [vmem:[#allocation2 + $0xd8] sm:$0xff]
      %v327 = vld [vmem:[#allocation2 + $0xe0] sm:$0xff]
      %v328 = vld [vmem:[#allocation2 + $0xe8] sm:$0xff]
      %v329 = vld [vmem:[#allocation2 + $0xf0] sm:$0xff]
      %v330 = vld [vmem:[#allocation2 + $0xf8] sm:$0xff]
      %v331 = vld [vmem:[#allocation2 + $0x100] sm:$0xff]
      %v332 = vld [vmem:[#allocation2 + $0x108] sm:$0xff]
      %v333 = vld [vmem:[#allocation2 + $0x110] sm:$0xff]
      %v334 = vld [vmem:[#allocation2 + $0x118] sm:$0xff]
      %v335 = vld [vmem:[#allocation2 + $0x120] sm:$0xff]
      %v336 = vld [vmem:[#allocation2 + $0x128] sm:$0xff]
      %v337 = vld [vmem:[#allocation2 + $0x130] sm:$0xff]
      %v338 = vld [vmem:[#allocation2 + $0x138] sm:$0xff]
      %v339 = vld [vmem:[#allocation2 + $0x140] sm:$0xff]
      %v340 = vld [vmem:[#allocation2 + $0x148] sm:$0xff]
      %v341 = vld [vmem:[#allocation2 + $0x150] sm:$0xff]
      %v342 = vld [vmem:[#allocation2 + $0x158] sm:$0xff]
      %v343 = vld [vmem:[#allocation2 + $0x160] sm:$0xff]
      %v344 = vld [vmem:[#allocation2 + $0x168] sm:$0xff]
      %v345 = vld [vmem:[#allocation2 + $0x170] sm:$0xff]
      %v346 = vld [vmem:[#allocation2 + $0x178] sm:$0xff]
      %v347 = vld [vmem:[#allocation2 + $0x180] sm:$0xff]
      %v348 = vld [vmem:[#allocation2 + $0x188] sm:$0xff]
      %v349 = vld [vmem:[#allocation2 + $0x190] sm:$0xff]
      %v350 = vld [vmem:[#allocation2 + $0x198] sm:$0xff]
      %v351 = vld [vmem:[#allocation2 + $0x1a0] sm:$0xff]
      %v352 = vld [vmem:[#allocation2 + $0x1a8] sm:$0xff]
      %v353 = vld [vmem:[#allocation2 + $0x1b0] sm:$0xff]
      %v354 = vld [vmem:[#allocation2 + $0x1b8] sm:$0xff]
      %v355 = vld [vmem:[#allocation2 + $0x1c0] sm:$0xff]
      %v356 = vld [vmem:[#allocation2 + $0x1c8] sm:$0xff]
      %v357 = vld [vmem:[#allocation2 + $0x1d0] sm:$0xff]
      %v358 = vld [vmem:[#allocation2 + $0x1d8] sm:$0xff]
      %v359 = vld [vmem:[#allocation2 + $0x1e0] sm:$0xff]
      %v360 = vld [vmem:[#allocation2 + $0x1e8] sm:$0xff]
      %v361 = vld [vmem:[#allocation2 + $0x1f0] sm:$0xff]
      %v362 = vld [vmem:[#allocation2 + $0x1f8] sm:$0xff]
      %v363 = vld [vmem:[%s212] sm:$0xf]
      %v364 = vld [vmem:[%s212 + $0x4] sm:$0xf]
      %v365 = vld [vmem:[%s212 + $0x8] sm:$0xf]
      %v366 = vld [vmem:[%s212 + $0xc] sm:$0xf]
      %v367 = vld [vmem:[%s212 + $0x10] sm:$0xf]
      %v368 = vld [vmem:[%s212 + $0x14] sm:$0xf]
      %v369 = vld [vmem:[%s212 + $0x18] sm:$0xf]
      %v370 = vld [vmem:[%s212 + $0x1c] sm:$0xf]
      %v371 = vld [vmem:[%s212 + $0x20] sm:$0xf]
      %v372 = vld [vmem:[%s212 + $0x24] sm:$0xf]
      %v373 = vld [vmem:[%s212 + $0x28] sm:$0xf]
      %v374 = vld [vmem:[%s212 + $0x2c] sm:$0xf]
      %v375 = vld [vmem:[%s212 + $0x30] sm:$0xf]
      %v376 = vld [vmem:[%s212 + $0x34] sm:$0xf]
      %v377 = vld [vmem:[%s212 + $0x38] sm:$0xf]
      %v378 = vld [vmem:[%s212 + $0x3c] sm:$0xf]
      %v379 = vld [vmem:[%s212 + $0x40] sm:$0xf]
      %v380 = vld [vmem:[%s212 + $0x44] sm:$0xf]
      %v381 = vld [vmem:[%s212 + $0x48] sm:$0xf]
      %v382 = vld [vmem:[%s212 + $0x4c] sm:$0xf]
      %v383 = vld [vmem:[%s212 + $0x50] sm:$0xf]
      %v384 = vld [vmem:[%s212 + $0x54] sm:$0xf]
      %v385 = vld [vmem:[%s212 + $0x58] sm:$0xf]
      %v386 = vld [vmem:[%s212 + $0x5c] sm:$0xf]
      %v387 = vld [vmem:[%s212 + $0x60] sm:$0xf]
      %v388 = vld [vmem:[%s212 + $0x64] sm:$0xf]
      %v389 = vld [vmem:[%s212 + $0x68] sm:$0xf]
      %v390 = vld [vmem:[%s212 + $0x6c] sm:$0xf]
      %v391 = vld [vmem:[%s212 + $0x70] sm:$0xf]
      %v392 = vld [vmem:[%s212 + $0x74] sm:$0xf]
      %v393 = vld [vmem:[%s212 + $0x78] sm:$0xf]
      %v394 = vld [vmem:[%s212 + $0x7c] sm:$0xf]
      %v395 = vld [vmem:[%s212 + $0x80] sm:$0xf]
      %v396 = vld [vmem:[%s212 + $0x84] sm:$0xf]
      %v397 = vld [vmem:[%s212 + $0x88] sm:$0xf]
      %v398 = vld [vmem:[%s212 + $0x8c] sm:$0xf]
      %v399 = vld [vmem:[%s212 + $0x90] sm:$0xf]
      %v400 = vld [vmem:[%s212 + $0x94] sm:$0xf]
      %v401 = vld [vmem:[%s212 + $0x98] sm:$0xf]
      %v402 = vld [vmem:[%s212 + $0x9c] sm:$0xf]
      %v403 = vld [vmem:[%s212 + $0xa0] sm:$0xf]
      %v404 = vld [vmem:[%s212 + $0xa4] sm:$0xf]
      %v405 = vld [vmem:[%s212 + $0xa8] sm:$0xf]
      %v406 = vld [vmem:[%s212 + $0xac] sm:$0xf]
      %v407 = vld [vmem:[%s212 + $0xb0] sm:$0xf]
      %v408 = vld [vmem:[%s212 + $0xb4] sm:$0xf]
      %v409 = vld [vmem:[%s212 + $0xb8] sm:$0xf]
      %v410 = vld [vmem:[%s212 + $0xbc] sm:$0xf]
      %v411 = vld [vmem:[%s212 + $0xc0] sm:$0xf]
      %v412 = vld [vmem:[%s212 + $0xc4] sm:$0xf]
      %v413 = vld [vmem:[%s212 + $0xc8] sm:$0xf]
      %v414 = vld [vmem:[%s212 + $0xcc] sm:$0xf]
      %v415 = vld [vmem:[%s212 + $0xd0] sm:$0xf]
      %v416 = vld [vmem:[%s212 + $0xd4] sm:$0xf]
      %v417 = vld [vmem:[%s212 + $0xd8] sm:$0xf]
      %v418 = vld [vmem:[%s212 + $0xdc] sm:$0xf]
      %v419 = vld [vmem:[%s212 + $0xe0] sm:$0xf]
      %v420 = vld [vmem:[%s212 + $0xe4] sm:$0xf]
      %v421 = vld [vmem:[%s212 + $0xe8] sm:$0xf]
      %v422 = vld [vmem:[%s212 + $0xec] sm:$0xf]
      %v423 = vld [vmem:[%s212 + $0xf0] sm:$0xf]
      %v424 = vld [vmem:[%s212 + $0xf4] sm:$0xf]
      %v425 = vld [vmem:[%s212 + $0xf8] sm:$0xf]
      %v426 = vld [vmem:[%s212 + $0xfc] sm:$0xf]
      %v427 = vld [vmem:[%s218] sm:$0xf]
      %v428 = vld [vmem:[%s218 + $0x4] sm:$0xf]
      %v429 = vld [vmem:[%s218 + $0x8] sm:$0xf]
      %v430 = vld [vmem:[%s218 + $0xc] sm:$0xf]
      %v431 = vld [vmem:[%s218 + $0x10] sm:$0xf]
      %v432 = vld [vmem:[%s218 + $0x14] sm:$0xf]
      %v433 = vld [vmem:[%s218 + $0x18] sm:$0xf]
      %v434 = vld [vmem:[%s218 + $0x1c] sm:$0xf]
      %v435 = vld [vmem:[%s218 + $0x20] sm:$0xf]
      %v436 = vld [vmem:[%s218 + $0x24] sm:$0xf]
      %v437 = vld [vmem:[%s218 + $0x28] sm:$0xf]
      %v438 = vld [vmem:[%s218 + $0x2c] sm:$0xf]
      %v439 = vld [vmem:[%s218 + $0x30] sm:$0xf]
      %v440 = vld [vmem:[%s218 + $0x34] sm:$0xf]
      %v441 = vld [vmem:[%s218 + $0x38] sm:$0xf]
      %v442 = vld [vmem:[%s218 + $0x3c] sm:$0xf]
      %v507 = vunpack.c.l.b16 %v363
      %v508 = vunpack.c.l.b16 %v364
      %v509 = vunpack.c.l.b16 %v365
      %v510 = vunpack.c.l.b16 %v366
      %v511 = vunpack.c.l.b16 %v367
      %v512 = vunpack.c.l.b16 %v368
      %v513 = vunpack.c.l.b16 %v369
      %v514 = vunpack.c.l.b16 %v370
      %v515 = vunpack.c.l.b16 %v371
      %v516 = vunpack.c.l.b16 %v372
      %v517 = vunpack.c.l.b16 %v373
      %v518 = vunpack.c.l.b16 %v374
      %v519 = vunpack.c.l.b16 %v375
      %v520 = vunpack.c.l.b16 %v376
      %v521 = vunpack.c.l.b16 %v377
      %v522 = vunpack.c.l.b16 %v378
      %v523 = vunpack.c.l.b16 %v379
      %v524 = vunpack.c.l.b16 %v380
      %v525 = vunpack.c.l.b16 %v381
      %v526 = vunpack.c.l.b16 %v382
      %v527 = vunpack.c.l.b16 %v383
      %v528 = vunpack.c.l.b16 %v384
      %v529 = vunpack.c.l.b16 %v385
      %v530 = vunpack.c.l.b16 %v386
      %v531 = vunpack.c.l.b16 %v387
      %v532 = vunpack.c.l.b16 %v388
      %v533 = vunpack.c.l.b16 %v389
      %v534 = vunpack.c.l.b16 %v390
      %v535 = vunpack.c.l.b16 %v391
      %v536 = vunpack.c.l.b16 %v392
      %v537 = vunpack.c.l.b16 %v393
      %v538 = vunpack.c.l.b16 %v394
      %v539 = vunpack.c.l.b16 %v395
      %v540 = vunpack.c.l.b16 %v396
      %v541 = vunpack.c.l.b16 %v397
      %v542 = vunpack.c.l.b16 %v398
      %v543 = vunpack.c.l.b16 %v399
      %v544 = vunpack.c.l.b16 %v400
      %v545 = vunpack.c.l.b16 %v401
      %v546 = vunpack.c.l.b16 %v402
      %v547 = vunpack.c.l.b16 %v403
      %v548 = vunpack.c.l.b16 %v404
      %v549 = vunpack.c.l.b16 %v405
      %v550 = vunpack.c.l.b16 %v406
      %v551 = vunpack.c.l.b16 %v407
      %v552 = vunpack.c.l.b16 %v408
      %v553 = vunpack.c.l.b16 %v409
      %v554 = vunpack.c.l.b16 %v410
      %v555 = vunpack.c.l.b16 %v411
      %v556 = vunpack.c.l.b16 %v412
      %v557 = vunpack.c.l.b16 %v413
      %v558 = vunpack.c.l.b16 %v414
      %v559 = vunpack.c.l.b16 %v415
      %v560 = vunpack.c.l.b16 %v416
      %v561 = vunpack.c.l.b16 %v417
      %v562 = vunpack.c.l.b16 %v418
      %v563 = vunpack.c.l.b16 %v419
      %v564 = vunpack.c.l.b16 %v420
      %v565 = vunpack.c.l.b16 %v421
      %v566 = vunpack.c.l.b16 %v422
      %v567 = vunpack.c.l.b16 %v423
      %v568 = vunpack.c.l.b16 %v424
      %v569 = vunpack.c.l.b16 %v425
      %v570 = vunpack.c.l.b16 %v426
      %v571 = vpack.c.b16 %v508, %v507
      %v572 = vpack.c.b16 %v510, %v509
      %v573 = vpack.c.b16 %v512, %v511
      %v574 = vpack.c.b16 %v514, %v513
      %v575 = vpack.c.b16 %v516, %v515
      %v576 = vpack.c.b16 %v518, %v517
      %v577 = vpack.c.b16 %v520, %v519
      %v578 = vpack.c.b16 %v522, %v521
      %v579 = vpack.c.b16 %v524, %v523
      %v580 = vpack.c.b16 %v526, %v525
      %v581 = vpack.c.b16 %v528, %v527
      %v582 = vpack.c.b16 %v530, %v529
      %v583 = vpack.c.b16 %v532, %v531
      %v584 = vpack.c.b16 %v534, %v533
      %v585 = vpack.c.b16 %v536, %v535
      %v586 = vpack.c.b16 %v538, %v537
      %v587 = vpack.c.b16 %v540, %v539
      %v588 = vpack.c.b16 %v542, %v541
      %v589 = vpack.c.b16 %v544, %v543
      %v590 = vpack.c.b16 %v546, %v545
      %v591 = vpack.c.b16 %v548, %v547
      %v592 = vpack.c.b16 %v550, %v549
      %v593 = vpack.c.b16 %v552, %v551
      %v594 = vpack.c.b16 %v554, %v553
      %v595 = vpack.c.b16 %v556, %v555
      %v596 = vpack.c.b16 %v558, %v557
      %v597 = vpack.c.b16 %v560, %v559
      %v598 = vpack.c.b16 %v562, %v561
      %v599 = vpack.c.b16 %v564, %v563
      %v600 = vpack.c.b16 %v566, %v565
      %v601 = vpack.c.b16 %v568, %v567
      %v602 = vpack.c.b16 %v570, %v569
      %v651 = vunpack.c.l.b16 %v427
      %v652 = vunpack.c.l.b16 %v428
      %v653 = vunpack.c.l.b16 %v429
      %v654 = vunpack.c.l.b16 %v430
      %v655 = vunpack.c.l.b16 %v431
      %v656 = vunpack.c.l.b16 %v432
      %v657 = vunpack.c.l.b16 %v433
      %v658 = vunpack.c.l.b16 %v434
      %v659 = vunpack.c.l.b16 %v435
      %v660 = vunpack.c.l.b16 %v436
      %v661 = vunpack.c.l.b16 %v437
      %v662 = vunpack.c.l.b16 %v438
      %v663 = vunpack.c.l.b16 %v439
      %v664 = vunpack.c.l.b16 %v440
      %v665 = vunpack.c.l.b16 %v441
      %v666 = vunpack.c.l.b16 %v442
      %v667 = vpack.c.b16 %v652, %v651
      %v668 = vpack.c.b16 %v654, %v653
      %v669 = vpack.c.b16 %v656, %v655
      %v670 = vpack.c.b16 %v658, %v657
      %v671 = vpack.c.b16 %v660, %v659
      %v672 = vpack.c.b16 %v662, %v661
      %v673 = vpack.c.b16 %v664, %v663
      %v674 = vpack.c.b16 %v666, %v665
      %683 = vmatprep.subr.bf16.mxu0 0
      %684 = vmatpush1.bf16.msra.mxu0 %v674
      %685 = vmatprep.subr.bf16.mxu0 0
      %686 = vmatpush1.bf16.msra.mxu0 %v673
      %687 = vmatprep.subr.bf16.mxu0 0
      %688 = vmatpush1.bf16.msra.mxu0 %v672
      %689 = vmatprep.subr.bf16.mxu0 0
      %690 = vmatpush1.bf16.msra.mxu0 %v671
      %691 = vmatprep.subr.bf16.mxu0 0
      %692 = vmatpush1.bf16.msra.mxu0 %v670
      %693 = vmatprep.subr.bf16.mxu0 0
      %694 = vmatpush1.bf16.msra.mxu0 %v669
      %695 = vmatprep.subr.bf16.mxu0 0
      %696 = vmatpush1.bf16.msra.mxu0 %v668
      %697 = vmatprep.subr.bf16.mxu0 0
      %698 = vmatpush1.bf16.msra.mxu0 %v667
      %699 = vmatprep.subr.bf16.mxu0 0
      %700 = vmatpush2.bf16.msra.mxu0 0
      %701 = vmatprep.subr.bf16.mxu0 0
      %702 = vmatpush2.bf16.msra.mxu0 0
      %703 = vmatprep.subr.bf16.mxu0 0
      %704 = vmatpush2.bf16.msra.mxu0 0
      %705 = vmatprep.subr.bf16.mxu0 0
      %706 = vmatpush2.bf16.msra.mxu0 0
      %707 = vmatprep.subr.bf16.mxu0 0
      %708 = vmatpush2.bf16.msra.mxu0 0
      %709 = vmatprep.subr.bf16.mxu0 0
      %710 = vmatpush2.bf16.msra.mxu0 0
      %711 = vmatprep.subr.bf16.mxu0 0
      %712 = vmatpush2.bf16.msra.mxu0 0
      %713 = vmatprep.subr.bf16.mxu0 0
      %714 = vmatpush2.bf16.msra.mxu0 0
      %715 = vmatprep.mubr.bf16.mxu0 0
      %716 = vmatmul.mubr.bf16.gmra.mxu0 %v571
      %v717 = vpop.f32.mrf.mxu0
      %v718 = vadd.f32 0.0, %v717
      %v719 = vpop.f32.mrf.mxu0
      %v720 = vpop.f32.mrf.mxu0
      %v721 = vadd.f32 0.0, %v720
      %v722 = vpop.f32.mrf.mxu0
      %723 = vmatprep.mubr.bf16.mxu0 0
      %724 = vmatmul.mubr.bf16.gmra.mxu0 %v572
      %v725 = vpop.f32.mrf.mxu0
      %v726 = vadd.f32 0.0, %v725
      %v727 = vpop.f32.mrf.mxu0
      %v728 = vpop.f32.mrf.mxu0
      %v729 = vadd.f32 0.0, %v728
      %v730 = vpop.f32.mrf.mxu0
      %731 = vmatprep.mubr.bf16.mxu0 0
      %732 = vmatmul.mubr.bf16.gmra.mxu0 %v573
      %v733 = vpop.f32.mrf.mxu0
      %v734 = vadd.f32 0.0, %v733
      %v735 = vpop.f32.mrf.mxu0
      %v736 = vpop.f32.mrf.mxu0
      %v737 = vadd.f32 0.0, %v736
      %v738 = vpop.f32.mrf.mxu0
      %739 = vmatprep.mubr.bf16.mxu0 0
      %740 = vmatmul.mubr.bf16.gmra.mxu0 %v574
      %v741 = vpop.f32.mrf.mxu0
      %v742 = vadd.f32 0.0, %v741
      %v743 = vpop.f32.mrf.mxu0
      %v744 = vpop.f32.mrf.mxu0
      %v745 = vadd.f32 0.0, %v744
      %v746 = vpop.f32.mrf.mxu0
      %747 = vmatprep.mubr.bf16.mxu0 0
      %748 = vmatmul.mubr.bf16.gmra.mxu0 %v575
      %v749 = vpop.f32.mrf.mxu0
      %v750 = vadd.f32 0.0, %v749
      %v751 = vpop.f32.mrf.mxu0
      %v752 = vpop.f32.mrf.mxu0
      %v753 = vadd.f32 0.0, %v752
      %v754 = vpop.f32.mrf.mxu0
      %755 = vmatprep.mubr.bf16.mxu0 0
      %756 = vmatmul.mubr.bf16.gmra.mxu0 %v576
      %v757 = vpop.f32.mrf.mxu0
      %v758 = vadd.f32 0.0, %v757
      %v759 = vpop.f32.mrf.mxu0
      %v760 = vpop.f32.mrf.mxu0
      %v761 = vadd.f32 0.0, %v760
      %v762 = vpop.f32.mrf.mxu0
      %763 = vmatprep.mubr.bf16.mxu0 0
      %764 = vmatmul.mubr.bf16.gmra.mxu0 %v577
      %v765 = vpop.f32.mrf.mxu0
      %v766 = vadd.f32 0.0, %v765
      %v767 = vpop.f32.mrf.mxu0
      %v768 = vpop.f32.mrf.mxu0
      %v769 = vadd.f32 0.0, %v768
      %v770 = vpop.f32.mrf.mxu0
      %771 = vmatprep.mubr.bf16.mxu0 0
      %772 = vmatmul.mubr.bf16.gmra.mxu0 %v578
      %v773 = vpop.f32.mrf.mxu0
      %v774 = vadd.f32 0.0, %v773
      %v775 = vpop.f32.mrf.mxu0
      %v776 = vpop.f32.mrf.mxu0
      %v777 = vadd.f32 0.0, %v776
      %v778 = vpop.f32.mrf.mxu0
      %779 = vmatprep.mubr.bf16.mxu0 0
      %780 = vmatmul.mubr.bf16.gmra.mxu0 %v579
      %v781 = vpop.f32.mrf.mxu0
      %v782 = vadd.f32 0.0, %v781
      %v783 = vpop.f32.mrf.mxu0
      %v784 = vpop.f32.mrf.mxu0
      %v785 = vadd.f32 0.0, %v784
      %v786 = vpop.f32.mrf.mxu0
      %787 = vmatprep.mubr.bf16.mxu0 0
      %788 = vmatmul.mubr.bf16.gmra.mxu0 %v580
      %v789 = vpop.f32.mrf.mxu0
      %v790 = vadd.f32 0.0, %v789
      %v791 = vpop.f32.mrf.mxu0
      %v792 = vpop.f32.mrf.mxu0
      %v793 = vadd.f32 0.0, %v792
      %v794 = vpop.f32.mrf.mxu0
      %795 = vmatprep.mubr.bf16.mxu0 0
      %796 = vmatmul.mubr.bf16.gmra.mxu0 %v581
      %v797 = vpop.f32.mrf.mxu0
      %v798 = vadd.f32 0.0, %v797
      %v799 = vpop.f32.mrf.mxu0
      %v800 = vpop.f32.mrf.mxu0
      %v801 = vadd.f32 0.0, %v800
      %v802 = vpop.f32.mrf.mxu0
      %803 = vmatprep.mubr.bf16.mxu0 0
      %804 = vmatmul.mubr.bf16.gmra.mxu0 %v582
      %v805 = vpop.f32.mrf.mxu0
      %v806 = vadd.f32 0.0, %v805
      %v807 = vpop.f32.mrf.mxu0
      %v808 = vpop.f32.mrf.mxu0
      %v809 = vadd.f32 0.0, %v808
      %v810 = vpop.f32.mrf.mxu0
      %811 = vmatprep.mubr.bf16.mxu0 0
      %812 = vmatmul.mubr.bf16.gmra.mxu0 %v583
      %v813 = vpop.f32.mrf.mxu0
      %v814 = vadd.f32 0.0, %v813
      %v815 = vpop.f32.mrf.mxu0
      %v816 = vpop.f32.mrf.mxu0
      %v817 = vadd.f32 0.0, %v816
      %v818 = vpop.f32.mrf.mxu0
      %819 = vmatprep.mubr.bf16.mxu0 0
      %820 = vmatmul.mubr.bf16.gmra.mxu0 %v584
      %v821 = vpop.f32.mrf.mxu0
      %v822 = vadd.f32 0.0, %v821
      %v823 = vpop.f32.mrf.mxu0
      %v824 = vpop.f32.mrf.mxu0
      %v825 = vadd.f32 0.0, %v824
      %v826 = vpop.f32.mrf.mxu0
      %827 = vmatprep.mubr.bf16.mxu0 0
      %828 = vmatmul.mubr.bf16.gmra.mxu0 %v585
      %v829 = vpop.f32.mrf.mxu0
      %v830 = vadd.f32 0.0, %v829
      %v831 = vpop.f32.mrf.mxu0
      %v832 = vpop.f32.mrf.mxu0
      %v833 = vadd.f32 0.0, %v832
      %v834 = vpop.f32.mrf.mxu0
      %835 = vmatprep.mubr.bf16.mxu0 0
      %836 = vmatmul.mubr.bf16.gmra.mxu0 %v586
      %v837 = vpop.f32.mrf.mxu0
      %v838 = vadd.f32 0.0, %v837
      %v839 = vpop.f32.mrf.mxu0
      %v840 = vpop.f32.mrf.mxu0
      %v841 = vadd.f32 0.0, %v840
      %v842 = vpop.f32.mrf.mxu0
      %843 = vmatprep.mubr.bf16.mxu0 0
      %844 = vmatmul.mubr.bf16.gmra.mxu0 %v587
      %v845 = vpop.f32.mrf.mxu0
      %v846 = vadd.f32 0.0, %v845
      %v847 = vpop.f32.mrf.mxu0
      %v848 = vpop.f32.mrf.mxu0
      %v849 = vadd.f32 0.0, %v848
      %v850 = vpop.f32.mrf.mxu0
      %851 = vmatprep.mubr.bf16.mxu0 0
      %852 = vmatmul.mubr.bf16.gmra.mxu0 %v588
      %v853 = vpop.f32.mrf.mxu0
      %v854 = vadd.f32 0.0, %v853
      %v855 = vpop.f32.mrf.mxu0
      %v856 = vpop.f32.mrf.mxu0
      %v857 = vadd.f32 0.0, %v856
      %v858 = vpop.f32.mrf.mxu0
      %859 = vmatprep.mubr.bf16.mxu0 0
      %860 = vmatmul.mubr.bf16.gmra.mxu0 %v589
      %v861 = vpop.f32.mrf.mxu0
      %v862 = vadd.f32 0.0, %v861
      %v863 = vpop.f32.mrf.mxu0
      %v864 = vpop.f32.mrf.mxu0
      %v865 = vadd.f32 0.0, %v864
      %v866 = vpop.f32.mrf.mxu0
      %867 = vmatprep.mubr.bf16.mxu0 0
      %868 = vmatmul.mubr.bf16.gmra.mxu0 %v590
      %v869 = vpop.f32.mrf.mxu0
      %v870 = vadd.f32 0.0, %v869
      %v871 = vpop.f32.mrf.mxu0
      %v872 = vpop.f32.mrf.mxu0
      %v873 = vadd.f32 0.0, %v872
      %v874 = vpop.f32.mrf.mxu0
      %875 = vmatprep.mubr.bf16.mxu0 0
      %876 = vmatmul.mubr.bf16.gmra.mxu0 %v591
      %v877 = vpop.f32.mrf.mxu0
      %v878 = vadd.f32 0.0, %v877
      %v879 = vpop.f32.mrf.mxu0
      %v880 = vpop.f32.mrf.mxu0
      %v881 = vadd.f32 0.0, %v880
      %v882 = vpop.f32.mrf.mxu0
      %883 = vmatprep.mubr.bf16.mxu0 0
      %884 = vmatmul.mubr.bf16.gmra.mxu0 %v592
      %v885 = vpop.f32.mrf.mxu0
      %v886 = vadd.f32 0.0, %v885
      %v887 = vpop.f32.mrf.mxu0
      %v888 = vpop.f32.mrf.mxu0
      %v889 = vadd.f32 0.0, %v888
      %v890 = vpop.f32.mrf.mxu0
      %891 = vmatprep.mubr.bf16.mxu0 0
      %892 = vmatmul.mubr.bf16.gmra.mxu0 %v593
      %v893 = vpop.f32.mrf.mxu0
      %v894 = vadd.f32 0.0, %v893
      %v895 = vpop.f32.mrf.mxu0
      %v896 = vpop.f32.mrf.mxu0
      %v897 = vadd.f32 0.0, %v896
      %v898 = vpop.f32.mrf.mxu0
      %899 = vmatprep.mubr.bf16.mxu0 0
      %900 = vmatmul.mubr.bf16.gmra.mxu0 %v594
      %v901 = vpop.f32.mrf.mxu0
      %v902 = vadd.f32 0.0, %v901
      %v903 = vpop.f32.mrf.mxu0
      %v904 = vpop.f32.mrf.mxu0
      %v905 = vadd.f32 0.0, %v904
      %v906 = vpop.f32.mrf.mxu0
      %907 = vmatprep.mubr.bf16.mxu0 0
      %908 = vmatmul.mubr.bf16.gmra.mxu0 %v595
      %v909 = vpop.f32.mrf.mxu0
      %v910 = vadd.f32 0.0, %v909
      %v911 = vpop.f32.mrf.mxu0
      %v912 = vpop.f32.mrf.mxu0
      %v913 = vadd.f32 0.0, %v912
      %v914 = vpop.f32.mrf.mxu0
      %915 = vmatprep.mubr.bf16.mxu0 0
      %916 = vmatmul.mubr.bf16.gmra.mxu0 %v596
      %v917 = vpop.f32.mrf.mxu0
      %v918 = vadd.f32 0.0, %v917
      %v919 = vpop.f32.mrf.mxu0
      %v920 = vpop.f32.mrf.mxu0
      %v921 = vadd.f32 0.0, %v920
      %v922 = vpop.f32.mrf.mxu0
      %923 = vmatprep.mubr.bf16.mxu0 0
      %924 = vmatmul.mubr.bf16.gmra.mxu0 %v597
      %v925 = vpop.f32.mrf.mxu0
      %v926 = vadd.f32 0.0, %v925
      %v927 = vpop.f32.mrf.mxu0
      %v928 = vpop.f32.mrf.mxu0
      %v929 = vadd.f32 0.0, %v928
      %v930 = vpop.f32.mrf.mxu0
      %931 = vmatprep.mubr.bf16.mxu0 0
      %932 = vmatmul.mubr.bf16.gmra.mxu0 %v598
      %v933 = vpop.f32.mrf.mxu0
      %v934 = vadd.f32 0.0, %v933
      %v935 = vpop.f32.mrf.mxu0
      %v936 = vpop.f32.mrf.mxu0
      %v937 = vadd.f32 0.0, %v936
      %v938 = vpop.f32.mrf.mxu0
      %939 = vmatprep.mubr.bf16.mxu0 0
      %940 = vmatmul.mubr.bf16.gmra.mxu0 %v599
      %v941 = vpop.f32.mrf.mxu0
      %v942 = vadd.f32 0.0, %v941
      %v943 = vpop.f32.mrf.mxu0
      %v944 = vpop.f32.mrf.mxu0
      %v945 = vadd.f32 0.0, %v944
      %v946 = vpop.f32.mrf.mxu0
      %947 = vmatprep.mubr.bf16.mxu0 0
      %948 = vmatmul.mubr.bf16.gmra.mxu0 %v600
      %v949 = vpop.f32.mrf.mxu0
      %v950 = vadd.f32 0.0, %v949
      %v951 = vpop.f32.mrf.mxu0
      %v952 = vpop.f32.mrf.mxu0
      %v953 = vadd.f32 0.0, %v952
      %v954 = vpop.f32.mrf.mxu0
      %955 = vmatprep.mubr.bf16.mxu0 0
      %956 = vmatmul.mubr.bf16.gmra.mxu0 %v601
      %v957 = vpop.f32.mrf.mxu0
      %v958 = vadd.f32 0.0, %v957
      %v959 = vpop.f32.mrf.mxu0
      %v960 = vpop.f32.mrf.mxu0
      %v961 = vadd.f32 0.0, %v960
      %v962 = vpop.f32.mrf.mxu0
      %963 = vmatprep.mubr.bf16.mxu0 0
      %964 = vmatmul.mubr.bf16.gmra.mxu0 %v602
      %v965 = vpop.f32.mrf.mxu0
      %v966 = vadd.f32 0.0, %v965
      %v967 = vpop.f32.mrf.mxu0
      %v968 = vpop.f32.mrf.mxu0
      %v969 = vadd.f32 0.0, %v968
      %v970 = vpop.f32.mrf.mxu0
      %971 = vdwg.mxu0
      %v972 = vadd.f32 %v299, %v718
      %v973 = vadd.f32 %v300, %v721
      %v974 = vadd.f32 %v301, %v726
      %v975 = vadd.f32 %v302, %v729
      %v976 = vadd.f32 %v303, %v734
      %v977 = vadd.f32 %v304, %v737
      %v978 = vadd.f32 %v305, %v742
      %v979 = vadd.f32 %v306, %v745
      %v980 = vadd.f32 %v307, %v750
      %v981 = vadd.f32 %v308, %v753
      %v982 = vadd.f32 %v309, %v758
      %v983 = vadd.f32 %v310, %v761
      %v984 = vadd.f32 %v311, %v766
      %v985 = vadd.f32 %v312, %v769
      %v986 = vadd.f32 %v313, %v774
      %v987 = vadd.f32 %v314, %v777
      %v988 = vadd.f32 %v315, %v782
      %v989 = vadd.f32 %v316, %v785
      %v990 = vadd.f32 %v317, %v790
      %v991 = vadd.f32 %v318, %v793
      %v992 = vadd.f32 %v319, %v798
      %v993 = vadd.f32 %v320, %v801
      %v994 = vadd.f32 %v321, %v806
      %v995 = vadd.f32 %v322, %v809
      %v996 = vadd.f32 %v323, %v814
      %v997 = vadd.f32 %v324, %v817
      %v998 = vadd.f32 %v325, %v822
      %v999 = vadd.f32 %v326, %v825
      %v1000 = vadd.f32 %v327, %v830
      %v1001 = vadd.f32 %v328, %v833
      %v1002 = vadd.f32 %v329, %v838
      %v1003 = vadd.f32 %v330, %v841
      %v1004 = vadd.f32 %v331, %v846
      %v1005 = vadd.f32 %v332, %v849
      %v1006 = vadd.f32 %v333, %v854
      %v1007 = vadd.f32 %v334, %v857
      %v1008 = vadd.f32 %v335, %v862
      %v1009 = vadd.f32 %v336, %v865
      %v1010 = vadd.f32 %v337, %v870
      %v1011 = vadd.f32 %v338, %v873
      %v1012 = vadd.f32 %v339, %v878
      %v1013 = vadd.f32 %v340, %v881
      %v1014 = vadd.f32 %v341, %v886
      %v1015 = vadd.f32 %v342, %v889
      %v1016 = vadd.f32 %v343, %v894
      %v1017 = vadd.f32 %v344, %v897
      %v1018 = vadd.f32 %v345, %v902
      %v1019 = vadd.f32 %v346, %v905
      %v1020 = vadd.f32 %v347, %v910
      %v1021 = vadd.f32 %v348, %v913
      %v1022 = vadd.f32 %v349, %v918
      %v1023 = vadd.f32 %v350, %v921
      %v1024 = vadd.f32 %v351, %v926
      %v1025 = vadd.f32 %v352, %v929
      %v1026 = vadd.f32 %v353, %v934
      %v1027 = vadd.f32 %v354, %v937
      %v1028 = vadd.f32 %v355, %v942
      %v1029 = vadd.f32 %v356, %v945
      %v1030 = vadd.f32 %v357, %v950
      %v1031 = vadd.f32 %v358, %v953
      %v1032 = vadd.f32 %v359, %v958
      %v1033 = vadd.f32 %v360, %v961
      %v1034 = vadd.f32 %v361, %v966
      %v1035 = vadd.f32 %v362, %v969
      %1036 = vst [vmem:[#allocation2] sm:$0xff] %v972
      %1037 = vst [vmem:[#allocation2 + $0x8] sm:$0xff] %v973
      %1038 = vst [vmem:[#allocation2 + $0x10] sm:$0xff] %v974
      %1039 = vst [vmem:[#allocation2 + $0x18] sm:$0xff] %v975
      %1040 = vst [vmem:[#allocation2 + $0x20] sm:$0xff] %v976
      %1041 = vst [vmem:[#allocation2 + $0x28] sm:$0xff] %v977
      %1042 = vst [vmem:[#allocation2 + $0x30] sm:$0xff] %v978
      %1043 = vst [vmem:[#allocation2 + $0x38] sm:$0xff] %v979
      %1044 = vst [vmem:[#allocation2 + $0x40] sm:$0xff] %v980
      %1045 = vst [vmem:[#allocation2 + $0x48] sm:$0xff] %v981
      %1046 = vst [vmem:[#allocation2 + $0x50] sm:$0xff] %v982
      %1047 = vst [vmem:[#allocation2 + $0x58] sm:$0xff] %v983
      %1048 = vst [vmem:[#allocation2 + $0x60] sm:$0xff] %v984
      %1049 = vst [vmem:[#allocation2 + $0x68] sm:$0xff] %v985
      %1050 = vst [vmem:[#allocation2 + $0x70] sm:$0xff] %v986
      %1051 = vst [vmem:[#allocation2 + $0x78] sm:$0xff] %v987
      %1052 = vst [vmem:[#allocation2 + $0x80] sm:$0xff] %v988
      %1053 = vst [vmem:[#allocation2 + $0x88] sm:$0xff] %v989
      %1054 = vst [vmem:[#allocation2 + $0x90] sm:$0xff] %v990
      %1055 = vst [vmem:[#allocation2 + $0x98] sm:$0xff] %v991
      %1056 = vst [vmem:[#allocation2 + $0xa0] sm:$0xff] %v992
      %1057 = vst [vmem:[#allocation2 + $0xa8] sm:$0xff] %v993
      %1058 = vst [vmem:[#allocation2 + $0xb0] sm:$0xff] %v994
      %1059 = vst [vmem:[#allocation2 + $0xb8] sm:$0xff] %v995
      %1060 = vst [vmem:[#allocation2 + $0xc0] sm:$0xff] %v996
      %1061 = vst [vmem:[#allocation2 + $0xc8] sm:$0xff] %v997
      %1062 = vst [vmem:[#allocation2 + $0xd0] sm:$0xff] %v998
      %1063 = vst [vmem:[#allocation2 + $0xd8] sm:$0xff] %v999
      %1064 = vst [vmem:[#allocation2 + $0xe0] sm:$0xff] %v1000
      %1065 = vst [vmem:[#allocation2 + $0xe8] sm:$0xff] %v1001
      %1066 = vst [vmem:[#allocation2 + $0xf0] sm:$0xff] %v1002
      %1067 = vst [vmem:[#allocation2 + $0xf8] sm:$0xff] %v1003
      %1068 = vst [vmem:[#allocation2 + $0x100] sm:$0xff] %v1004
      %1069 = vst [vmem:[#allocation2 + $0x108] sm:$0xff] %v1005
      %1070 = vst [vmem:[#allocation2 + $0x110] sm:$0xff] %v1006
      %1071 = vst [vmem:[#allocation2 + $0x118] sm:$0xff] %v1007
      %1072 = vst [vmem:[#allocation2 + $0x120] sm:$0xff] %v1008
      %1073 = vst [vmem:[#allocation2 + $0x128] sm:$0xff] %v1009
      %1074 = vst [vmem:[#allocation2 + $0x130] sm:$0xff] %v1010
      %1075 = vst [vmem:[#allocation2 + $0x138] sm:$0xff] %v1011
      %1076 = vst [vmem:[#allocation2 + $0x140] sm:$0xff] %v1012
      %1077 = vst [vmem:[#allocation2 + $0x148] sm:$0xff] %v1013
      %1078 = vst [vmem:[#allocation2 + $0x150] sm:$0xff] %v1014
      %1079 = vst [vmem:[#allocation2 + $0x158] sm:$0xff] %v1015
      %1080 = vst [vmem:[#allocation2 + $0x160] sm:$0xff] %v1016
      %1081 = vst [vmem:[#allocation2 + $0x168] sm:$0xff] %v1017
      %1082 = vst [vmem:[#allocation2 + $0x170] sm:$0xff] %v1018
      %1083 = vst [vmem:[#allocation2 + $0x178] sm:$0xff] %v1019
      %1084 = vst [vmem:[#allocation2 + $0x180] sm:$0xff] %v1020
      %1085 = vst [vmem:[#allocation2 + $0x188] sm:$0xff] %v1021
      %1086 = vst [vmem:[#allocation2 + $0x190] sm:$0xff] %v1022
      %1087 = vst [vmem:[#allocation2 + $0x198] sm:$0xff] %v1023
      %1088 = vst [vmem:[#allocation2 + $0x1a0] sm:$0xff] %v1024
      %1089 = vst [vmem:[#allocation2 + $0x1a8] sm:$0xff] %v1025
      %1090 = vst [vmem:[#allocation2 + $0x1b0] sm:$0xff] %v1026
      %1091 = vst [vmem:[#allocation2 + $0x1b8] sm:$0xff] %v1027
      %1092 = vst [vmem:[#allocation2 + $0x1c0] sm:$0xff] %v1028
      %1093 = vst [vmem:[#allocation2 + $0x1c8] sm:$0xff] %v1029
      %1094 = vst [vmem:[#allocation2 + $0x1d0] sm:$0xff] %v1030
      %1095 = vst [vmem:[#allocation2 + $0x1d8] sm:$0xff] %v1031
      %1096 = vst [vmem:[#allocation2 + $0x1e0] sm:$0xff] %v1032
      %1097 = vst [vmem:[#allocation2 + $0x1e8] sm:$0xff] %v1033
      %1098 = vst [vmem:[#allocation2 + $0x1f0] sm:$0xff] %v1034
      %1099 = vst [vmem:[#allocation2 + $0x1f8] sm:$0xff] %v1035
      // Predicated region
      $region33: #{up_forward.6} parent=27 // pred_check
        %p1100 = pneg %p231
      $region34: #{up_forward.6} parent=27 // pred_check_branch
        %1102 = sbr.rel (%p1100) target = $region36
      $region35: #{up_forward.6} parent=27 // pred_region
        %v1103 = vld [vmem:[#allocation2] sm:$0xff]
        %v1104 = vld [vmem:[#allocation2 + $0x8] sm:$0xff]
        %v1105 = vld [vmem:[#allocation2 + $0x10] sm:$0xff]
        %v1106 = vld [vmem:[#allocation2 + $0x18] sm:$0xff]
        %v1107 = vld [vmem:[#allocation2 + $0x20] sm:$0xff]
        %v1108 = vld [vmem:[#allocation2 + $0x28] sm:$0xff]
        %v1109 = vld [vmem:[#allocation2 + $0x30] sm:$0xff]
        %v1110 = vld [vmem:[#allocation2 + $0x38] sm:$0xff]
        %v1111 = vld [vmem:[#allocation2 + $0x40] sm:$0xff]
        %v1112 = vld [vmem:[#allocation2 + $0x48] sm:$0xff]
        %v1113 = vld [vmem:[#allocation2 + $0x50] sm:$0xff]
        %v1114 = vld [vmem:[#allocation2 + $0x58] sm:$0xff]
        %v1115 = vld [vmem:[#allocation2 + $0x60] sm:$0xff]
        %v1116 = vld [vmem:[#allocation2 + $0x68] sm:$0xff]
        %v1117 = vld [vmem:[#allocation2 + $0x70] sm:$0xff]
        %v1118 = vld [vmem:[#allocation2 + $0x78] sm:$0xff]
        %v1119 = vld [vmem:[#allocation2 + $0x80] sm:$0xff]
        %v1120 = vld [vmem:[#allocation2 + $0x88] sm:$0xff]
        %v1121 = vld [vmem:[#allocation2 + $0x90] sm:$0xff]
        %v1122 = vld [vmem:[#allocation2 + $0x98] sm:$0xff]
        %v1123 = vld [vmem:[#allocation2 + $0xa0] sm:$0xff]
        %v1124 = vld [vmem:[#allocation2 + $0xa8] sm:$0xff]
        %v1125 = vld [vmem:[#allocation2 + $0xb0] sm:$0xff]
        %v1126 = vld [vmem:[#allocation2 + $0xb8] sm:$0xff]
        %v1127 = vld [vmem:[#allocation2 + $0xc0] sm:$0xff]
        %v1128 = vld [vmem:[#allocation2 + $0xc8] sm:$0xff]
        %v1129 = vld [vmem:[#allocation2 + $0xd0] sm:$0xff]
        %v1130 = vld [vmem:[#allocation2 + $0xd8] sm:$0xff]
        %v1131 = vld [vmem:[#allocation2 + $0xe0] sm:$0xff]
        %v1132 = vld [vmem:[#allocation2 + $0xe8] sm:$0xff]
        %v1133 = vld [vmem:[#allocation2 + $0xf0] sm:$0xff]
        %v1134 = vld [vmem:[#allocation2 + $0xf8] sm:$0xff]
        %v1135 = vld [vmem:[#allocation2 + $0x100] sm:$0xff]
        %v1136 = vld [vmem:[#allocation2 + $0x108] sm:$0xff]
        %v1137 = vld [vmem:[#allocation2 + $0x110] sm:$0xff]
        %v1138 = vld [vmem:[#allocation2 + $0x118] sm:$0xff]
        %v1139 = vld [vmem:[#allocation2 + $0x120] sm:$0xff]
        %v1140 = vld [vmem:[#allocation2 + $0x128] sm:$0xff]
        %v1141 = vld [vmem:[#allocation2 + $0x130] sm:$0xff]
        %v1142 = vld [vmem:[#allocation2 + $0x138] sm:$0xff]
        %v1143 = vld [vmem:[#allocation2 + $0x140] sm:$0xff]
        %v1144 = vld [vmem:[#allocation2 + $0x148] sm:$0xff]
        %v1145 = vld [vmem:[#allocation2 + $0x150] sm:$0xff]
        %v1146 = vld [vmem:[#allocation2 + $0x158] sm:$0xff]
        %v1147 = vld [vmem:[#allocation2 + $0x160] sm:$0xff]
        %v1148 = vld [vmem:[#allocation2 + $0x168] sm:$0xff]
        %v1149 = vld [vmem:[#allocation2 + $0x170] sm:$0xff]
        %v1150 = vld [vmem:[#allocation2 + $0x178] sm:$0xff]
        %v1151 = vld [vmem:[#allocation2 + $0x180] sm:$0xff]
        %v1152 = vld [vmem:[#allocation2 + $0x188] sm:$0xff]
        %v1153 = vld [vmem:[#allocation2 + $0x190] sm:$0xff]
        %v1154 = vld [vmem:[#allocation2 + $0x198] sm:$0xff]
        %v1155 = vld [vmem:[#allocation2 + $0x1a0] sm:$0xff]
        %v1156 = vld [vmem:[#allocation2 + $0x1a8] sm:$0xff]
        %v1157 = vld [vmem:[#allocation2 + $0x1b0] sm:$0xff]
        %v1158 = vld [vmem:[#allocation2 + $0x1b8] sm:$0xff]
        %v1159 = vld [vmem:[#allocation2 + $0x1c0] sm:$0xff]
        %v1160 = vld [vmem:[#allocation2 + $0x1c8] sm:$0xff]
        %v1161 = vld [vmem:[#allocation2 + $0x1d0] sm:$0xff]
        %v1162 = vld [vmem:[#allocation2 + $0x1d8] sm:$0xff]
        %v1163 = vld [vmem:[#allocation2 + $0x1e0] sm:$0xff]
        %v1164 = vld [vmem:[#allocation2 + $0x1e8] sm:$0xff]
        %v1165 = vld [vmem:[#allocation2 + $0x1f0] sm:$0xff]
        %v1166 = vld [vmem:[#allocation2 + $0x1f8] sm:$0xff]
        %1167 = vst [vmem:[%s224] sm:$0xff] %v1103
        %1168 = vst [vmem:[%s224 + $0x8] sm:$0xff] %v1104
        %1169 = vst [vmem:[%s224 + $0x10] sm:$0xff] %v1105
        %1170 = vst [vmem:[%s224 + $0x18] sm:$0xff] %v1106
        %1171 = vst [vmem:[%s224 + $0x20] sm:$0xff] %v1107
        %1172 = vst [vmem:[%s224 + $0x28] sm:$0xff] %v1108
        %1173 = vst [vmem:[%s224 + $0x30] sm:$0xff] %v1109
        %1174 = vst [vmem:[%s224 + $0x38] sm:$0xff] %v1110
        %1175 = vst [vmem:[%s224 + $0x40] sm:$0xff] %v1111
        %1176 = vst [vmem:[%s224 + $0x48] sm:$0xff] %v1112
        %1177 = vst [vmem:[%s224 + $0x50] sm:$0xff] %v1113
        %1178 = vst [vmem:[%s224 + $0x58] sm:$0xff] %v1114
        %1179 = vst [vmem:[%s224 + $0x60] sm:$0xff] %v1115
        %1180 = vst [vmem:[%s224 + $0x68] sm:$0xff] %v1116
        %1181 = vst [vmem:[%s224 + $0x70] sm:$0xff] %v1117
        %1182 = vst [vmem:[%s224 + $0x78] sm:$0xff] %v1118
        %1183 = vst [vmem:[%s224 + $0x80] sm:$0xff] %v1119
        %1184 = vst [vmem:[%s224 + $0x88] sm:$0xff] %v1120
        %1185 = vst [vmem:[%s224 + $0x90] sm:$0xff] %v1121
        %1186 = vst [vmem:[%s224 + $0x98] sm:$0xff] %v1122
        %1187 = vst [vmem:[%s224 + $0xa0] sm:$0xff] %v1123
        %1188 = vst [vmem:[%s224 + $0xa8] sm:$0xff] %v1124
        %1189 = vst [vmem:[%s224 + $0xb0] sm:$0xff] %v1125
        %1190 = vst [vmem:[%s224 + $0xb8] sm:$0xff] %v1126
        %1191 = vst [vmem:[%s224 + $0xc0] sm:$0xff] %v1127
        %1192 = vst [vmem:[%s224 + $0xc8] sm:$0xff] %v1128
        %1193 = vst [vmem:[%s224 + $0xd0] sm:$0xff] %v1129
        %1194 = vst [vmem:[%s224 + $0xd8] sm:$0xff] %v1130
        %1195 = vst [vmem:[%s224 + $0xe0] sm:$0xff] %v1131
        %1196 = vst [vmem:[%s224 + $0xe8] sm:$0xff] %v1132
        %1197 = vst [vmem:[%s224 + $0xf0] sm:$0xff] %v1133
        %1198 = vst [vmem:[%s224 + $0xf8] sm:$0xff] %v1134
        %1199 = vst [vmem:[%s224 + $0x100] sm:$0xff] %v1135
        %1200 = vst [vmem:[%s224 + $0x108] sm:$0xff] %v1136
        %1201 = vst [vmem:[%s224 + $0x110] sm:$0xff] %v1137
        %1202 = vst [vmem:[%s224 + $0x118] sm:$0xff] %v1138
        %1203 = vst [vmem:[%s224 + $0x120] sm:$0xff] %v1139
        %1204 = vst [vmem:[%s224 + $0x128] sm:$0xff] %v1140
        %1205 = vst [vmem:[%s224 + $0x130] sm:$0xff] %v1141
        %1206 = vst [vmem:[%s224 + $0x138] sm:$0xff] %v1142
        %1207 = vst [vmem:[%s224 + $0x140] sm:$0xff] %v1143
        %1208 = vst [vmem:[%s224 + $0x148] sm:$0xff] %v1144
        %1209 = vst [vmem:[%s224 + $0x150] sm:$0xff] %v1145
        %1210 = vst [vmem:[%s224 + $0x158] sm:$0xff] %v1146
        %1211 = vst [vmem:[%s224 + $0x160] sm:$0xff] %v1147
        %1212 = vst [vmem:[%s224 + $0x168] sm:$0xff] %v1148
        %1213 = vst [vmem:[%s224 + $0x170] sm:$0xff] %v1149
        %1214 = vst [vmem:[%s224 + $0x178] sm:$0xff] %v1150
        %1215 = vst [vmem:[%s224 + $0x180] sm:$0xff] %v1151
        %1216 = vst [vmem:[%s224 + $0x188] sm:$0xff] %v1152
        %1217 = vst [vmem:[%s224 + $0x190] sm:$0xff] %v1153
        %1218 = vst [vmem:[%s224 + $0x198] sm:$0xff] %v1154
        %1219 = vst [vmem:[%s224 + $0x1a0] sm:$0xff] %v1155
        %1220 = vst [vmem:[%s224 + $0x1a8] sm:$0xff] %v1156
        %1221 = vst [vmem:[%s224 + $0x1b0] sm:$0xff] %v1157
        %1222 = vst [vmem:[%s224 + $0x1b8] sm:$0xff] %v1158
        %1223 = vst [vmem:[%s224 + $0x1c0] sm:$0xff] %v1159
        %1224 = vst [vmem:[%s224 + $0x1c8] sm:$0xff] %v1160
        %1225 = vst [vmem:[%s224 + $0x1d0] sm:$0xff] %v1161
        %1226 = vst [vmem:[%s224 + $0x1d8] sm:$0xff] %v1162
        %1227 = vst [vmem:[%s224 + $0x1e0] sm:$0xff] %v1163
        %1228 = vst [vmem:[%s224 + $0x1e8] sm:$0xff] %v1164
        %1229 = vst [vmem:[%s224 + $0x1f0] sm:$0xff] %v1165
        %1230 = vst [vmem:[%s224 + $0x1f8] sm:$0xff] %v1166
        %v1231 = vadd.f32 %v1103, %v1104
        %v1232 = vadd.f32 %v1231, %v1105
        %v1233 = vadd.f32 %v1232, %v1106
        %v1234 = vadd.f32 %v1233, %v1107
        %v1235 = vadd.f32 %v1234, %v1108
        %v1236 = vadd.f32 %v1235, %v1109
        %v1237 = vadd.f32 %v1236, %v1110
        %v1238 = vadd.f32 %v1237, %v1111
        %v1239 = vadd.f32 %v1238, %v1112
        %v1240 = vadd.f32 %v1239, %v1113
        %v1241 = vadd.f32 %v1240, %v1114
        %v1242 = vadd.f32 %v1241, %v1115
        %v1243 = vadd.f32 %v1242, %v1116
        %v1244 = vadd.f32 %v1243, %v1117
        %v1245 = vadd.f32 %v1244, %v1118
        %v1246 = vadd.f32 %v1245, %v1119
        %v1247 = vadd.f32 %v1246, %v1120
        %v1248 = vadd.f32 %v1247, %v1121
        %v1249 = vadd.f32 %v1248, %v1122
        %v1250 = vadd.f32 %v1249, %v1123
        %v1251 = vadd.f32 %v1250, %v1124
        %v1252 = vadd.f32 %v1251, %v1125
        %v1253 = vadd.f32 %v1252, %v1126
        %v1254 = vadd.f32 %v1253, %v1127
        %v1255 = vadd.f32 %v1254, %v1128
        %v1256 = vadd.f32 %v1255, %v1129
        %v1257 = vadd.f32 %v1256, %v1130
        %v1258 = vadd.f32 %v1257, %v1131
        %v1259 = vadd.f32 %v1258, %v1132
        %v1260 = vadd.f32 %v1259, %v1133
        %v1261 = vadd.f32 %v1260, %v1134
        %v1262 = vadd.f32 %v1261, %v1135
        %v1263 = vadd.f32 %v1262, %v1136
        %v1264 = vadd.f32 %v1263, %v1137
        %v1265 = vadd.f32 %v1264, %v1138
        %v1266 = vadd.f32 %v1265, %v1139
        %v1267 = vadd.f32 %v1266, %v1140
        %v1268 = vadd.f32 %v1267, %v1141
        %v1269 = vadd.f32 %v1268, %v1142
        %v1270 = vadd.f32 %v1269, %v1143
        %v1271 = vadd.f32 %v1270, %v1144
        %v1272 = vadd.f32 %v1271, %v1145
        %v1273 = vadd.f32 %v1272, %v1146
        %v1274 = vadd.f32 %v1273, %v1147
        %v1275 = vadd.f32 %v1274, %v1148
        %v1276 = vadd.f32 %v1275, %v1149
        %v1277 = vadd.f32 %v1276, %v1150
        %v1278 = vadd.f32 %v1277, %v1151
        %v1279 = vadd.f32 %v1278, %v1152
        %v1280 = vadd.f32 %v1279, %v1153
        %v1281 = vadd.f32 %v1280, %v1154
        %v1282 = vadd.f32 %v1281, %v1155
        %v1283 = vadd.f32 %v1282, %v1156
        %v1284 = vadd.f32 %v1283, %v1157
        %v1285 = vadd.f32 %v1284, %v1158
        %v1286 = vadd.f32 %v1285, %v1159
        %v1287 = vadd.f32 %v1286, %v1160
        %v1288 = vadd.f32 %v1287, %v1161
        %v1289 = vadd.f32 %v1288, %v1162
        %v1290 = vadd.f32 %v1289, %v1163
        %v1291 = vadd.f32 %v1290, %v1164
        %v1292 = vadd.f32 %v1291, %v1165
        %v1293 = vadd.f32 %v1292, %v1166
        %v1294 = vrot.slane %v1293, 4
        %v1295 = vadd.f32 %v1293, %v1294
        %v1296 = vrot.slane %v1295, 2
        %v1297 = vadd.f32 %v1295, %v1296
        %v1298 = vrot.slane %v1297, 1
        %v1299 = vadd.f32 %v1297, %v1298
        %v1300 = vmul.f32 %v1103, %v1103
        %v1301 = vmul.f32 %v1104, %v1104
        %v1302 = vmul.f32 %v1105, %v1105
        %v1303 = vmul.f32 %v1106, %v1106
        %v1304 = vmul.f32 %v1107, %v1107
        %v1305 = vmul.f32 %v1108, %v1108
        %v1306 = vmul.f32 %v1109, %v1109
        %v1307 = vmul.f32 %v1110, %v1110
        %v1308 = vmul.f32 %v1111, %v1111
        %v1309 = vmul.f32 %v1112, %v1112
        %v1310 = vmul.f32 %v1113, %v1113
        %v1311 = vmul.f32 %v1114, %v1114
        %v1312 = vmul.f32 %v1115, %v1115
        %v1313 = vmul.f32 %v1116, %v1116
        %v1314 = vmul.f32 %v1117, %v1117
        %v1315 = vmul.f32 %v1118, %v1118
        %v1316 = vmul.f32 %v1119, %v1119
        %v1317 = vmul.f32 %v1120, %v1120
        %v1318 = vmul.f32 %v1121, %v1121
        %v1319 = vmul.f32 %v1122, %v1122
        %v1320 = vmul.f32 %v1123, %v1123
        %v1321 = vmul.f32 %v1124, %v1124
        %v1322 = vmul.f32 %v1125, %v1125
        %v1323 = vmul.f32 %v1126, %v1126
        %v1324 = vmul.f32 %v1127, %v1127
        %v1325 = vmul.f32 %v1128, %v1128
        %v1326 = vmul.f32 %v1129, %v1129
        %v1327 = vmul.f32 %v1130, %v1130
        %v1328 = vmul.f32 %v1131, %v1131
        %v1329 = vmul.f32 %v1132, %v1132
        %v1330 = vmul.f32 %v1133, %v1133
        %v1331 = vmul.f32 %v1134, %v1134
        %v1332 = vmul.f32 %v1135, %v1135
        %v1333 = vmul.f32 %v1136, %v1136
        %v1334 = vmul.f32 %v1137, %v1137
        %v1335 = vmul.f32 %v1138, %v1138
        %v1336 = vmul.f32 %v1139, %v1139
        %v1337 = vmul.f32 %v1140, %v1140
        %v1338 = vmul.f32 %v1141, %v1141
        %v1339 = vmul.f32 %v1142, %v1142
        %v1340 = vmul.f32 %v1143, %v1143
        %v1341 = vmul.f32 %v1144, %v1144
        %v1342 = vmul.f32 %v1145, %v1145
        %v1343 = vmul.f32 %v1146, %v1146
        %v1344 = vmul.f32 %v1147, %v1147
        %v1345 = vmul.f32 %v1148, %v1148
        %v1346 = vmul.f32 %v1149, %v1149
        %v1347 = vmul.f32 %v1150, %v1150
        %v1348 = vmul.f32 %v1151, %v1151
        %v1349 = vmul.f32 %v1152, %v1152
        %v1350 = vmul.f32 %v1153, %v1153
        %v1351 = vmul.f32 %v1154, %v1154
        %v1352 = vmul.f32 %v1155, %v1155
        %v1353 = vmul.f32 %v1156, %v1156
        %v1354 = vmul.f32 %v1157, %v1157
        %v1355 = vmul.f32 %v1158, %v1158
        %v1356 = vmul.f32 %v1159, %v1159
        %v1357 = vmul.f32 %v1160, %v1160
        %v1358 = vmul.f32 %v1161, %v1161
        %v1359 = vmul.f32 %v1162, %v1162
        %v1360 = vmul.f32 %v1163, %v1163
        %v1361 = vmul.f32 %v1164, %v1164
        %v1362 = vmul.f32 %v1165, %v1165
        %v1363 = vmul.f32 %v1166, %v1166
        %v1364 = vadd.f32 %v1300, %v1301
        %v1365 = vadd.f32 %v1364, %v1302
        %v1366 = vadd.f32 %v1365, %v1303
        %v1367 = vadd.f32 %v1366, %v1304
        %v1368 = vadd.f32 %v1367, %v1305
        %v1369 = vadd.f32 %v1368, %v1306
        %v1370 = vadd.f32 %v1369, %v1307
        %v1371 = vadd.f32 %v1370, %v1308
        %v1372 = vadd.f32 %v1371, %v1309
        %v1373 = vadd.f32 %v1372, %v1310
        %v1374 = vadd.f32 %v1373, %v1311
        %v1375 = vadd.f32 %v1374, %v1312
        %v1376 = vadd.f32 %v1375, %v1313
        %v1377 = vadd.f32 %v1376, %v1314
        %v1378 = vadd.f32 %v1377, %v1315
        %v1379 = vadd.f32 %v1378, %v1316
        %v1380 = vadd.f32 %v1379, %v1317
        %v1381 = vadd.f32 %v1380, %v1318
        %v1382 = vadd.f32 %v1381, %v1319
        %v1383 = vadd.f32 %v1382, %v1320
        %v1384 = vadd.f32 %v1383, %v1321
        %v1385 = vadd.f32 %v1384, %v1322
        %v1386 = vadd.f32 %v1385, %v1323
        %v1387 = vadd.f32 %v1386, %v1324
        %v1388 = vadd.f32 %v1387, %v1325
        %v1389 = vadd.f32 %v1388, %v1326
        %v1390 = vadd.f32 %v1389, %v1327
        %v1391 = vadd.f32 %v1390, %v1328
        %v1392 = vadd.f32 %v1391, %v1329
        %v1393 = vadd.f32 %v1392, %v1330
        %v1394 = vadd.f32 %v1393, %v1331
        %v1395 = vadd.f32 %v1394, %v1332
        %v1396 = vadd.f32 %v1395, %v1333
        %v1397 = vadd.f32 %v1396, %v1334
        %v1398 = vadd.f32 %v1397, %v1335
        %v1399 = vadd.f32 %v1398, %v1336
        %v1400 = vadd.f32 %v1399, %v1337
        %v1401 = vadd.f32 %v1400, %v1338
        %v1402 = vadd.f32 %v1401, %v1339
        %v1403 = vadd.f32 %v1402, %v1340
        %v1404 = vadd.f32 %v1403, %v1341
        %v1405 = vadd.f32 %v1404, %v1342
        %v1406 = vadd.f32 %v1405, %v1343
        %v1407 = vadd.f32 %v1406, %v1344
        %v1408 = vadd.f32 %v1407, %v1345
        %v1409 = vadd.f32 %v1408, %v1346
        %v1410 = vadd.f32 %v1409, %v1347
        %v1411 = vadd.f32 %v1410, %v1348
        %v1412 = vadd.f32 %v1411, %v1349
        %v1413 = vadd.f32 %v1412, %v1350
        %v1414 = vadd.f32 %v1413, %v1351
        %v1415 = vadd.f32 %v1414, %v1352
        %v1416 = vadd.f32 %v1415, %v1353
        %v1417 = vadd.f32 %v1416, %v1354
        %v1418 = vadd.f32 %v1417, %v1355
        %v1419 = vadd.f32 %v1418, %v1356
        %v1420 = vadd.f32 %v1419, %v1357
        %v1421 = vadd.f32 %v1420, %v1358
        %v1422 = vadd.f32 %v1421, %v1359
        %v1423 = vadd.f32 %v1422, %v1360
        %v1424 = vadd.f32 %v1423, %v1361
        %v1425 = vadd.f32 %v1424, %v1362
        %v1426 = vadd.f32 %v1425, %v1363
        %v1427 = vrot.slane %v1426, 4
        %v1428 = vadd.f32 %v1426, %v1427
        %v1429 = vrot.slane %v1428, 2
        %v1430 = vadd.f32 %v1428, %v1429
        %v1431 = vrot.slane %v1430, 1
        %v1432 = vadd.f32 %v1430, %v1431
        %v1433 = vlaneseq
        %v1434 = vshrl.u32 %v1433, 7
        %vm1435 = vcmp.eq.s32.totalorder %v1434, 0
        %vm1436 = vcmp.eq.s32.totalorder %v1434, 1
        %v1437 = vsel %vm1436, %v1432, 0.0
        %v1438 = vsel %vm1435, %v1299, %v1437
        %1439 = vst [vmem:[%s229] sm:$0xff] %v1438
      $region36: #{up_forward.6} parent=27 // pred_fallthru
        _
      %s1440 = smul.u32 64, %s19
      %p1441 = scmp.lt.s32.totalorder %s1440, 127
      %s1442 = scalar_select %p1441, %s1440, 127
      %s1443 = smul.addr %s1442, 8
      %s1444 = scalar_lea.vmem %s2, %s1443
      %p1445 = scmp.lt.s32.totalorder %s19, 1
      %s1446 = scalar_select %p1445, %s19, 1
      %s1447 = smul.addr %s1446, 8
      %s1448 = scalar_lea.vmem %s3, %s1447
      // Predicated region
      $region37: #{up_forward.6} parent=27 // pred_check
        %p1449 = pneg %p99
      $region38: #{up_forward.6} parent=27 // pred_check_branch
        %1451 = sbr.rel (%p1449) target = $region40
      $region39: #{up_forward.6} parent=27 // pred_region
        %s1452 = smul.u32 64, %s19
      $region40: #{up_forward.6} parent=27 // pred_fallthru
        _
      // Predicated region
      $region41: #{up_forward.6} parent=27 // pred_check
        %p1453 = pneg %p125
      $region42: #{up_forward.6} parent=27 // pred_check_branch
        %1455 = sbr.rel (%p1453) target = $region44
      $region43: #{up_forward.6} parent=27 // pred_region
        _
      $region44: #{up_forward.6} parent=27 // pred_fallthru
        _
    $region28: #{up_forward.6} parent=5 // pred_fallthru
      _
    %p1456 = scmp.le.s32.totalorder 2, %s10
    // Predicated region
    $region45: #{up_forward.6} parent=5 // pred_check
      %p1457 = pneg %p1456
    $region46: #{up_forward.6} parent=5 // pred_check_branch
      %1459 = sbr.rel (%p1457) target = $region48
    $region47: #{up_forward.6} parent=5 // pred_region
      %s1460 = ssub.s32 %s10, 2
      // Predicated region
      $region49: #{up_forward.6} parent=47 // pred_check
        %p1461 = pneg %p105
      $region50: #{up_forward.6} parent=47 // pred_check_branch
        %1463 = sbr.rel (%p1461) target = $region52
      $region51: #{up_forward.6} parent=47 // pred_region
        %s1464 = smul.u32 64, %s21
        %p1465 = scmp.lt.s32.totalorder %s1464, 127
        %s1466 = scalar_select %p1465, %s1464, 127
        %s1467 = smul.addr %s1466, 8
        %s1468 = scalar_lea.vmem %s2, %s1467
      $region52: #{up_forward.6} parent=47 // pred_fallthru
        _
      // Predicated region
      $region53: #{up_forward.6} parent=47 // pred_check
        %p1469 = pneg %p131
      $region54: #{up_forward.6} parent=47 // pred_check_branch
        %1471 = sbr.rel (%p1469) target = $region56
      $region55: #{up_forward.6} parent=47 // pred_region
        %p1472 = scmp.lt.s32.totalorder %s21, 1
        %s1473 = scalar_select %p1472, %s21, 1
        %s1474 = smul.addr %s1473, 8
        %s1475 = scalar_lea.vmem %s3, %s1474
      $region56: #{up_forward.6} parent=47 // pred_fallthru
        _
    $region48: #{up_forward.6} parent=5 // pred_fallthru
      _
  $region6: #{up_forward.6} parent=0 // loop_footer
    %s14 = sadd.s32 1, %s10
  $region7: #{up_forward.6} parent=0 // loop_footer_branch
    %9 = sbr.rel target = $region3
  $region8: #{up_forward.6} parent=0 // loop_exit
    _

</llo_original>
